<compile_context>
chip_gen: v7x
topology: tpu7x:2x2x1
jax: 0.10.0
libtpu: 0.0.40
codegen_flags: <defaults>
</compile_context>

<pallas_src>
import math

import numpy as np

import jax
import jax.numpy as jnp
from jax.experimental import pallas as pl
from jax.experimental.pallas import tpu as pltpu


def _round_up(x: int, m: int) -> int:
    return ((x + m - 1) // m) * m


def _harmonic_kernel(x_ref, sel_ref, coef_ref, mode_ref, out_ref):
    """One grid step.

    x_ref:    (tr, G*D)        f32   G samples per row, natural (sample-major) order
    sel_ref:  (G*D, G*out_dim) bf16  0/1 block-diagonal lane-spread matrix (resident)
    coef_ref: (1,  G*out_dim)  f32   per-output-column frequency (1.0 for passthrough)
    mode_ref: (1,  G*out_dim)  f32   0 -> sin, 1 -> cos, 2 -> passthrough
    out_ref:  (tr, G*out_dim)  f32   natural-order output, lane-dense
    """
    x = x_ref[...]
    # Exact f32 transport through the MXU: x0 + x1 + x2 == x bit-exactly and
    # each term is exactly representable in bf16, so with a 0/1 selection
    # matrix every dot is exact regardless of the matmul precision mode.
    x0 = x.astype(jnp.bfloat16)
    r1 = x - x0.astype(jnp.float32)
    x1 = r1.astype(jnp.bfloat16)
    x2 = (r1 - x1.astype(jnp.float32)).astype(jnp.bfloat16)

    sel = sel_ref[...]
    spread = jnp.dot(x0, sel, preferred_element_type=jnp.float32)
    spread = spread + jnp.dot(x1, sel, preferred_element_type=jnp.float32)
    spread = spread + jnp.dot(x2, sel, preferred_element_type=jnp.float32)

    pre = spread * coef_ref[...]          # exact f32 x * freq (broadcast over rows)
    mode = mode_ref[...]
    out_ref[...] = jnp.where(mode == 0.0, jnp.sin(pre),
                             jnp.where(mode == 1.0, jnp.cos(pre), pre))


def make_frequencies(n_harmonic_functions: int = 6,
                     omega_0: float = 1.0,
                     logspace: bool = True) -> jnp.ndarray:
    """Matches the module's effective buffer (the second register_buffer wins)."""
    if logspace:
        scalings = 2.0 ** jnp.arange(n_harmonic_functions, dtype=jnp.float32)
    else:
        scalings = jnp.linspace(1.0, 2.0 ** (n_harmonic_functions - 1),
                                n_harmonic_functions, dtype=jnp.float32)
    return (omega_0 * scalings).astype(jnp.float32)


def harmonic_embedding(x: jnp.ndarray,
                       frequencies,
                       include_input: bool = True,
                       row_tile: int = 384) -> jnp.ndarray:
    """x: (..., D) -> (..., 2*H*D [+ D]), float32.  Output order matches PyTorch:
    [sin(x_d * f_h)]_{d-major,h-minor} ++ [cos(...)] ++ [x]."""
    orig_shape = x.shape
    input_dim = orig_shape[-1]
    freqs = jnp.asarray(frequencies, jnp.float32).reshape(-1)
    n_harmonic = int(freqs.shape[0])
    DH = input_dim * n_harmonic
    out_dim = 2 * DH + (input_dim if include_input else 0)

    # Samples per packed group: smallest G with (G*out_dim) % 128 == 0, so the
    # kernel output block is lane-dense and (N, out_dim) <-> (R, G*out_dim)
    # is a free row-major reshape (no transposes anywhere).
    G = 128 // math.gcd(out_dim, 128)
    w_in, w_out = G * input_dim, G * out_dim

    x2 = x.reshape(-1, input_dim).astype(jnp.float32)
    n_rows = x2.shape[0]
    n_groups = pl.cdiv(n_rows, G)

    # Row (sublane) tiling: multiple of 8; guarantee >=2 grid steps for larger
    # inputs so the "parallel" axis can shard across v7x's two TensorCores.
    row_tile = max(8, _round_up(int(row_tile), 8))
    if n_groups <= 16:
        tr = _round_up(n_groups, 8)
    else:
        tr = min(row_tile, _round_up(pl.cdiv(n_groups, 2), 8))
    r_pad = _round_up(n_groups, tr)
    n_pad = r_pad * G
    if n_pad != n_rows:
        x2 = jnp.pad(x2, ((0, n_pad - n_rows), (0, 0)))
    x_packed = x2.reshape(r_pad, w_in)                       # free row-major reshape

    # ---- constant operands (passed as inputs: kernels may not capture arrays) ----
    # 0/1 selection block B[d, j]: which input dim feeds output column j.
    sel_blk = np.zeros((input_dim, out_dim), np.float32)
    for d in range(input_dim):
        sel_blk[d, d * n_harmonic:(d + 1) * n_harmonic] = 1.0                 # sin part
        sel_blk[d, DH + d * n_harmonic: DH + (d + 1) * n_harmonic] = 1.0      # cos part
        if include_input:
            sel_blk[d, 2 * DH + d] = 1.0                                      # passthrough
    sel = jnp.asarray(np.kron(np.eye(G, dtype=np.float32), sel_blk),
                      dtype=jnp.bfloat16)                    # (w_in, w_out), exact 0/1

    # Per-column frequency coefficient (traceable in `frequencies`).
    coef_parts = [jnp.tile(freqs, input_dim), jnp.tile(freqs, input_dim)]
    if include_input:
        coef_parts.append(jnp.ones((input_dim,), jnp.float32))
    coef = jnp.tile(jnp.concatenate(coef_parts), G).reshape(1, w_out)

    # Per-column mode: 0 -> sin, 1 -> cos, 2 -> passthrough.
    mode_blk = np.concatenate([
        np.zeros(DH, np.float32), np.ones(DH, np.float32),
        np.full(input_dim if include_input else 0, 2.0, np.float32)])
    mode = jnp.asarray(np.tile(mode_blk, G).reshape(1, w_out))

    out_packed = pl.pallas_call(
        _harmonic_kernel,
        out_shape=jax.ShapeDtypeStruct((r_pad, w_out), jnp.float32),
        grid=(r_pad // tr,),
        in_specs=[
            pl.BlockSpec((tr, w_in), lambda i: (i, 0)),
            pl.BlockSpec((w_in, w_out), lambda i: (0, 0)),   # resident, fetched once
            pl.BlockSpec((1, w_out), lambda i: (0, 0)),
            pl.BlockSpec((1, w_out), lambda i: (0, 0)),
        ],
        out_specs=pl.BlockSpec((tr, w_out), lambda i: (i, 0)),
        compiler_params=pltpu.CompilerParams(
            dimension_semantics=("parallel",),
            vmem_limit_bytes=32 * 1024 * 1024),
    )(x_packed, sel, coef, mode)

    out = out_packed.reshape(r_pad * G, out_dim)[:n_rows]    # free reshape (+slice if padded)
    return out.reshape(*orig_shape[:-1], out_dim)


def harmonic_embedding_ref(x, frequencies, include_input=True):
    """Pure-JAX reference mirroring the PyTorch forward."""
    embed = (x[..., None] * frequencies).reshape(*x.shape[:-1], -1)
    if include_input:
        return jnp.concatenate((jnp.sin(embed), jnp.cos(embed), x), axis=-1)
    return jnp.concatenate((jnp.sin(embed), jnp.cos(embed)), axis=-1)


if __name__ == "__main__":
    # Module defaults: input_dim=2, n_harmonic_functions=6, omega_0=1.0,
    # logspace=True, include_input=True  ->  output_dim = 6*2*2 + 2 = 26
    input_dim, n_harmonic = 2, 6
    freqs = make_frequencies(n_harmonic, omega_0=1.0, logspace=True)

    k0, k1, k2, k3 = jax.random.split(jax.random.PRNGKey(0), 4)

    # Base config.
    x = jax.random.normal(k0, (2, 64, input_dim), dtype=jnp.float32)
    out = jax.block_until_ready(harmonic_embedding(x, freqs, include_input=True))
    ref = harmonic_embedding_ref(x, freqs, include_input=True)
    assert out.shape == (2, 64, 26)
    assert jnp.allclose(out, ref, atol=2e-5, rtol=1e-5), "mismatch vs reference"

    # Sample count not divisible by the packing group (padded + sliced path).
    x_odd = jax.random.normal(k1, (3, 50, input_dim), dtype=jnp.float32)
    out_odd = jax.block_until_ready(harmonic_embedding(x_odd, freqs))
    assert jnp.allclose(out_odd, harmonic_embedding_ref(x_odd, freqs),
                        atol=2e-5, rtol=1e-5), "padded mismatch"

    # Larger input exercising grid > 1 (two parallel steps for megacore).
    x_big = jax.random.normal(k2, (4, 600, input_dim), dtype=jnp.float32)
    out_big = jax.block_until_ready(harmonic_embedding(x_big, freqs))
    assert jnp.allclose(out_big, harmonic_embedding_ref(x_big, freqs),
                        atol=2e-5, rtol=1e-5), "multi-step mismatch"

    # include_input=False branch.
    x_ni = jax.random.normal(k3, (5, 7, input_dim), dtype=jnp.float32)
    out_ni = jax.block_until_ready(
        harmonic_embedding(x_ni, freqs, include_input=False))
    assert out_ni.shape == (5, 7, 24)
    assert jnp.allclose(out_ni,
                        harmonic_embedding_ref(x_ni, freqs, include_input=False),
                        atol=2e-5, rtol=1e-5), "include_input=False mismatch"

    print("KERNEL_OK")
</pallas_src>

<mosaic_0001>
module attributes {stable_mosaic.version = 11 : i64} {
  func.func @_harmonic_kernel(%arg0: i32, %arg1: memref<8x128xf32, #tpu.memory_space<vmem>>, %arg2: memref<128x1664xbf16, #tpu.memory_space<vmem>>, %arg3: memref<1x1664xf32, #tpu.memory_space<vmem>>, %arg4: memref<1x1664xf32, #tpu.memory_space<vmem>>, %arg5: memref<8x1664xf32, #tpu.memory_space<vmem>>) attributes {dimension_semantics = [#tpu.dimension_semantics<parallel>], iteration_bounds = array<i64: 1>, scalar_prefetch = 0 : i64, scratch_operands = 0 : i64, tpu.core_type = #tpu.core_type<tc>, window_params = [{transform_indices = @transform_0, window_bounds = array<i64: 8, 128>}, {pipeline_mode = #tpu.pipeline_mode<synchronous>, transform_indices = @transform_1, window_bounds = array<i64: 128, 1664>}, {pipeline_mode = #tpu.pipeline_mode<synchronous>, transform_indices = @transform_2, window_bounds = array<i64: 1, 1664>}, {pipeline_mode = #tpu.pipeline_mode<synchronous>, transform_indices = @transform_3, window_bounds = array<i64: 1, 1664>}, {transform_indices = @transform_4, window_bounds = array<i64: 8, 1664>}]} {
    %c0 = arith.constant 0 : index
    %c0_0 = arith.constant 0 : index
    %0 = vector.load %arg1[%c0, %c0_0] : memref<8x128xf32, #tpu.memory_space<vmem>>, vector<8x128xf32>
    %1 = arith.truncf %0 : vector<8x128xf32> to vector<8x128xbf16>
    %2 = arith.extf %1 : vector<8x128xbf16> to vector<8x128xf32>
    %3 = arith.subf %0, %2 : vector<8x128xf32>
    %4 = arith.truncf %3 : vector<8x128xf32> to vector<8x128xbf16>
    %5 = arith.extf %4 : vector<8x128xbf16> to vector<8x128xf32>
    %6 = arith.subf %3, %5 : vector<8x128xf32>
    %7 = arith.truncf %6 : vector<8x128xf32> to vector<8x128xbf16>
    %c0_1 = arith.constant 0 : index
    %c0_2 = arith.constant 0 : index
    %8 = vector.load %arg2[%c0_1, %c0_2] : memref<128x1664xbf16, #tpu.memory_space<vmem>>, vector<128x1664xbf16>
    %cst = arith.constant dense<0.000000e+00> : vector<8x1664xf32>
    %9 = tpu.matmul %1, %8, %cst {dimension_numbers = #tpu.dot_dimension_numbers<[1], [0], [0], [1], [0, 0, 1, 1], [], []>} : vector<8x128xbf16>, vector<128x1664xbf16>, vector<8x1664xf32> -> vector<8x1664xf32>
    %cst_3 = arith.constant dense<0.000000e+00> : vector<8x1664xf32>
    %10 = tpu.matmul %4, %8, %cst_3 {dimension_numbers = #tpu.dot_dimension_numbers<[1], [0], [0], [1], [0, 0, 1, 1], [], []>} : vector<8x128xbf16>, vector<128x1664xbf16>, vector<8x1664xf32> -> vector<8x1664xf32>
    %11 = arith.addf %9, %10 : vector<8x1664xf32>
    %cst_4 = arith.constant dense<0.000000e+00> : vector<8x1664xf32>
    %12 = tpu.matmul %7, %8, %cst_4 {dimension_numbers = #tpu.dot_dimension_numbers<[1], [0], [0], [1], [0, 0, 1, 1], [], []>} : vector<8x128xbf16>, vector<128x1664xbf16>, vector<8x1664xf32> -> vector<8x1664xf32>
    %13 = arith.addf %11, %12 : vector<8x1664xf32>
    %c0_5 = arith.constant 0 : index
    %c0_6 = arith.constant 0 : index
    %14 = vector.load %arg3[%c0_5, %c0_6] : memref<1x1664xf32, #tpu.memory_space<vmem>>, vector<1x1664xf32>
    %15 = vector.broadcast %14 : vector<1x1664xf32> to vector<8x1664xf32>
    %16 = arith.mulf %13, %15 : vector<8x1664xf32>
    %c0_7 = arith.constant 0 : index
    %c0_8 = arith.constant 0 : index
    %17 = vector.load %arg4[%c0_7, %c0_8] : memref<1x1664xf32, #tpu.memory_space<vmem>>, vector<1x1664xf32>
    %cst_9 = arith.constant 0.000000e+00 : f32
    %18 = vector.broadcast %cst_9 : f32 to vector<1x1664xf32>
    %19 = arith.cmpf oeq, %17, %18 : vector<1x1664xf32>
    %20 = math.sin %16 : vector<8x1664xf32>
    %cst_10 = arith.constant 1.000000e+00 : f32
    %21 = vector.broadcast %cst_10 : f32 to vector<1x1664xf32>
    %22 = arith.cmpf oeq, %17, %21 : vector<1x1664xf32>
    %23 = math.cos %16 : vector<8x1664xf32>
    %24 = vector.shape_cast %22 : vector<1x1664xi1> to vector<1x1664xi1>
    %25 = vector.broadcast %24 : vector<1x1664xi1> to vector<8x1664xi1>
    %26 = arith.select %25, %23, %16 : vector<8x1664xi1>, vector<8x1664xf32>
    %27 = vector.shape_cast %19 : vector<1x1664xi1> to vector<1x1664xi1>
    %28 = vector.broadcast %27 : vector<1x1664xi1> to vector<8x1664xi1>
    %29 = arith.select %28, %20, %26 : vector<8x1664xi1>, vector<8x1664xf32>
    %c0_11 = arith.constant 0 : index
    %c0_12 = arith.constant 0 : index
    %30 = vector.load %arg5[%c0_11, %c0_12] : memref<8x1664xf32, #tpu.memory_space<vmem>>, vector<8x1664xf32>
    tpu.vector_store %arg5[%c0_11, %c0_12], %29 {strides = array<i32>} : memref<8x1664xf32, #tpu.memory_space<vmem>>, vector<8x1664xf32>,
    return
  }
  func.func @transform_0(%arg0: i32) -> (i32, i32) {
    %c0_i32 = arith.constant 0 : i32
    %c0_i32_0 = arith.constant 0 : i32
    return %arg0, %c0_i32 : i32, i32
  }
  func.func @transform_1(%arg0: i32) -> (i32, i32) {
    %c0_i32 = arith.constant 0 : i32
    %c0_i32_0 = arith.constant 0 : i32
    %c0_i32_1 = arith.constant 0 : i32
    return %c0_i32, %c0_i32_0 : i32, i32
  }
  func.func @transform_2(%arg0: i32) -> (i32, i32) {
    %c0_i32 = arith.constant 0 : i32
    %c0_i32_0 = arith.constant 0 : i32
    %c0_i32_1 = arith.constant 0 : i32
    return %c0_i32, %c0_i32_0 : i32, i32
  }
  func.func @transform_3(%arg0: i32) -> (i32, i32) {
    %c0_i32 = arith.constant 0 : i32
    %c0_i32_0 = arith.constant 0 : i32
    %c0_i32_1 = arith.constant 0 : i32
    return %c0_i32, %c0_i32_0 : i32, i32
  }
  func.func @transform_4(%arg0: i32) -> (i32, i32) {
    %c0_i32 = arith.constant 0 : i32
    %c0_i32_0 = arith.constant 0 : i32
    return %arg0, %c0_i32 : i32, i32
  }
}

</mosaic_0001>

<llo_original>
// kernel: tpu_custom_call.1
$region0: #{tpu_custom_call.1}
  #allocation0 [shape = 'u32[]', space=smem, size = 0x4, offset = 0x4, fixed_abs, tag = 'smem constant byte address 0x4 - core index']
  #allocation1 [shape = 'u32[144,128]{1,0:T(1,128)}', space=vmem, size = 0x12000, scoped, tag = 'internal scratch']
  %s0 = inlined_call_operand.hbm [shape: f32[8,128], index: 0, kind: input, shape index: {}]
  %s1 = inlined_call_operand.hbm [shape: bf16[128,1664], index: 1, kind: input, shape index: {}]
  %s2 = inlined_call_operand.hbm [shape: f32[1,1664], index: 2, kind: input, shape index: {}]
  %s3 = inlined_call_operand.hbm [shape: f32[1,1664], index: 3, kind: input, shape index: {}]
  %s4 = inlined_call_operand.hbm [shape: f32[8,1664], index: 4, kind: output, shape index: {}]
  %s5 = sld [smem:[#allocation0]]
  $region42: #{tpu_custom_call.1} parent=0
    _
  %s7 = ssub.s32 1, %s5
  %s8 = scalar_select 0, %s7, %s5
  $region1: #{tpu_custom_call.1} parent=0
    #allocation2 [shape = 'u8[4096]{0}', space=vmem, size = 0x1000, scoped, tag = 'input window, operand 0, single buffered']
    #allocation3 [shape = 's32[1]{0}', space=sflag, size = 0x4, scoped, tag = 'scoped memory for tpu_custom_call.1']
    #allocation4 [shape = 's32[1]{0}', space=sflag, size = 0x4, scoped, tag = 'scoped memory for tpu_custom_call.1']
    #allocation5 [shape = 'u8[425984]{0}', space=vmem, size = 0x68000, scoped, tag = 'input window, operand 1, single buffered']
    #allocation6 [shape = 's32[1]{0}', space=sflag, size = 0x4, scoped, tag = 'scoped memory for tpu_custom_call.1']
    #allocation7 [shape = 'u8[6656]{0}', space=vmem, size = 0x1c00, scoped, tag = 'input window, operand 2, single buffered']
    #allocation8 [shape = 'u8[6656]{0}', space=vmem, size = 0x1c00, scoped, tag = 'input window, operand 3, single buffered']
    #allocation9 [shape = 's32[1]{0}', space=sflag, size = 0x4, scoped, tag = 'scoped memory for tpu_custom_call.1']
    #allocation10 [shape = 'u8[53248]{0}', space=vmem, size = 0xd000, scoped, tag = 'output window, operand 0, single buffered']
    %9 = vsyncpa [#allocation3], 0
    %10 = vsyncpa [#allocation6], 0
    %11 = vsyncpa [#allocation9], 0
    %12 = vsyncpa [#allocation4], 0
    // Predicated region
    $region2: #{tpu_custom_call.1} parent=1 // pred_check
      _
    $region3: #{tpu_custom_call.1} parent=1 // pred_check_branch
      %14 = sbr.rel (0) target = $region5
    $region4: #{tpu_custom_call.1} parent=1 // pred_region
      %s16 = ssub.s32 128, 128
      %17 = vsyncadd [#allocation3], %s16
      %s19 = sshll.u32 [#allocation2], 4
      %s20 = int_to_ptr.vmem [resolvable:$true] %s19
      %22 = dma.hbm_to_vmem [thread:$0]  %s0, 128, %s20, [#allocation3]
    $region5: #{tpu_custom_call.1} parent=1 // pred_fallthru
      _
    // Predicated region
    $region6: #{tpu_custom_call.1} parent=1 // pred_check
      _
    $region7: #{tpu_custom_call.1} parent=1 // pred_check_branch
      %24 = sbr.rel (0) target = $region9
    $region8: #{tpu_custom_call.1} parent=1 // pred_region
      %s26 = ssub.s32 13312, 13312
      %27 = vsyncadd [#allocation6], %s26
      %s28 = sshll.u32 [#allocation5], 4
      %s29 = int_to_ptr.vmem [resolvable:$true] %s28
      %34 = dma.hbm_to_vmem [thread:$0]  %s1, 13312, %s29, [#allocation6], 832, 832, 52
    $region9: #{tpu_custom_call.1} parent=1 // pred_fallthru
      _
    // Predicated region
    $region10: #{tpu_custom_call.1} parent=1 // pred_check
      _
    $region11: #{tpu_custom_call.1} parent=1 // pred_check_branch
      %36 = sbr.rel (0) target = $region13
    $region12: #{tpu_custom_call.1} parent=1 // pred_region
      %s38 = ssub.s32 208, 208
      %39 = vsyncadd [#allocation6], %s38
      %s41 = sshll.u32 [#allocation7], 4
      %s42 = int_to_ptr.vmem [resolvable:$true] %s41
      %44 = dma.hbm_to_vmem [thread:$0]  %s2, 208, %s42, [#allocation6]
    $region13: #{tpu_custom_call.1} parent=1 // pred_fallthru
      _
    // Predicated region
    $region14: #{tpu_custom_call.1} parent=1 // pred_check
      _
    $region15: #{tpu_custom_call.1} parent=1 // pred_check_branch
      %46 = sbr.rel (0) target = $region17
    $region16: #{tpu_custom_call.1} parent=1 // pred_region
      %s48 = ssub.s32 208, 208
      %49 = vsyncadd [#allocation9], %s48
      %s51 = sshll.u32 [#allocation8], 4
      %s52 = int_to_ptr.vmem [resolvable:$true] %s51
      %54 = dma.hbm_to_vmem [thread:$0]  %s3, 208, %s52, [#allocation9]
    $region17: #{tpu_custom_call.1} parent=1 // pred_fallthru
      _
    // Predicated region
    $region18: #{tpu_custom_call.1} parent=1 // pred_check
      _
    $region19: #{tpu_custom_call.1} parent=1 // pred_check_branch
      %56 = sbr.rel (0) target = $region21
    $region20: #{tpu_custom_call.1} parent=1 // pred_region
      %57 = dma.done [#allocation3], 128
    $region21: #{tpu_custom_call.1} parent=1 // pred_fallthru
      _
    // Predicated region
    $region22: #{tpu_custom_call.1} parent=1 // pred_check
      _
    $region23: #{tpu_custom_call.1} parent=1 // pred_check_branch
      %59 = sbr.rel (0) target = $region25
    $region24: #{tpu_custom_call.1} parent=1 // pred_region
      %60 = dma.done [#allocation6], 13312
    $region25: #{tpu_custom_call.1} parent=1 // pred_fallthru
      _
    // Predicated region
    $region26: #{tpu_custom_call.1} parent=1 // pred_check
      _
    $region27: #{tpu_custom_call.1} parent=1 // pred_check_branch
      %62 = sbr.rel (0) target = $region29
    $region28: #{tpu_custom_call.1} parent=1 // pred_region
      %63 = dma.done [#allocation6], 208
    $region29: #{tpu_custom_call.1} parent=1 // pred_fallthru
      _
    // Predicated region
    $region30: #{tpu_custom_call.1} parent=1 // pred_check
      _
    $region31: #{tpu_custom_call.1} parent=1 // pred_check_branch
      %65 = sbr.rel (0) target = $region33
    $region32: #{tpu_custom_call.1} parent=1 // pred_region
      %66 = dma.done [#allocation9], 208
    $region33: #{tpu_custom_call.1} parent=1 // pred_fallthru
      _
    %v68 = vld [vmem:[#allocation2] sm:$0xff]
    %v69 = vpack.c.bf16 %v68, %v68
    %v70 = vunpack.c.l.bf16 %v69
    %v71 = vsub.f32 %v68, %v70
    %v72 = vpack.c.bf16 %v71, %v71
    %v73 = vunpack.c.l.bf16 %v72
    %v74 = vsub.f32 %v71, %v73
    %v75 = vpack.c.bf16 %v74, %v74
    %v76 = vld [vmem:[#allocation5] sm:$0xff]
    %v77 = vld [vmem:[#allocation5 + $0x8] sm:$0xff]
    %v78 = vld [vmem:[#allocation5 + $0x10] sm:$0xff]
    %v79 = vld [vmem:[#allocation5 + $0x18] sm:$0xff]
    %v80 = vld [vmem:[#allocation5 + $0x20] sm:$0xff]
    %v81 = vld [vmem:[#allocation5 + $0x28] sm:$0xff]
    %v82 = vld [vmem:[#allocation5 + $0x30] sm:$0xf]
    %v83 = vld [vmem:[#allocation5 + $0x34] sm:$0xff]
    %v84 = vld [vmem:[#allocation5 + $0x3c] sm:$0xff]
    %v85 = vld [vmem:[#allocation5 + $0x44] sm:$0xff]
    %v86 = vld [vmem:[#allocation5 + $0x4c] sm:$0xff]
    %v87 = vld [vmem:[#allocation5 + $0x54] sm:$0xff]
    %v88 = vld [vmem:[#allocation5 + $0x5c] sm:$0xff]
    %v89 = vld [vmem:[#allocation5 + $0x64] sm:$0xf]
    %v90 = vld [vmem:[#allocation5 + $0x68] sm:$0xff]
    %v91 = vld [vmem:[#allocation5 + $0x70] sm:$0xff]
    %v92 = vld [vmem:[#allocation5 + $0x78] sm:$0xff]
    %v93 = vld [vmem:[#allocation5 + $0x80] sm:$0xff]
    %v94 = vld [vmem:[#allocation5 + $0x88] sm:$0xff]
    %v95 = vld [vmem:[#allocation5 + $0x90] sm:$0xff]
    %v96 = vld [vmem:[#allocation5 + $0x98] sm:$0xf]
    %v97 = vld [vmem:[#allocation5 + $0x9c] sm:$0xff]
    %v98 = vld [vmem:[#allocation5 + $0xa4] sm:$0xff]
    %v99 = vld [vmem:[#allocation5 + $0xac] sm:$0xff]
    %v100 = vld [vmem:[#allocation5 + $0xb4] sm:$0xff]
    %v101 = vld [vmem:[#allocation5 + $0xbc] sm:$0xff]
    %v102 = vld [vmem:[#allocation5 + $0xc4] sm:$0xff]
    %v103 = vld [vmem:[#allocation5 + $0xcc] sm:$0xf]
    %v104 = vld [vmem:[#allocation5 + $0xd0] sm:$0xff]
    %v105 = vld [vmem:[#allocation5 + $0xd8] sm:$0xff]
    %v106 = vld [vmem:[#allocation5 + $0xe0] sm:$0xff]
    %v107 = vld [vmem:[#allocation5 + $0xe8] sm:$0xff]
    %v108 = vld [vmem:[#allocation5 + $0xf0] sm:$0xff]
    %v109 = vld [vmem:[#allocation5 + $0xf8] sm:$0xff]
    %v110 = vld [vmem:[#allocation5 + $0x100] sm:$0xf]
    %v111 = vld [vmem:[#allocation5 + $0x104] sm:$0xff]
    %v112 = vld [vmem:[#allocation5 + $0x10c] sm:$0xff]
    %v113 = vld [vmem:[#allocation5 + $0x114] sm:$0xff]
    %v114 = vld [vmem:[#allocation5 + $0x11c] sm:$0xff]
    %v115 = vld [vmem:[#allocation5 + $0x124] sm:$0xff]
    %v116 = vld [vmem:[#allocation5 + $0x12c] sm:$0xff]
    %v117 = vld [vmem:[#allocation5 + $0x134] sm:$0xf]
    %v118 = vld [vmem:[#allocation5 + $0x138] sm:$0xff]
    %v119 = vld [vmem:[#allocation5 + $0x140] sm:$0xff]
    %v120 = vld [vmem:[#allocation5 + $0x148] sm:$0xff]
    %v121 = vld [vmem:[#allocation5 + $0x150] sm:$0xff]
    %v122 = vld [vmem:[#allocation5 + $0x158] sm:$0xff]
    %v123 = vld [vmem:[#allocation5 + $0x160] sm:$0xff]
    %v124 = vld [vmem:[#allocation5 + $0x168] sm:$0xf]
    %v125 = vld [vmem:[#allocation5 + $0x16c] sm:$0xff]
    %v126 = vld [vmem:[#allocation5 + $0x174] sm:$0xff]
    %v127 = vld [vmem:[#allocation5 + $0x17c] sm:$0xff]
    %v128 = vld [vmem:[#allocation5 + $0x184] sm:$0xff]
    %v129 = vld [vmem:[#allocation5 + $0x18c] sm:$0xff]
    %v130 = vld [vmem:[#allocation5 + $0x194] sm:$0xff]
    %v131 = vld [vmem:[#allocation5 + $0x19c] sm:$0xf]
    %v132 = vld [vmem:[#allocation5 + $0x1a0] sm:$0xff]
    %v133 = vld [vmem:[#allocation5 + $0x1a8] sm:$0xff]
    %v134 = vld [vmem:[#allocation5 + $0x1b0] sm:$0xff]
    %v135 = vld [vmem:[#allocation5 + $0x1b8] sm:$0xff]
    %v136 = vld [vmem:[#allocation5 + $0x1c0] sm:$0xff]
    %v137 = vld [vmem:[#allocation5 + $0x1c8] sm:$0xff]
    %v138 = vld [vmem:[#allocation5 + $0x1d0] sm:$0xf]
    %v139 = vld [vmem:[#allocation5 + $0x1d4] sm:$0xff]
    %v140 = vld [vmem:[#allocation5 + $0x1dc] sm:$0xff]
    %v141 = vld [vmem:[#allocation5 + $0x1e4] sm:$0xff]
    %v142 = vld [vmem:[#allocation5 + $0x1ec] sm:$0xff]
    %v143 = vld [vmem:[#allocation5 + $0x1f4] sm:$0xff]
    %v144 = vld [vmem:[#allocation5 + $0x1fc] sm:$0xff]
    %v145 = vld [vmem:[#allocation5 + $0x204] sm:$0xf]
    %v146 = vld [vmem:[#allocation5 + $0x208] sm:$0xff]
    %v147 = vld [vmem:[#allocation5 + $0x210] sm:$0xff]
    %v148 = vld [vmem:[#allocation5 + $0x218] sm:$0xff]
    %v149 = vld [vmem:[#allocation5 + $0x220] sm:$0xff]
    %v150 = vld [vmem:[#allocation5 + $0x228] sm:$0xff]
    %v151 = vld [vmem:[#allocation5 + $0x230] sm:$0xff]
    %v152 = vld [vmem:[#allocation5 + $0x238] sm:$0xf]
    %v153 = vld [vmem:[#allocation5 + $0x23c] sm:$0xff]
    %v154 = vld [vmem:[#allocation5 + $0x244] sm:$0xff]
    %v155 = vld [vmem:[#allocation5 + $0x24c] sm:$0xff]
    %v156 = vld [vmem:[#allocation5 + $0x254] sm:$0xff]
    %v157 = vld [vmem:[#allocation5 + $0x25c] sm:$0xff]
    %v158 = vld [vmem:[#allocation5 + $0x264] sm:$0xff]
    %v159 = vld [vmem:[#allocation5 + $0x26c] sm:$0xf]
    %v160 = vld [vmem:[#allocation5 + $0x270] sm:$0xff]
    %v161 = vld [vmem:[#allocation5 + $0x278] sm:$0xff]
    %v162 = vld [vmem:[#allocation5 + $0x280] sm:$0xff]
    %v163 = vld [vmem:[#allocation5 + $0x288] sm:$0xff]
    %v164 = vld [vmem:[#allocation5 + $0x290] sm:$0xff]
    %v165 = vld [vmem:[#allocation5 + $0x298] sm:$0xff]
    %v166 = vld [vmem:[#allocation5 + $0x2a0] sm:$0xf]
    %v167 = vld [vmem:[#allocation5 + $0x2a4] sm:$0xff]
    %v168 = vld [vmem:[#allocation5 + $0x2ac] sm:$0xff]
    %v169 = vld [vmem:[#allocation5 + $0x2b4] sm:$0xff]
    %v170 = vld [vmem:[#allocation5 + $0x2bc] sm:$0xff]
    %v171 = vld [vmem:[#allocation5 + $0x2c4] sm:$0xff]
    %v172 = vld [vmem:[#allocation5 + $0x2cc] sm:$0xff]
    %v173 = vld [vmem:[#allocation5 + $0x2d4] sm:$0xf]
    %v174 = vld [vmem:[#allocation5 + $0x2d8] sm:$0xff]
    %v175 = vld [vmem:[#allocation5 + $0x2e0] sm:$0xff]
    %v176 = vld [vmem:[#allocation5 + $0x2e8] sm:$0xff]
    %v177 = vld [vmem:[#allocation5 + $0x2f0] sm:$0xff]
    %v178 = vld [vmem:[#allocation5 + $0x2f8] sm:$0xff]
    %v179 = vld [vmem:[#allocation5 + $0x300] sm:$0xff]
    %v180 = vld [vmem:[#allocation5 + $0x308] sm:$0xf]
    %v181 = vld [vmem:[#allocation5 + $0x30c] sm:$0xff]
    %v182 = vld [vmem:[#allocation5 + $0x314] sm:$0xff]
    %v183 = vld [vmem:[#allocation5 + $0x31c] sm:$0xff]
    %v184 = vld [vmem:[#allocation5 + $0x324] sm:$0xff]
    %v185 = vld [vmem:[#allocation5 + $0x32c] sm:$0xff]
    %v186 = vld [vmem:[#allocation5 + $0x334] sm:$0xff]
    %v187 = vld [vmem:[#allocation5 + $0x33c] sm:$0xf]
    %v300 = vunpack.c.l.b16 %v76
    %v301 = vunpack.c.h.b16 %v76
    %v302 = vunpack.c.l.b16 %v77
    %v303 = vunpack.c.h.b16 %v77
    %v304 = vunpack.c.l.b16 %v78
    %v305 = vunpack.c.h.b16 %v78
    %v306 = vunpack.c.l.b16 %v79
    %v307 = vunpack.c.h.b16 %v79
    %v308 = vunpack.c.l.b16 %v80
    %v309 = vunpack.c.h.b16 %v80
    %v310 = vunpack.c.l.b16 %v81
    %v311 = vunpack.c.h.b16 %v81
    %v312 = vunpack.c.l.b16 %v82
    %v313 = vunpack.c.l.b16 %v83
    %v314 = vunpack.c.h.b16 %v83
    %v315 = vunpack.c.l.b16 %v84
    %v316 = vunpack.c.h.b16 %v84
    %v317 = vunpack.c.l.b16 %v85
    %v318 = vunpack.c.h.b16 %v85
    %v319 = vunpack.c.l.b16 %v86
    %v320 = vunpack.c.h.b16 %v86
    %v321 = vunpack.c.l.b16 %v87
    %v322 = vunpack.c.h.b16 %v87
    %v323 = vunpack.c.l.b16 %v88
    %v324 = vunpack.c.h.b16 %v88
    %v325 = vunpack.c.l.b16 %v89
    %v326 = vunpack.c.l.b16 %v90
    %v327 = vunpack.c.h.b16 %v90
    %v328 = vunpack.c.l.b16 %v91
    %v329 = vunpack.c.h.b16 %v91
    %v330 = vunpack.c.l.b16 %v92
    %v331 = vunpack.c.h.b16 %v92
    %v332 = vunpack.c.l.b16 %v93
    %v333 = vunpack.c.h.b16 %v93
    %v334 = vunpack.c.l.b16 %v94
    %v335 = vunpack.c.h.b16 %v94
    %v336 = vunpack.c.l.b16 %v95
    %v337 = vunpack.c.h.b16 %v95
    %v338 = vunpack.c.l.b16 %v96
    %v339 = vunpack.c.l.b16 %v97
    %v340 = vunpack.c.h.b16 %v97
    %v341 = vunpack.c.l.b16 %v98
    %v342 = vunpack.c.h.b16 %v98
    %v343 = vunpack.c.l.b16 %v99
    %v344 = vunpack.c.h.b16 %v99
    %v345 = vunpack.c.l.b16 %v100
    %v346 = vunpack.c.h.b16 %v100
    %v347 = vunpack.c.l.b16 %v101
    %v348 = vunpack.c.h.b16 %v101
    %v349 = vunpack.c.l.b16 %v102
    %v350 = vunpack.c.h.b16 %v102
    %v351 = vunpack.c.l.b16 %v103
    %v352 = vunpack.c.l.b16 %v104
    %v353 = vunpack.c.h.b16 %v104
    %v354 = vunpack.c.l.b16 %v105
    %v355 = vunpack.c.h.b16 %v105
    %v356 = vunpack.c.l.b16 %v106
    %v357 = vunpack.c.h.b16 %v106
    %v358 = vunpack.c.l.b16 %v107
    %v359 = vunpack.c.h.b16 %v107
    %v360 = vunpack.c.l.b16 %v108
    %v361 = vunpack.c.h.b16 %v108
    %v362 = vunpack.c.l.b16 %v109
    %v363 = vunpack.c.h.b16 %v109
    %v364 = vunpack.c.l.b16 %v110
    %v365 = vunpack.c.l.b16 %v111
    %v366 = vunpack.c.h.b16 %v111
    %v367 = vunpack.c.l.b16 %v112
    %v368 = vunpack.c.h.b16 %v112
    %v369 = vunpack.c.l.b16 %v113
    %v370 = vunpack.c.h.b16 %v113
    %v371 = vunpack.c.l.b16 %v114
    %v372 = vunpack.c.h.b16 %v114
    %v373 = vunpack.c.l.b16 %v115
    %v374 = vunpack.c.h.b16 %v115
    %v375 = vunpack.c.l.b16 %v116
    %v376 = vunpack.c.h.b16 %v116
    %v377 = vunpack.c.l.b16 %v117
    %v378 = vunpack.c.l.b16 %v118
    %v379 = vunpack.c.h.b16 %v118
    %v380 = vunpack.c.l.b16 %v119
    %v381 = vunpack.c.h.b16 %v119
    %v382 = vunpack.c.l.b16 %v120
    %v383 = vunpack.c.h.b16 %v120
    %v384 = vunpack.c.l.b16 %v121
    %v385 = vunpack.c.h.b16 %v121
    %v386 = vunpack.c.l.b16 %v122
    %v387 = vunpack.c.h.b16 %v122
    %v388 = vunpack.c.l.b16 %v123
    %v389 = vunpack.c.h.b16 %v123
    %v390 = vunpack.c.l.b16 %v124
    %v391 = vunpack.c.l.b16 %v125
    %v392 = vunpack.c.h.b16 %v125
    %v393 = vunpack.c.l.b16 %v126
    %v394 = vunpack.c.h.b16 %v126
    %v395 = vunpack.c.l.b16 %v127
    %v396 = vunpack.c.h.b16 %v127
    %v397 = vunpack.c.l.b16 %v128
    %v398 = vunpack.c.h.b16 %v128
    %v399 = vunpack.c.l.b16 %v129
    %v400 = vunpack.c.h.b16 %v129
    %v401 = vunpack.c.l.b16 %v130
    %v402 = vunpack.c.h.b16 %v130
    %v403 = vunpack.c.l.b16 %v131
    %v404 = vunpack.c.l.b16 %v132
    %v405 = vunpack.c.h.b16 %v132
    %v406 = vunpack.c.l.b16 %v133
    %v407 = vunpack.c.h.b16 %v133
    %v408 = vunpack.c.l.b16 %v134
    %v409 = vunpack.c.h.b16 %v134
    %v410 = vunpack.c.l.b16 %v135
    %v411 = vunpack.c.h.b16 %v135
    %v412 = vunpack.c.l.b16 %v136
    %v413 = vunpack.c.h.b16 %v136
    %v414 = vunpack.c.l.b16 %v137
    %v415 = vunpack.c.h.b16 %v137
    %v416 = vunpack.c.l.b16 %v138
    %v417 = vunpack.c.l.b16 %v139
    %v418 = vunpack.c.h.b16 %v139
    %v419 = vunpack.c.l.b16 %v140
    %v420 = vunpack.c.h.b16 %v140
    %v421 = vunpack.c.l.b16 %v141
    %v422 = vunpack.c.h.b16 %v141
    %v423 = vunpack.c.l.b16 %v142
    %v424 = vunpack.c.h.b16 %v142
    %v425 = vunpack.c.l.b16 %v143
    %v426 = vunpack.c.h.b16 %v143
    %v427 = vunpack.c.l.b16 %v144
    %v428 = vunpack.c.h.b16 %v144
    %v429 = vunpack.c.l.b16 %v145
    %v430 = vunpack.c.l.b16 %v146
    %v431 = vunpack.c.h.b16 %v146
    %v432 = vunpack.c.l.b16 %v147
    %v433 = vunpack.c.h.b16 %v147
    %v434 = vunpack.c.l.b16 %v148
    %v435 = vunpack.c.h.b16 %v148
    %v436 = vunpack.c.l.b16 %v149
    %v437 = vunpack.c.h.b16 %v149
    %v438 = vunpack.c.l.b16 %v150
    %v439 = vunpack.c.h.b16 %v150
    %v440 = vunpack.c.l.b16 %v151
    %v441 = vunpack.c.h.b16 %v151
    %v442 = vunpack.c.l.b16 %v152
    %v443 = vunpack.c.l.b16 %v153
    %v444 = vunpack.c.h.b16 %v153
    %v445 = vunpack.c.l.b16 %v154
    %v446 = vunpack.c.h.b16 %v154
    %v447 = vunpack.c.l.b16 %v155
    %v448 = vunpack.c.h.b16 %v155
    %v449 = vunpack.c.l.b16 %v156
    %v450 = vunpack.c.h.b16 %v156
    %v451 = vunpack.c.l.b16 %v157
    %v452 = vunpack.c.h.b16 %v157
    %v453 = vunpack.c.l.b16 %v158
    %v454 = vunpack.c.h.b16 %v158
    %v455 = vunpack.c.l.b16 %v159
    %v456 = vunpack.c.l.b16 %v160
    %v457 = vunpack.c.h.b16 %v160
    %v458 = vunpack.c.l.b16 %v161
    %v459 = vunpack.c.h.b16 %v161
    %v460 = vunpack.c.l.b16 %v162
    %v461 = vunpack.c.h.b16 %v162
    %v462 = vunpack.c.l.b16 %v163
    %v463 = vunpack.c.h.b16 %v163
    %v464 = vunpack.c.l.b16 %v164
    %v465 = vunpack.c.h.b16 %v164
    %v466 = vunpack.c.l.b16 %v165
    %v467 = vunpack.c.h.b16 %v165
    %v468 = vunpack.c.l.b16 %v166
    %v469 = vunpack.c.l.b16 %v167
    %v470 = vunpack.c.h.b16 %v167
    %v471 = vunpack.c.l.b16 %v168
    %v472 = vunpack.c.h.b16 %v168
    %v473 = vunpack.c.l.b16 %v169
    %v474 = vunpack.c.h.b16 %v169
    %v475 = vunpack.c.l.b16 %v170
    %v476 = vunpack.c.h.b16 %v170
    %v477 = vunpack.c.l.b16 %v171
    %v478 = vunpack.c.h.b16 %v171
    %v479 = vunpack.c.l.b16 %v172
    %v480 = vunpack.c.h.b16 %v172
    %v481 = vunpack.c.l.b16 %v173
    %v482 = vunpack.c.l.b16 %v174
    %v483 = vunpack.c.h.b16 %v174
    %v484 = vunpack.c.l.b16 %v175
    %v485 = vunpack.c.h.b16 %v175
    %v486 = vunpack.c.l.b16 %v176
    %v487 = vunpack.c.h.b16 %v176
    %v488 = vunpack.c.l.b16 %v177
    %v489 = vunpack.c.h.b16 %v177
    %v490 = vunpack.c.l.b16 %v178
    %v491 = vunpack.c.h.b16 %v178
    %v492 = vunpack.c.l.b16 %v179
    %v493 = vunpack.c.h.b16 %v179
    %v494 = vunpack.c.l.b16 %v180
    %v495 = vunpack.c.l.b16 %v181
    %v496 = vunpack.c.h.b16 %v181
    %v497 = vunpack.c.l.b16 %v182
    %v498 = vunpack.c.h.b16 %v182
    %v499 = vunpack.c.l.b16 %v183
    %v500 = vunpack.c.h.b16 %v183
    %v501 = vunpack.c.l.b16 %v184
    %v502 = vunpack.c.h.b16 %v184
    %v503 = vunpack.c.l.b16 %v185
    %v504 = vunpack.c.h.b16 %v185
    %v505 = vunpack.c.l.b16 %v186
    %v506 = vunpack.c.h.b16 %v186
    %v507 = vunpack.c.l.b16 %v187
    %v508 = vpack.c.b16 %v313, %v300
    %v509 = vpack.c.b16 %v314, %v301
    %v510 = vpack.c.b16 %v315, %v302
    %v511 = vpack.c.b16 %v316, %v303
    %v512 = vpack.c.b16 %v317, %v304
    %v513 = vpack.c.b16 %v318, %v305
    %v514 = vpack.c.b16 %v319, %v306
    %v515 = vpack.c.b16 %v320, %v307
    %v516 = vpack.c.b16 %v321, %v308
    %v517 = vpack.c.b16 %v322, %v309
    %v518 = vpack.c.b16 %v323, %v310
    %v519 = vpack.c.b16 %v324, %v311
    %v520 = vpack.c.b16 %v325, %v312
    %v521 = vpack.c.b16 %v339, %v326
    %v522 = vpack.c.b16 %v340, %v327
    %v523 = vpack.c.b16 %v341, %v328
    %v524 = vpack.c.b16 %v342, %v329
    %v525 = vpack.c.b16 %v343, %v330
    %v526 = vpack.c.b16 %v344, %v331
    %v527 = vpack.c.b16 %v345, %v332
    %v528 = vpack.c.b16 %v346, %v333
    %v529 = vpack.c.b16 %v347, %v334
    %v530 = vpack.c.b16 %v348, %v335
    %v531 = vpack.c.b16 %v349, %v336
    %v532 = vpack.c.b16 %v350, %v337
    %v533 = vpack.c.b16 %v351, %v338
    %v534 = vpack.c.b16 %v365, %v352
    %v535 = vpack.c.b16 %v366, %v353
    %v536 = vpack.c.b16 %v367, %v354
    %v537 = vpack.c.b16 %v368, %v355
    %v538 = vpack.c.b16 %v369, %v356
    %v539 = vpack.c.b16 %v370, %v357
    %v540 = vpack.c.b16 %v371, %v358
    %v541 = vpack.c.b16 %v372, %v359
    %v542 = vpack.c.b16 %v373, %v360
    %v543 = vpack.c.b16 %v374, %v361
    %v544 = vpack.c.b16 %v375, %v362
    %v545 = vpack.c.b16 %v376, %v363
    %v546 = vpack.c.b16 %v377, %v364
    %v547 = vpack.c.b16 %v391, %v378
    %v548 = vpack.c.b16 %v392, %v379
    %v549 = vpack.c.b16 %v393, %v380
    %v550 = vpack.c.b16 %v394, %v381
    %v551 = vpack.c.b16 %v395, %v382
    %v552 = vpack.c.b16 %v396, %v383
    %v553 = vpack.c.b16 %v397, %v384
    %v554 = vpack.c.b16 %v398, %v385
    %v555 = vpack.c.b16 %v399, %v386
    %v556 = vpack.c.b16 %v400, %v387
    %v557 = vpack.c.b16 %v401, %v388
    %v558 = vpack.c.b16 %v402, %v389
    %v559 = vpack.c.b16 %v403, %v390
    %v560 = vpack.c.b16 %v417, %v404
    %v561 = vpack.c.b16 %v418, %v405
    %v562 = vpack.c.b16 %v419, %v406
    %v563 = vpack.c.b16 %v420, %v407
    %v564 = vpack.c.b16 %v421, %v408
    %v565 = vpack.c.b16 %v422, %v409
    %v566 = vpack.c.b16 %v423, %v410
    %v567 = vpack.c.b16 %v424, %v411
    %v568 = vpack.c.b16 %v425, %v412
    %v569 = vpack.c.b16 %v426, %v413
    %v570 = vpack.c.b16 %v427, %v414
    %v571 = vpack.c.b16 %v428, %v415
    %v572 = vpack.c.b16 %v429, %v416
    %v573 = vpack.c.b16 %v443, %v430
    %v574 = vpack.c.b16 %v444, %v431
    %v575 = vpack.c.b16 %v445, %v432
    %v576 = vpack.c.b16 %v446, %v433
    %v577 = vpack.c.b16 %v447, %v434
    %v578 = vpack.c.b16 %v448, %v435
    %v579 = vpack.c.b16 %v449, %v436
    %v580 = vpack.c.b16 %v450, %v437
    %v581 = vpack.c.b16 %v451, %v438
    %v582 = vpack.c.b16 %v452, %v439
    %v583 = vpack.c.b16 %v453, %v440
    %v584 = vpack.c.b16 %v454, %v441
    %v585 = vpack.c.b16 %v455, %v442
    %v586 = vpack.c.b16 %v469, %v456
    %v587 = vpack.c.b16 %v470, %v457
    %v588 = vpack.c.b16 %v471, %v458
    %v589 = vpack.c.b16 %v472, %v459
    %v590 = vpack.c.b16 %v473, %v460
    %v591 = vpack.c.b16 %v474, %v461
    %v592 = vpack.c.b16 %v475, %v462
    %v593 = vpack.c.b16 %v476, %v463
    %v594 = vpack.c.b16 %v477, %v464
    %v595 = vpack.c.b16 %v478, %v465
    %v596 = vpack.c.b16 %v479, %v466
    %v597 = vpack.c.b16 %v480, %v467
    %v598 = vpack.c.b16 %v481, %v468
    %v599 = vpack.c.b16 %v495, %v482
    %v600 = vpack.c.b16 %v496, %v483
    %v601 = vpack.c.b16 %v497, %v484
    %v602 = vpack.c.b16 %v498, %v485
    %v603 = vpack.c.b16 %v499, %v486
    %v604 = vpack.c.b16 %v500, %v487
    %v605 = vpack.c.b16 %v501, %v488
    %v606 = vpack.c.b16 %v502, %v489
    %v607 = vpack.c.b16 %v503, %v490
    %v608 = vpack.c.b16 %v504, %v491
    %v609 = vpack.c.b16 %v505, %v492
    %v610 = vpack.c.b16 %v506, %v493
    %v611 = vpack.c.b16 %v507, %v494
    %716 = vmatprep.subr.bf16.mxu0 %v509
    %717 = vmatpush1.bf16.msra.mxu0 %v508
    %718 = vmatprep.subr.bf16.mxu0 %v522
    %719 = vmatpush1.bf16.msra.mxu0 %v521
    %720 = vmatprep.subr.bf16.mxu0 %v535
    %721 = vmatpush1.bf16.msra.mxu0 %v534
    %722 = vmatprep.subr.bf16.mxu0 %v548
    %723 = vmatpush1.bf16.msra.mxu0 %v547
    %724 = vmatprep.subr.bf16.mxu0 %v561
    %725 = vmatpush1.bf16.msra.mxu0 %v560
    %726 = vmatprep.subr.bf16.mxu0 %v574
    %727 = vmatpush1.bf16.msra.mxu0 %v573
    %728 = vmatprep.subr.bf16.mxu0 %v587
    %729 = vmatpush1.bf16.msra.mxu0 %v586
    %730 = vmatprep.subr.bf16.mxu0 %v600
    %731 = vmatpush1.bf16.msra.mxu0 %v599
    %732 = vmatprep.subr.bf16.mxu0 0
    %733 = vmatpush1.bf16.msra.mxu0 0
    %734 = vmatprep.subr.bf16.mxu0 0
    %735 = vmatpush1.bf16.msra.mxu0 0
    %736 = vmatprep.subr.bf16.mxu0 0
    %737 = vmatpush1.bf16.msra.mxu0 0
    %738 = vmatprep.subr.bf16.mxu0 0
    %739 = vmatpush1.bf16.msra.mxu0 0
    %740 = vmatprep.subr.bf16.mxu0 0
    %741 = vmatpush1.bf16.msra.mxu0 0
    %742 = vmatprep.subr.bf16.mxu0 0
    %743 = vmatpush1.bf16.msra.mxu0 0
    %744 = vmatprep.subr.bf16.mxu0 0
    %745 = vmatpush1.bf16.msra.mxu0 0
    %746 = vmatprep.subr.bf16.mxu0 0
    %747 = vmatpush1.bf16.msra.mxu0 0
    %748 = vmatprep.mubr.bf16.mxu0 0
    %749 = vmatmul.mubr.bf16.gmra.mrb[0].mxu0 %v72
    %v750 = vpop.f32.mrb[0].mxu0
    %v751 = vadd.f32 0.0, %v750
    %v752 = vpop.f32.mrb[0].mxu0
    %v753 = vadd.f32 0.0, %v752
    %v754 = vpop.f32.mrb[0].mxu0
    %v755 = vpop.f32.mrb[0].mxu0
    %756 = vdwg.mxu0
    %757 = vmatprep.subr.bf16.mxu0 %v511
    %758 = vmatpush1.bf16.msra.mxu0 %v510
    %759 = vmatprep.subr.bf16.mxu0 %v524
    %760 = vmatpush1.bf16.msra.mxu0 %v523
    %761 = vmatprep.subr.bf16.mxu0 %v537
    %762 = vmatpush1.bf16.msra.mxu0 %v536
    %763 = vmatprep.subr.bf16.mxu0 %v550
    %764 = vmatpush1.bf16.msra.mxu0 %v549
    %765 = vmatprep.subr.bf16.mxu0 %v563
    %766 = vmatpush1.bf16.msra.mxu0 %v562
    %767 = vmatprep.subr.bf16.mxu0 %v576
    %768 = vmatpush1.bf16.msra.mxu0 %v575
    %769 = vmatprep.subr.bf16.mxu0 %v589
    %770 = vmatpush1.bf16.msra.mxu0 %v588
    %771 = vmatprep.subr.bf16.mxu0 %v602
    %772 = vmatpush1.bf16.msra.mxu0 %v601
    %773 = vmatprep.subr.bf16.mxu0 0
    %774 = vmatpush1.bf16.msra.mxu0 0
    %775 = vmatprep.subr.bf16.mxu0 0
    %776 = vmatpush1.bf16.msra.mxu0 0
    %777 = vmatprep.subr.bf16.mxu0 0
    %778 = vmatpush1.bf16.msra.mxu0 0
    %779 = vmatprep.subr.bf16.mxu0 0
    %780 = vmatpush1.bf16.msra.mxu0 0
    %781 = vmatprep.subr.bf16.mxu0 0
    %782 = vmatpush1.bf16.msra.mxu0 0
    %783 = vmatprep.subr.bf16.mxu0 0
    %784 = vmatpush1.bf16.msra.mxu0 0
    %785 = vmatprep.subr.bf16.mxu0 0
    %786 = vmatpush1.bf16.msra.mxu0 0
    %787 = vmatprep.subr.bf16.mxu0 0
    %788 = vmatpush1.bf16.msra.mxu0 0
    %789 = vmatprep.mubr.bf16.mxu0 0
    %790 = vmatmul.mubr.bf16.gmra.mrb[0].mxu0 %v72
    %v791 = vpop.f32.mrb[0].mxu0
    %v792 = vadd.f32 0.0, %v791
    %v793 = vpop.f32.mrb[0].mxu0
    %v794 = vadd.f32 0.0, %v793
    %v795 = vpop.f32.mrb[0].mxu0
    %v796 = vpop.f32.mrb[0].mxu0
    %797 = vdwg.mxu0
    %798 = vmatprep.subr.bf16.mxu0 %v513
    %799 = vmatpush1.bf16.msra.mxu0 %v512
    %800 = vmatprep.subr.bf16.mxu0 %v526
    %801 = vmatpush1.bf16.msra.mxu0 %v525
    %802 = vmatprep.subr.bf16.mxu0 %v539
    %803 = vmatpush1.bf16.msra.mxu0 %v538
    %804 = vmatprep.subr.bf16.mxu0 %v552
    %805 = vmatpush1.bf16.msra.mxu0 %v551
    %806 = vmatprep.subr.bf16.mxu0 %v565
    %807 = vmatpush1.bf16.msra.mxu0 %v564
    %808 = vmatprep.subr.bf16.mxu0 %v578
    %809 = vmatpush1.bf16.msra.mxu0 %v577
    %810 = vmatprep.subr.bf16.mxu0 %v591
    %811 = vmatpush1.bf16.msra.mxu0 %v590
    %812 = vmatprep.subr.bf16.mxu0 %v604
    %813 = vmatpush1.bf16.msra.mxu0 %v603
    %814 = vmatprep.subr.bf16.mxu0 0
    %815 = vmatpush1.bf16.msra.mxu0 0
    %816 = vmatprep.subr.bf16.mxu0 0
    %817 = vmatpush1.bf16.msra.mxu0 0
    %818 = vmatprep.subr.bf16.mxu0 0
    %819 = vmatpush1.bf16.msra.mxu0 0
    %820 = vmatprep.subr.bf16.mxu0 0
    %821 = vmatpush1.bf16.msra.mxu0 0
    %822 = vmatprep.subr.bf16.mxu0 0
    %823 = vmatpush1.bf16.msra.mxu0 0
    %824 = vmatprep.subr.bf16.mxu0 0
    %825 = vmatpush1.bf16.msra.mxu0 0
    %826 = vmatprep.subr.bf16.mxu0 0
    %827 = vmatpush1.bf16.msra.mxu0 0
    %828 = vmatprep.subr.bf16.mxu0 0
    %829 = vmatpush1.bf16.msra.mxu0 0
    %830 = vmatprep.mubr.bf16.mxu0 0
    %831 = vmatmul.mubr.bf16.gmra.mrb[0].mxu0 %v72
    %v832 = vpop.f32.mrb[0].mxu0
    %v833 = vadd.f32 0.0, %v832
    %v834 = vpop.f32.mrb[0].mxu0
    %v835 = vadd.f32 0.0, %v834
    %v836 = vpop.f32.mrb[0].mxu0
    %v837 = vpop.f32.mrb[0].mxu0
    %838 = vdwg.mxu0
    %839 = vmatprep.subr.bf16.mxu0 %v515
    %840 = vmatpush1.bf16.msra.mxu0 %v514
    %841 = vmatprep.subr.bf16.mxu0 %v528
    %842 = vmatpush1.bf16.msra.mxu0 %v527
    %843 = vmatprep.subr.bf16.mxu0 %v541
    %844 = vmatpush1.bf16.msra.mxu0 %v540
    %845 = vmatprep.subr.bf16.mxu0 %v554
    %846 = vmatpush1.bf16.msra.mxu0 %v553
    %847 = vmatprep.subr.bf16.mxu0 %v567
    %848 = vmatpush1.bf16.msra.mxu0 %v566
    %849 = vmatprep.subr.bf16.mxu0 %v580
    %850 = vmatpush1.bf16.msra.mxu0 %v579
    %851 = vmatprep.subr.bf16.mxu0 %v593
    %852 = vmatpush1.bf16.msra.mxu0 %v592
    %853 = vmatprep.subr.bf16.mxu0 %v606
    %854 = vmatpush1.bf16.msra.mxu0 %v605
    %855 = vmatprep.subr.bf16.mxu0 0
    %856 = vmatpush1.bf16.msra.mxu0 0
    %857 = vmatprep.subr.bf16.mxu0 0
    %858 = vmatpush1.bf16.msra.mxu0 0
    %859 = vmatprep.subr.bf16.mxu0 0
    %860 = vmatpush1.bf16.msra.mxu0 0
    %861 = vmatprep.subr.bf16.mxu0 0
    %862 = vmatpush1.bf16.msra.mxu0 0
    %863 = vmatprep.subr.bf16.mxu0 0
    %864 = vmatpush1.bf16.msra.mxu0 0
    %865 = vmatprep.subr.bf16.mxu0 0
    %866 = vmatpush1.bf16.msra.mxu0 0
    %867 = vmatprep.subr.bf16.mxu0 0
    %868 = vmatpush1.bf16.msra.mxu0 0
    %869 = vmatprep.subr.bf16.mxu0 0
    %870 = vmatpush1.bf16.msra.mxu0 0
    %871 = vmatprep.mubr.bf16.mxu0 0
    %872 = vmatmul.mubr.bf16.gmra.mrb[0].mxu0 %v72
    %v873 = vpop.f32.mrb[0].mxu0
    %v874 = vadd.f32 0.0, %v873
    %v875 = vpop.f32.mrb[0].mxu0
    %v876 = vadd.f32 0.0, %v875
    %v877 = vpop.f32.mrb[0].mxu0
    %v878 = vpop.f32.mrb[0].mxu0
    %879 = vdwg.mxu0
    %880 = vmatprep.subr.bf16.mxu0 %v517
    %881 = vmatpush1.bf16.msra.mxu0 %v516
    %882 = vmatprep.subr.bf16.mxu0 %v530
    %883 = vmatpush1.bf16.msra.mxu0 %v529
    %884 = vmatprep.subr.bf16.mxu0 %v543
    %885 = vmatpush1.bf16.msra.mxu0 %v542
    %886 = vmatprep.subr.bf16.mxu0 %v556
    %887 = vmatpush1.bf16.msra.mxu0 %v555
    %888 = vmatprep.subr.bf16.mxu0 %v569
    %889 = vmatpush1.bf16.msra.mxu0 %v568
    %890 = vmatprep.subr.bf16.mxu0 %v582
    %891 = vmatpush1.bf16.msra.mxu0 %v581
    %892 = vmatprep.subr.bf16.mxu0 %v595
    %893 = vmatpush1.bf16.msra.mxu0 %v594
    %894 = vmatprep.subr.bf16.mxu0 %v608
    %895 = vmatpush1.bf16.msra.mxu0 %v607
    %896 = vmatprep.subr.bf16.mxu0 0
    %897 = vmatpush1.bf16.msra.mxu0 0
    %898 = vmatprep.subr.bf16.mxu0 0
    %899 = vmatpush1.bf16.msra.mxu0 0
    %900 = vmatprep.subr.bf16.mxu0 0
    %901 = vmatpush1.bf16.msra.mxu0 0
    %902 = vmatprep.subr.bf16.mxu0 0
    %903 = vmatpush1.bf16.msra.mxu0 0
    %904 = vmatprep.subr.bf16.mxu0 0
    %905 = vmatpush1.bf16.msra.mxu0 0
    %906 = vmatprep.subr.bf16.mxu0 0
    %907 = vmatpush1.bf16.msra.mxu0 0
    %908 = vmatprep.subr.bf16.mxu0 0
    %909 = vmatpush1.bf16.msra.mxu0 0
    %910 = vmatprep.subr.bf16.mxu0 0
    %911 = vmatpush1.bf16.msra.mxu0 0
    %912 = vmatprep.mubr.bf16.mxu0 0
    %913 = vmatmul.mubr.bf16.gmra.mrb[0].mxu0 %v72
    %v914 = vpop.f32.mrb[0].mxu0
    %v915 = vadd.f32 0.0, %v914
    %v916 = vpop.f32.mrb[0].mxu0
    %v917 = vadd.f32 0.0, %v916
    %v918 = vpop.f32.mrb[0].mxu0
    %v919 = vpop.f32.mrb[0].mxu0
    %920 = vdwg.mxu0
    %921 = vmatprep.subr.bf16.mxu0 %v519
    %922 = vmatpush1.bf16.msra.mxu0 %v518
    %923 = vmatprep.subr.bf16.mxu0 %v532
    %924 = vmatpush1.bf16.msra.mxu0 %v531
    %925 = vmatprep.subr.bf16.mxu0 %v545
    %926 = vmatpush1.bf16.msra.mxu0 %v544
    %927 = vmatprep.subr.bf16.mxu0 %v558
    %928 = vmatpush1.bf16.msra.mxu0 %v557
    %929 = vmatprep.subr.bf16.mxu0 %v571
    %930 = vmatpush1.bf16.msra.mxu0 %v570
    %931 = vmatprep.subr.bf16.mxu0 %v584
    %932 = vmatpush1.bf16.msra.mxu0 %v583
    %933 = vmatprep.subr.bf16.mxu0 %v597
    %934 = vmatpush1.bf16.msra.mxu0 %v596
    %935 = vmatprep.subr.bf16.mxu0 %v610
    %936 = vmatpush1.bf16.msra.mxu0 %v609
    %937 = vmatprep.subr.bf16.mxu0 0
    %938 = vmatpush1.bf16.msra.mxu0 0
    %939 = vmatprep.subr.bf16.mxu0 0
    %940 = vmatpush1.bf16.msra.mxu0 0
    %941 = vmatprep.subr.bf16.mxu0 0
    %942 = vmatpush1.bf16.msra.mxu0 0
    %943 = vmatprep.subr.bf16.mxu0 0
    %944 = vmatpush1.bf16.msra.mxu0 0
    %945 = vmatprep.subr.bf16.mxu0 0
    %946 = vmatpush1.bf16.msra.mxu0 0
    %947 = vmatprep.subr.bf16.mxu0 0
    %948 = vmatpush1.bf16.msra.mxu0 0
    %949 = vmatprep.subr.bf16.mxu0 0
    %950 = vmatpush1.bf16.msra.mxu0 0
    %951 = vmatprep.subr.bf16.mxu0 0
    %952 = vmatpush1.bf16.msra.mxu0 0
    %953 = vmatprep.mubr.bf16.mxu0 0
    %954 = vmatmul.mubr.bf16.gmra.mrb[0].mxu0 %v72
    %v955 = vpop.f32.mrb[0].mxu0
    %v956 = vadd.f32 0.0, %v955
    %v957 = vpop.f32.mrb[0].mxu0
    %v958 = vadd.f32 0.0, %v957
    %v959 = vpop.f32.mrb[0].mxu0
    %v960 = vpop.f32.mrb[0].mxu0
    %961 = vdwg.mxu0
    %962 = vmatprep.subr.bf16.mxu0 0
    %963 = vmatpush1.bf16.msra.mxu0 %v520
    %964 = vmatprep.subr.bf16.mxu0 0
    %965 = vmatpush1.bf16.msra.mxu0 %v533
    %966 = vmatprep.subr.bf16.mxu0 0
    %967 = vmatpush1.bf16.msra.mxu0 %v546
    %968 = vmatprep.subr.bf16.mxu0 0
    %969 = vmatpush1.bf16.msra.mxu0 %v559
    %970 = vmatprep.subr.bf16.mxu0 0
    %971 = vmatpush1.bf16.msra.mxu0 %v572
    %972 = vmatprep.subr.bf16.mxu0 0
    %973 = vmatpush1.bf16.msra.mxu0 %v585
    %974 = vmatprep.subr.bf16.mxu0 0
    %975 = vmatpush1.bf16.msra.mxu0 %v598
    %976 = vmatprep.subr.bf16.mxu0 0
    %977 = vmatpush1.bf16.msra.mxu0 %v611
    %978 = vmatprep.subr.bf16.mxu0 0
    %979 = vmatpush1.bf16.msra.mxu0 0
    %980 = vmatprep.subr.bf16.mxu0 0
    %981 = vmatpush1.bf16.msra.mxu0 0
    %982 = vmatprep.subr.bf16.mxu0 0
    %983 = vmatpush1.bf16.msra.mxu0 0
    %984 = vmatprep.subr.bf16.mxu0 0
    %985 = vmatpush1.bf16.msra.mxu0 0
    %986 = vmatprep.subr.bf16.mxu0 0
    %987 = vmatpush1.bf16.msra.mxu0 0
    %988 = vmatprep.subr.bf16.mxu0 0
    %989 = vmatpush1.bf16.msra.mxu0 0
    %990 = vmatprep.subr.bf16.mxu0 0
    %991 = vmatpush1.bf16.msra.mxu0 0
    %992 = vmatprep.subr.bf16.mxu0 0
    %993 = vmatpush1.bf16.msra.mxu0 0
    %994 = vmatprep.mubr.bf16.mxu0 0
    %995 = vmatmul.mubr.bf16.gmra.mrb[0].mxu0 %v72
    %v996 = vpop.f32.mrb[0].mxu0
    %v997 = vadd.f32 0.0, %v996
    %v998 = vpop.f32.mrb[0].mxu0
    %v999 = vpop.f32.mrb[0].mxu0
    %v1000 = vpop.f32.mrb[0].mxu0
    %1001 = vdwg.mxu0
    %1002 = vmatprep.subr.bf16.mxu0 %v509
    %1003 = vmatpush1.bf16.msra.mxu0 %v508
    %1004 = vmatprep.subr.bf16.mxu0 %v522
    %1005 = vmatpush1.bf16.msra.mxu0 %v521
    %1006 = vmatprep.subr.bf16.mxu0 %v535
    %1007 = vmatpush1.bf16.msra.mxu0 %v534
    %1008 = vmatprep.subr.bf16.mxu0 %v548
    %1009 = vmatpush1.bf16.msra.mxu0 %v547
    %1010 = vmatprep.subr.bf16.mxu0 %v561
    %1011 = vmatpush1.bf16.msra.mxu0 %v560
    %1012 = vmatprep.subr.bf16.mxu0 %v574
    %1013 = vmatpush1.bf16.msra.mxu0 %v573
    %1014 = vmatprep.subr.bf16.mxu0 %v587
    %1015 = vmatpush1.bf16.msra.mxu0 %v586
    %1016 = vmatprep.subr.bf16.mxu0 %v600
    %1017 = vmatpush1.bf16.msra.mxu0 %v599
    %1018 = vmatprep.subr.bf16.mxu0 0
    %1019 = vmatpush1.bf16.msra.mxu0 0
    %1020 = vmatprep.subr.bf16.mxu0 0
    %1021 = vmatpush1.bf16.msra.mxu0 0
    %1022 = vmatprep.subr.bf16.mxu0 0
    %1023 = vmatpush1.bf16.msra.mxu0 0
    %1024 = vmatprep.subr.bf16.mxu0 0
    %1025 = vmatpush1.bf16.msra.mxu0 0
    %1026 = vmatprep.subr.bf16.mxu0 0
    %1027 = vmatpush1.bf16.msra.mxu0 0
    %1028 = vmatprep.subr.bf16.mxu0 0
    %1029 = vmatpush1.bf16.msra.mxu0 0
    %1030 = vmatprep.subr.bf16.mxu0 0
    %1031 = vmatpush1.bf16.msra.mxu0 0
    %1032 = vmatprep.subr.bf16.mxu0 0
    %1033 = vmatpush1.bf16.msra.mxu0 0
    %1034 = vmatprep.mubr.bf16.mxu0 0
    %1035 = vmatmul.mubr.bf16.gmra.mrb[0].mxu0 %v69
    %v1036 = vpop.f32.mrb[0].mxu0
    %v1037 = vadd.f32 %v751, %v1036
    %v1038 = vpop.f32.mrb[0].mxu0
    %v1039 = vadd.f32 %v753, %v1038
    %v1040 = vpop.f32.mrb[0].mxu0
    %v1041 = vpop.f32.mrb[0].mxu0
    %1042 = vdwg.mxu0
    %1043 = vmatprep.subr.bf16.mxu0 %v511
    %1044 = vmatpush1.bf16.msra.mxu0 %v510
    %1045 = vmatprep.subr.bf16.mxu0 %v524
    %1046 = vmatpush1.bf16.msra.mxu0 %v523
    %1047 = vmatprep.subr.bf16.mxu0 %v537
    %1048 = vmatpush1.bf16.msra.mxu0 %v536
    %1049 = vmatprep.subr.bf16.mxu0 %v550
    %1050 = vmatpush1.bf16.msra.mxu0 %v549
    %1051 = vmatprep.subr.bf16.mxu0 %v563
    %1052 = vmatpush1.bf16.msra.mxu0 %v562
    %1053 = vmatprep.subr.bf16.mxu0 %v576
    %1054 = vmatpush1.bf16.msra.mxu0 %v575
    %1055 = vmatprep.subr.bf16.mxu0 %v589
    %1056 = vmatpush1.bf16.msra.mxu0 %v588
    %1057 = vmatprep.subr.bf16.mxu0 %v602
    %1058 = vmatpush1.bf16.msra.mxu0 %v601
    %1059 = vmatprep.subr.bf16.mxu0 0
    %1060 = vmatpush1.bf16.msra.mxu0 0
    %1061 = vmatprep.subr.bf16.mxu0 0
    %1062 = vmatpush1.bf16.msra.mxu0 0
    %1063 = vmatprep.subr.bf16.mxu0 0
    %1064 = vmatpush1.bf16.msra.mxu0 0
    %1065 = vmatprep.subr.bf16.mxu0 0
    %1066 = vmatpush1.bf16.msra.mxu0 0
    %1067 = vmatprep.subr.bf16.mxu0 0
    %1068 = vmatpush1.bf16.msra.mxu0 0
    %1069 = vmatprep.subr.bf16.mxu0 0
    %1070 = vmatpush1.bf16.msra.mxu0 0
    %1071 = vmatprep.subr.bf16.mxu0 0
    %1072 = vmatpush1.bf16.msra.mxu0 0
    %1073 = vmatprep.subr.bf16.mxu0 0
    %1074 = vmatpush1.bf16.msra.mxu0 0
    %1075 = vmatprep.mubr.bf16.mxu0 0
    %1076 = vmatmul.mubr.bf16.gmra.mrb[0].mxu0 %v69
    %v1077 = vpop.f32.mrb[0].mxu0
    %v1078 = vadd.f32 %v792, %v1077
    %v1079 = vpop.f32.mrb[0].mxu0
    %v1080 = vadd.f32 %v794, %v1079
    %v1081 = vpop.f32.mrb[0].mxu0
    %v1082 = vpop.f32.mrb[0].mxu0
    %1083 = vdwg.mxu0
    %1084 = vmatprep.subr.bf16.mxu0 %v513
    %1085 = vmatpush1.bf16.msra.mxu0 %v512
    %1086 = vmatprep.subr.bf16.mxu0 %v526
    %1087 = vmatpush1.bf16.msra.mxu0 %v525
    %1088 = vmatprep.subr.bf16.mxu0 %v539
    %1089 = vmatpush1.bf16.msra.mxu0 %v538
    %1090 = vmatprep.subr.bf16.mxu0 %v552
    %1091 = vmatpush1.bf16.msra.mxu0 %v551
    %1092 = vmatprep.subr.bf16.mxu0 %v565
    %1093 = vmatpush1.bf16.msra.mxu0 %v564
    %1094 = vmatprep.subr.bf16.mxu0 %v578
    %1095 = vmatpush1.bf16.msra.mxu0 %v577
    %1096 = vmatprep.subr.bf16.mxu0 %v591
    %1097 = vmatpush1.bf16.msra.mxu0 %v590
    %1098 = vmatprep.subr.bf16.mxu0 %v604
    %1099 = vmatpush1.bf16.msra.mxu0 %v603
    %1100 = vmatprep.subr.bf16.mxu0 0
    %1101 = vmatpush1.bf16.msra.mxu0 0
    %1102 = vmatprep.subr.bf16.mxu0 0
    %1103 = vmatpush1.bf16.msra.mxu0 0
    %1104 = vmatprep.subr.bf16.mxu0 0
    %1105 = vmatpush1.bf16.msra.mxu0 0
    %1106 = vmatprep.subr.bf16.mxu0 0
    %1107 = vmatpush1.bf16.msra.mxu0 0
    %1108 = vmatprep.subr.bf16.mxu0 0
    %1109 = vmatpush1.bf16.msra.mxu0 0
    %1110 = vmatprep.subr.bf16.mxu0 0
    %1111 = vmatpush1.bf16.msra.mxu0 0
    %1112 = vmatprep.subr.bf16.mxu0 0
    %1113 = vmatpush1.bf16.msra.mxu0 0
    %1114 = vmatprep.subr.bf16.mxu0 0
    %1115 = vmatpush1.bf16.msra.mxu0 0
    %1116 = vmatprep.mubr.bf16.mxu0 0
    %1117 = vmatmul.mubr.bf16.gmra.mrb[0].mxu0 %v69
    %v1118 = vpop.f32.mrb[0].mxu0
    %v1119 = vadd.f32 %v833, %v1118
    %v1120 = vpop.f32.mrb[0].mxu0
    %v1121 = vadd.f32 %v835, %v1120
    %v1122 = vpop.f32.mrb[0].mxu0
    %v1123 = vpop.f32.mrb[0].mxu0
    %1124 = vdwg.mxu0
    %1125 = vmatprep.subr.bf16.mxu0 %v515
    %1126 = vmatpush1.bf16.msra.mxu0 %v514
    %1127 = vmatprep.subr.bf16.mxu0 %v528
    %1128 = vmatpush1.bf16.msra.mxu0 %v527
    %1129 = vmatprep.subr.bf16.mxu0 %v541
    %1130 = vmatpush1.bf16.msra.mxu0 %v540
    %1131 = vmatprep.subr.bf16.mxu0 %v554
    %1132 = vmatpush1.bf16.msra.mxu0 %v553
    %1133 = vmatprep.subr.bf16.mxu0 %v567
    %1134 = vmatpush1.bf16.msra.mxu0 %v566
    %1135 = vmatprep.subr.bf16.mxu0 %v580
    %1136 = vmatpush1.bf16.msra.mxu0 %v579
    %1137 = vmatprep.subr.bf16.mxu0 %v593
    %1138 = vmatpush1.bf16.msra.mxu0 %v592
    %1139 = vmatprep.subr.bf16.mxu0 %v606
    %1140 = vmatpush1.bf16.msra.mxu0 %v605
    %1141 = vmatprep.subr.bf16.mxu0 0
    %1142 = vmatpush1.bf16.msra.mxu0 0
    %1143 = vmatprep.subr.bf16.mxu0 0
    %1144 = vmatpush1.bf16.msra.mxu0 0
    %1145 = vmatprep.subr.bf16.mxu0 0
    %1146 = vmatpush1.bf16.msra.mxu0 0
    %1147 = vmatprep.subr.bf16.mxu0 0
    %1148 = vmatpush1.bf16.msra.mxu0 0
    %1149 = vmatprep.subr.bf16.mxu0 0
    %1150 = vmatpush1.bf16.msra.mxu0 0
    %1151 = vmatprep.subr.bf16.mxu0 0
    %1152 = vmatpush1.bf16.msra.mxu0 0
    %1153 = vmatprep.subr.bf16.mxu0 0
    %1154 = vmatpush1.bf16.msra.mxu0 0
    %1155 = vmatprep.subr.bf16.mxu0 0
    %1156 = vmatpush1.bf16.msra.mxu0 0
    %1157 = vmatprep.mubr.bf16.mxu0 0
    %1158 = vmatmul.mubr.bf16.gmra.mrb[0].mxu0 %v69
    %v1159 = vpop.f32.mrb[0].mxu0
    %v1160 = vadd.f32 %v874, %v1159
    %v1161 = vpop.f32.mrb[0].mxu0
    %v1162 = vadd.f32 %v876, %v1161
    %v1163 = vpop.f32.mrb[0].mxu0
    %v1164 = vpop.f32.mrb[0].mxu0
    %1165 = vdwg.mxu0
    %1166 = vmatprep.subr.bf16.mxu0 %v517
    %1167 = vmatpush1.bf16.msra.mxu0 %v516
    %1168 = vmatprep.subr.bf16.mxu0 %v530
    %1169 = vmatpush1.bf16.msra.mxu0 %v529
    %1170 = vmatprep.subr.bf16.mxu0 %v543
    %1171 = vmatpush1.bf16.msra.mxu0 %v542
    %1172 = vmatprep.subr.bf16.mxu0 %v556
    %1173 = vmatpush1.bf16.msra.mxu0 %v555
    %1174 = vmatprep.subr.bf16.mxu0 %v569
    %1175 = vmatpush1.bf16.msra.mxu0 %v568
    %1176 = vmatprep.subr.bf16.mxu0 %v582
    %1177 = vmatpush1.bf16.msra.mxu0 %v581
    %1178 = vmatprep.subr.bf16.mxu0 %v595
    %1179 = vmatpush1.bf16.msra.mxu0 %v594
    %1180 = vmatprep.subr.bf16.mxu0 %v608
    %1181 = vmatpush1.bf16.msra.mxu0 %v607
    %1182 = vmatprep.subr.bf16.mxu0 0
    %1183 = vmatpush1.bf16.msra.mxu0 0
    %1184 = vmatprep.subr.bf16.mxu0 0
    %1185 = vmatpush1.bf16.msra.mxu0 0
    %1186 = vmatprep.subr.bf16.mxu0 0
    %1187 = vmatpush1.bf16.msra.mxu0 0
    %1188 = vmatprep.subr.bf16.mxu0 0
    %1189 = vmatpush1.bf16.msra.mxu0 0
    %1190 = vmatprep.subr.bf16.mxu0 0
    %1191 = vmatpush1.bf16.msra.mxu0 0
    %1192 = vmatprep.subr.bf16.mxu0 0
    %1193 = vmatpush1.bf16.msra.mxu0 0
    %1194 = vmatprep.subr.bf16.mxu0 0
    %1195 = vmatpush1.bf16.msra.mxu0 0
    %1196 = vmatprep.subr.bf16.mxu0 0
    %1197 = vmatpush1.bf16.msra.mxu0 0
    %1198 = vmatprep.mubr.bf16.mxu0 0
    %1199 = vmatmul.mubr.bf16.gmra.mrb[0].mxu0 %v69
    %v1200 = vpop.f32.mrb[0].mxu0
    %v1201 = vadd.f32 %v915, %v1200
    %v1202 = vpop.f32.mrb[0].mxu0
    %v1203 = vadd.f32 %v917, %v1202
    %v1204 = vpop.f32.mrb[0].mxu0
    %v1205 = vpop.f32.mrb[0].mxu0
    %1206 = vdwg.mxu0
    %1207 = vmatprep.subr.bf16.mxu0 %v519
    %1208 = vmatpush1.bf16.msra.mxu0 %v518
    %1209 = vmatprep.subr.bf16.mxu0 %v532
    %1210 = vmatpush1.bf16.msra.mxu0 %v531
    %1211 = vmatprep.subr.bf16.mxu0 %v545
    %1212 = vmatpush1.bf16.msra.mxu0 %v544
    %1213 = vmatprep.subr.bf16.mxu0 %v558
    %1214 = vmatpush1.bf16.msra.mxu0 %v557
    %1215 = vmatprep.subr.bf16.mxu0 %v571
    %1216 = vmatpush1.bf16.msra.mxu0 %v570
    %1217 = vmatprep.subr.bf16.mxu0 %v584
    %1218 = vmatpush1.bf16.msra.mxu0 %v583
    %1219 = vmatprep.subr.bf16.mxu0 %v597
    %1220 = vmatpush1.bf16.msra.mxu0 %v596
    %1221 = vmatprep.subr.bf16.mxu0 %v610
    %1222 = vmatpush1.bf16.msra.mxu0 %v609
    %1223 = vmatprep.subr.bf16.mxu0 0
    %1224 = vmatpush1.bf16.msra.mxu0 0
    %1225 = vmatprep.subr.bf16.mxu0 0
    %1226 = vmatpush1.bf16.msra.mxu0 0
    %1227 = vmatprep.subr.bf16.mxu0 0
    %1228 = vmatpush1.bf16.msra.mxu0 0
    %1229 = vmatprep.subr.bf16.mxu0 0
    %1230 = vmatpush1.bf16.msra.mxu0 0
    %1231 = vmatprep.subr.bf16.mxu0 0
    %1232 = vmatpush1.bf16.msra.mxu0 0
    %1233 = vmatprep.subr.bf16.mxu0 0
    %1234 = vmatpush1.bf16.msra.mxu0 0
    %1235 = vmatprep.subr.bf16.mxu0 0
    %1236 = vmatpush1.bf16.msra.mxu0 0
    %1237 = vmatprep.subr.bf16.mxu0 0
    %1238 = vmatpush1.bf16.msra.mxu0 0
    %1239 = vmatprep.mubr.bf16.mxu0 0
    %1240 = vmatmul.mubr.bf16.gmra.mrb[0].mxu0 %v69
    %v1241 = vpop.f32.mrb[0].mxu0
    %v1242 = vadd.f32 %v956, %v1241
    %v1243 = vpop.f32.mrb[0].mxu0
    %v1244 = vadd.f32 %v958, %v1243
    %v1245 = vpop.f32.mrb[0].mxu0
    %v1246 = vpop.f32.mrb[0].mxu0
    %1247 = vdwg.mxu0
    %1248 = vmatprep.subr.bf16.mxu0 0
    %1249 = vmatpush1.bf16.msra.mxu0 %v520
    %1250 = vmatprep.subr.bf16.mxu0 0
    %1251 = vmatpush1.bf16.msra.mxu0 %v533
    %1252 = vmatprep.subr.bf16.mxu0 0
    %1253 = vmatpush1.bf16.msra.mxu0 %v546
    %1254 = vmatprep.subr.bf16.mxu0 0
    %1255 = vmatpush1.bf16.msra.mxu0 %v559
    %1256 = vmatprep.subr.bf16.mxu0 0
    %1257 = vmatpush1.bf16.msra.mxu0 %v572
    %1258 = vmatprep.subr.bf16.mxu0 0
    %1259 = vmatpush1.bf16.msra.mxu0 %v585
    %1260 = vmatprep.subr.bf16.mxu0 0
    %1261 = vmatpush1.bf16.msra.mxu0 %v598
    %1262 = vmatprep.subr.bf16.mxu0 0
    %1263 = vmatpush1.bf16.msra.mxu0 %v611
    %1264 = vmatprep.subr.bf16.mxu0 0
    %1265 = vmatpush1.bf16.msra.mxu0 0
    %1266 = vmatprep.subr.bf16.mxu0 0
    %1267 = vmatpush1.bf16.msra.mxu0 0
    %1268 = vmatprep.subr.bf16.mxu0 0
    %1269 = vmatpush1.bf16.msra.mxu0 0
    %1270 = vmatprep.subr.bf16.mxu0 0
    %1271 = vmatpush1.bf16.msra.mxu0 0
    %1272 = vmatprep.subr.bf16.mxu0 0
    %1273 = vmatpush1.bf16.msra.mxu0 0
    %1274 = vmatprep.subr.bf16.mxu0 0
    %1275 = vmatpush1.bf16.msra.mxu0 0
    %1276 = vmatprep.subr.bf16.mxu0 0
    %1277 = vmatpush1.bf16.msra.mxu0 0
    %1278 = vmatprep.subr.bf16.mxu0 0
    %1279 = vmatpush1.bf16.msra.mxu0 0
    %1280 = vmatprep.mubr.bf16.mxu0 0
    %1281 = vmatmul.mubr.bf16.gmra.mrb[0].mxu0 %v69
    %v1282 = vpop.f32.mrb[0].mxu0
    %v1283 = vadd.f32 %v997, %v1282
    %v1284 = vpop.f32.mrb[0].mxu0
    %v1285 = vpop.f32.mrb[0].mxu0
    %v1286 = vpop.f32.mrb[0].mxu0
    %1287 = vdwg.mxu0
    %1288 = vmatprep.subr.bf16.mxu0 %v509
    %1289 = vmatpush1.bf16.msra.mxu0 %v508
    %1290 = vmatprep.subr.bf16.mxu0 %v522
    %1291 = vmatpush1.bf16.msra.mxu0 %v521
    %1292 = vmatprep.subr.bf16.mxu0 %v535
    %1293 = vmatpush1.bf16.msra.mxu0 %v534
    %1294 = vmatprep.subr.bf16.mxu0 %v548
    %1295 = vmatpush1.bf16.msra.mxu0 %v547
    %1296 = vmatprep.subr.bf16.mxu0 %v561
    %1297 = vmatpush1.bf16.msra.mxu0 %v560
    %1298 = vmatprep.subr.bf16.mxu0 %v574
    %1299 = vmatpush1.bf16.msra.mxu0 %v573
    %1300 = vmatprep.subr.bf16.mxu0 %v587
    %1301 = vmatpush1.bf16.msra.mxu0 %v586
    %1302 = vmatprep.subr.bf16.mxu0 %v600
    %1303 = vmatpush1.bf16.msra.mxu0 %v599
    %1304 = vmatprep.subr.bf16.mxu0 0
    %1305 = vmatpush1.bf16.msra.mxu0 0
    %1306 = vmatprep.subr.bf16.mxu0 0
    %1307 = vmatpush1.bf16.msra.mxu0 0
    %1308 = vmatprep.subr.bf16.mxu0 0
    %1309 = vmatpush1.bf16.msra.mxu0 0
    %1310 = vmatprep.subr.bf16.mxu0 0
    %1311 = vmatpush1.bf16.msra.mxu0 0
    %1312 = vmatprep.subr.bf16.mxu0 0
    %1313 = vmatpush1.bf16.msra.mxu0 0
    %1314 = vmatprep.subr.bf16.mxu0 0
    %1315 = vmatpush1.bf16.msra.mxu0 0
    %1316 = vmatprep.subr.bf16.mxu0 0
    %1317 = vmatpush1.bf16.msra.mxu0 0
    %1318 = vmatprep.subr.bf16.mxu0 0
    %1319 = vmatpush1.bf16.msra.mxu0 0
    %1320 = vmatprep.mubr.bf16.mxu0 0
    %1321 = vmatmul.mubr.bf16.gmra.mrb[0].mxu0 %v75
    %v1322 = vpop.f32.mrb[0].mxu0
    %v1323 = vadd.f32 0.0, %v1322
    %v1324 = vpop.f32.mrb[0].mxu0
    %v1325 = vadd.f32 0.0, %v1324
    %v1326 = vpop.f32.mrb[0].mxu0
    %v1327 = vpop.f32.mrb[0].mxu0
    %1328 = vdwg.mxu0
    %1329 = vmatprep.subr.bf16.mxu0 %v511
    %1330 = vmatpush1.bf16.msra.mxu0 %v510
    %1331 = vmatprep.subr.bf16.mxu0 %v524
    %1332 = vmatpush1.bf16.msra.mxu0 %v523
    %1333 = vmatprep.subr.bf16.mxu0 %v537
    %1334 = vmatpush1.bf16.msra.mxu0 %v536
    %1335 = vmatprep.subr.bf16.mxu0 %v550
    %1336 = vmatpush1.bf16.msra.mxu0 %v549
    %1337 = vmatprep.subr.bf16.mxu0 %v563
    %1338 = vmatpush1.bf16.msra.mxu0 %v562
    %1339 = vmatprep.subr.bf16.mxu0 %v576
    %1340 = vmatpush1.bf16.msra.mxu0 %v575
    %1341 = vmatprep.subr.bf16.mxu0 %v589
    %1342 = vmatpush1.bf16.msra.mxu0 %v588
    %1343 = vmatprep.subr.bf16.mxu0 %v602
    %1344 = vmatpush1.bf16.msra.mxu0 %v601
    %1345 = vmatprep.subr.bf16.mxu0 0
    %1346 = vmatpush1.bf16.msra.mxu0 0
    %1347 = vmatprep.subr.bf16.mxu0 0
    %1348 = vmatpush1.bf16.msra.mxu0 0
    %1349 = vmatprep.subr.bf16.mxu0 0
    %1350 = vmatpush1.bf16.msra.mxu0 0
    %1351 = vmatprep.subr.bf16.mxu0 0
    %1352 = vmatpush1.bf16.msra.mxu0 0
    %1353 = vmatprep.subr.bf16.mxu0 0
    %1354 = vmatpush1.bf16.msra.mxu0 0
    %1355 = vmatprep.subr.bf16.mxu0 0
    %1356 = vmatpush1.bf16.msra.mxu0 0
    %1357 = vmatprep.subr.bf16.mxu0 0
    %1358 = vmatpush1.bf16.msra.mxu0 0
    %1359 = vmatprep.subr.bf16.mxu0 0
    %1360 = vmatpush1.bf16.msra.mxu0 0
    %1361 = vmatprep.mubr.bf16.mxu0 0
    %1362 = vmatmul.mubr.bf16.gmra.mrb[0].mxu0 %v75
    %v1363 = vpop.f32.mrb[0].mxu0
    %v1364 = vadd.f32 0.0, %v1363
    %v1365 = vpop.f32.mrb[0].mxu0
    %v1366 = vadd.f32 0.0, %v1365
    %v1367 = vpop.f32.mrb[0].mxu0
    %v1368 = vpop.f32.mrb[0].mxu0
    %1369 = vdwg.mxu0
    %1370 = vmatprep.subr.bf16.mxu0 %v513
    %1371 = vmatpush1.bf16.msra.mxu0 %v512
    %1372 = vmatprep.subr.bf16.mxu0 %v526
    %1373 = vmatpush1.bf16.msra.mxu0 %v525
    %1374 = vmatprep.subr.bf16.mxu0 %v539
    %1375 = vmatpush1.bf16.msra.mxu0 %v538
    %1376 = vmatprep.subr.bf16.mxu0 %v552
    %1377 = vmatpush1.bf16.msra.mxu0 %v551
    %1378 = vmatprep.subr.bf16.mxu0 %v565
    %1379 = vmatpush1.bf16.msra.mxu0 %v564
    %1380 = vmatprep.subr.bf16.mxu0 %v578
    %1381 = vmatpush1.bf16.msra.mxu0 %v577
    %1382 = vmatprep.subr.bf16.mxu0 %v591
    %1383 = vmatpush1.bf16.msra.mxu0 %v590
    %1384 = vmatprep.subr.bf16.mxu0 %v604
    %1385 = vmatpush1.bf16.msra.mxu0 %v603
    %1386 = vmatprep.subr.bf16.mxu0 0
    %1387 = vmatpush1.bf16.msra.mxu0 0
    %1388 = vmatprep.subr.bf16.mxu0 0
    %1389 = vmatpush1.bf16.msra.mxu0 0
    %1390 = vmatprep.subr.bf16.mxu0 0
    %1391 = vmatpush1.bf16.msra.mxu0 0
    %1392 = vmatprep.subr.bf16.mxu0 0
    %1393 = vmatpush1.bf16.msra.mxu0 0
    %1394 = vmatprep.subr.bf16.mxu0 0
    %1395 = vmatpush1.bf16.msra.mxu0 0
    %1396 = vmatprep.subr.bf16.mxu0 0
    %1397 = vmatpush1.bf16.msra.mxu0 0
    %1398 = vmatprep.subr.bf16.mxu0 0
    %1399 = vmatpush1.bf16.msra.mxu0 0
    %1400 = vmatprep.subr.bf16.mxu0 0
    %1401 = vmatpush1.bf16.msra.mxu0 0
    %1402 = vmatprep.mubr.bf16.mxu0 0
    %1403 = vmatmul.mubr.bf16.gmra.mrb[0].mxu0 %v75
    %v1404 = vpop.f32.mrb[0].mxu0
    %v1405 = vadd.f32 0.0, %v1404
    %v1406 = vpop.f32.mrb[0].mxu0
    %v1407 = vadd.f32 0.0, %v1406
    %v1408 = vpop.f32.mrb[0].mxu0
    %v1409 = vpop.f32.mrb[0].mxu0
    %1410 = vdwg.mxu0
    %1411 = vmatprep.subr.bf16.mxu0 %v515
    %1412 = vmatpush1.bf16.msra.mxu0 %v514
    %1413 = vmatprep.subr.bf16.mxu0 %v528
    %1414 = vmatpush1.bf16.msra.mxu0 %v527
    %1415 = vmatprep.subr.bf16.mxu0 %v541
    %1416 = vmatpush1.bf16.msra.mxu0 %v540
    %1417 = vmatprep.subr.bf16.mxu0 %v554
    %1418 = vmatpush1.bf16.msra.mxu0 %v553
    %1419 = vmatprep.subr.bf16.mxu0 %v567
    %1420 = vmatpush1.bf16.msra.mxu0 %v566
    %1421 = vmatprep.subr.bf16.mxu0 %v580
    %1422 = vmatpush1.bf16.msra.mxu0 %v579
    %1423 = vmatprep.subr.bf16.mxu0 %v593
    %1424 = vmatpush1.bf16.msra.mxu0 %v592
    %1425 = vmatprep.subr.bf16.mxu0 %v606
    %1426 = vmatpush1.bf16.msra.mxu0 %v605
    %1427 = vmatprep.subr.bf16.mxu0 0
    %1428 = vmatpush1.bf16.msra.mxu0 0
    %1429 = vmatprep.subr.bf16.mxu0 0
    %1430 = vmatpush1.bf16.msra.mxu0 0
    %1431 = vmatprep.subr.bf16.mxu0 0
    %1432 = vmatpush1.bf16.msra.mxu0 0
    %1433 = vmatprep.subr.bf16.mxu0 0
    %1434 = vmatpush1.bf16.msra.mxu0 0
    %1435 = vmatprep.subr.bf16.mxu0 0
    %1436 = vmatpush1.bf16.msra.mxu0 0
    %1437 = vmatprep.subr.bf16.mxu0 0
    %1438 = vmatpush1.bf16.msra.mxu0 0
    %1439 = vmatprep.subr.bf16.mxu0 0
    %1440 = vmatpush1.bf16.msra.mxu0 0
    %1441 = vmatprep.subr.bf16.mxu0 0
    %1442 = vmatpush1.bf16.msra.mxu0 0
    %1443 = vmatprep.mubr.bf16.mxu0 0
    %1444 = vmatmul.mubr.bf16.gmra.mrb[0].mxu0 %v75
    %v1445 = vpop.f32.mrb[0].mxu0
    %v1446 = vadd.f32 0.0, %v1445
    %v1447 = vpop.f32.mrb[0].mxu0
    %v1448 = vadd.f32 0.0, %v1447
    %v1449 = vpop.f32.mrb[0].mxu0
    %v1450 = vpop.f32.mrb[0].mxu0
    %1451 = vdwg.mxu0
    %1452 = vmatprep.subr.bf16.mxu0 %v517
    %1453 = vmatpush1.bf16.msra.mxu0 %v516
    %1454 = vmatprep.subr.bf16.mxu0 %v530
    %1455 = vmatpush1.bf16.msra.mxu0 %v529
    %1456 = vmatprep.subr.bf16.mxu0 %v543
    %1457 = vmatpush1.bf16.msra.mxu0 %v542
    %1458 = vmatprep.subr.bf16.mxu0 %v556
    %1459 = vmatpush1.bf16.msra.mxu0 %v555
    %1460 = vmatprep.subr.bf16.mxu0 %v569
    %1461 = vmatpush1.bf16.msra.mxu0 %v568
    %1462 = vmatprep.subr.bf16.mxu0 %v582
    %1463 = vmatpush1.bf16.msra.mxu0 %v581
    %1464 = vmatprep.subr.bf16.mxu0 %v595
    %1465 = vmatpush1.bf16.msra.mxu0 %v594
    %1466 = vmatprep.subr.bf16.mxu0 %v608
    %1467 = vmatpush1.bf16.msra.mxu0 %v607
    %1468 = vmatprep.subr.bf16.mxu0 0
    %1469 = vmatpush1.bf16.msra.mxu0 0
    %1470 = vmatprep.subr.bf16.mxu0 0
    %1471 = vmatpush1.bf16.msra.mxu0 0
    %1472 = vmatprep.subr.bf16.mxu0 0
    %1473 = vmatpush1.bf16.msra.mxu0 0
    %1474 = vmatprep.subr.bf16.mxu0 0
    %1475 = vmatpush1.bf16.msra.mxu0 0
    %1476 = vmatprep.subr.bf16.mxu0 0
    %1477 = vmatpush1.bf16.msra.mxu0 0
    %1478 = vmatprep.subr.bf16.mxu0 0
    %1479 = vmatpush1.bf16.msra.mxu0 0
    %1480 = vmatprep.subr.bf16.mxu0 0
    %1481 = vmatpush1.bf16.msra.mxu0 0
    %1482 = vmatprep.subr.bf16.mxu0 0
    %1483 = vmatpush1.bf16.msra.mxu0 0
    %1484 = vmatprep.mubr.bf16.mxu0 0
    %1485 = vmatmul.mubr.bf16.gmra.mrb[0].mxu0 %v75
    %v1486 = vpop.f32.mrb[0].mxu0
    %v1487 = vadd.f32 0.0, %v1486
    %v1488 = vpop.f32.mrb[0].mxu0
    %v1489 = vadd.f32 0.0, %v1488
    %v1490 = vpop.f32.mrb[0].mxu0
    %v1491 = vpop.f32.mrb[0].mxu0
    %1492 = vdwg.mxu0
    %1493 = vmatprep.subr.bf16.mxu0 %v519
    %1494 = vmatpush1.bf16.msra.mxu0 %v518
    %1495 = vmatprep.subr.bf16.mxu0 %v532
    %1496 = vmatpush1.bf16.msra.mxu0 %v531
    %1497 = vmatprep.subr.bf16.mxu0 %v545
    %1498 = vmatpush1.bf16.msra.mxu0 %v544
    %1499 = vmatprep.subr.bf16.mxu0 %v558
    %1500 = vmatpush1.bf16.msra.mxu0 %v557
    %1501 = vmatprep.subr.bf16.mxu0 %v571
    %1502 = vmatpush1.bf16.msra.mxu0 %v570
    %1503 = vmatprep.subr.bf16.mxu0 %v584
    %1504 = vmatpush1.bf16.msra.mxu0 %v583
    %1505 = vmatprep.subr.bf16.mxu0 %v597
    %1506 = vmatpush1.bf16.msra.mxu0 %v596
    %1507 = vmatprep.subr.bf16.mxu0 %v610
    %1508 = vmatpush1.bf16.msra.mxu0 %v609
    %1509 = vmatprep.subr.bf16.mxu0 0
    %1510 = vmatpush1.bf16.msra.mxu0 0
    %1511 = vmatprep.subr.bf16.mxu0 0
    %1512 = vmatpush1.bf16.msra.mxu0 0
    %1513 = vmatprep.subr.bf16.mxu0 0
    %1514 = vmatpush1.bf16.msra.mxu0 0
    %1515 = vmatprep.subr.bf16.mxu0 0
    %1516 = vmatpush1.bf16.msra.mxu0 0
    %1517 = vmatprep.subr.bf16.mxu0 0
    %1518 = vmatpush1.bf16.msra.mxu0 0
    %1519 = vmatprep.subr.bf16.mxu0 0
    %1520 = vmatpush1.bf16.msra.mxu0 0
    %1521 = vmatprep.subr.bf16.mxu0 0
    %1522 = vmatpush1.bf16.msra.mxu0 0
    %1523 = vmatprep.subr.bf16.mxu0 0
    %1524 = vmatpush1.bf16.msra.mxu0 0
    %1525 = vmatprep.mubr.bf16.mxu0 0
    %1526 = vmatmul.mubr.bf16.gmra.mrb[0].mxu0 %v75
    %v1527 = vpop.f32.mrb[0].mxu0
    %v1528 = vadd.f32 0.0, %v1527
    %v1529 = vpop.f32.mrb[0].mxu0
    %v1530 = vadd.f32 0.0, %v1529
    %v1531 = vpop.f32.mrb[0].mxu0
    %v1532 = vpop.f32.mrb[0].mxu0
    %1533 = vdwg.mxu0
    %1534 = vmatprep.subr.bf16.mxu0 0
    %1535 = vmatpush1.bf16.msra.mxu0 %v520
    %1536 = vmatprep.subr.bf16.mxu0 0
    %1537 = vmatpush1.bf16.msra.mxu0 %v533
    %1538 = vmatprep.subr.bf16.mxu0 0
    %1539 = vmatpush1.bf16.msra.mxu0 %v546
    %1540 = vmatprep.subr.bf16.mxu0 0
    %1541 = vmatpush1.bf16.msra.mxu0 %v559
    %1542 = vmatprep.subr.bf16.mxu0 0
    %1543 = vmatpush1.bf16.msra.mxu0 %v572
    %1544 = vmatprep.subr.bf16.mxu0 0
    %1545 = vmatpush1.bf16.msra.mxu0 %v585
    %1546 = vmatprep.subr.bf16.mxu0 0
    %1547 = vmatpush1.bf16.msra.mxu0 %v598
    %1548 = vmatprep.subr.bf16.mxu0 0
    %1549 = vmatpush1.bf16.msra.mxu0 %v611
    %1550 = vmatprep.subr.bf16.mxu0 0
    %1551 = vmatpush1.bf16.msra.mxu0 0
    %1552 = vmatprep.subr.bf16.mxu0 0
    %1553 = vmatpush1.bf16.msra.mxu0 0
    %1554 = vmatprep.subr.bf16.mxu0 0
    %1555 = vmatpush1.bf16.msra.mxu0 0
    %1556 = vmatprep.subr.bf16.mxu0 0
    %1557 = vmatpush1.bf16.msra.mxu0 0
    %1558 = vmatprep.subr.bf16.mxu0 0
    %1559 = vmatpush1.bf16.msra.mxu0 0
    %1560 = vmatprep.subr.bf16.mxu0 0
    %1561 = vmatpush1.bf16.msra.mxu0 0
    %1562 = vmatprep.subr.bf16.mxu0 0
    %1563 = vmatpush1.bf16.msra.mxu0 0
    %1564 = vmatprep.subr.bf16.mxu0 0
    %1565 = vmatpush1.bf16.msra.mxu0 0
    %1566 = vmatprep.mubr.bf16.mxu0 0
    %1567 = vmatmul.mubr.bf16.gmra.mrb[0].mxu0 %v75
    %v1568 = vpop.f32.mrb[0].mxu0
    %v1569 = vadd.f32 0.0, %v1568
    %v1570 = vpop.f32.mrb[0].mxu0
    %v1571 = vpop.f32.mrb[0].mxu0
    %v1572 = vpop.f32.mrb[0].mxu0
    %1573 = vdwg.mxu0
    %v1574 = vadd.f32 %v1037, %v1323
    %v1575 = vadd.f32 %v1039, %v1325
    %v1576 = vadd.f32 %v1078, %v1364
    %v1577 = vadd.f32 %v1080, %v1366
    %v1578 = vadd.f32 %v1119, %v1405
    %v1579 = vadd.f32 %v1121, %v1407
    %v1580 = vadd.f32 %v1160, %v1446
    %v1581 = vadd.f32 %v1162, %v1448
    %v1582 = vadd.f32 %v1201, %v1487
    %v1583 = vadd.f32 %v1203, %v1489
    %v1584 = vadd.f32 %v1242, %v1528
    %v1585 = vadd.f32 %v1244, %v1530
    %v1586 = vadd.f32 %v1283, %v1569
    %v1587 = vld [vmem:[#allocation7] sm:$0xff]
    %v1588 = vld [vmem:[#allocation7 + $0x8] sm:$0x1f]
    %v1591 = vlaneseq
    %v1592 = vshrl.u32 %v1591, 7
    %v1593 = vsub.s32 0, %v1592
    %v1594 = vrot.slane %v1587, %v1593
    %v1595 = vlaneseq
    %v1596 = vshrl.u32 %v1595, 7
    %v1597 = vsub.s32 1, %v1596
    %v1598 = vrot.slane %v1587, %v1597
    %v1599 = vlaneseq
    %v1600 = vshrl.u32 %v1599, 7
    %v1601 = vsub.s32 2, %v1600
    %v1602 = vrot.slane %v1587, %v1601
    %v1603 = vlaneseq
    %v1604 = vshrl.u32 %v1603, 7
    %v1605 = vsub.s32 3, %v1604
    %v1606 = vrot.slane %v1587, %v1605
    %v1607 = vlaneseq
    %v1608 = vshrl.u32 %v1607, 7
    %v1609 = vsub.s32 4, %v1608
    %v1610 = vrot.slane %v1587, %v1609
    %v1611 = vlaneseq
    %v1612 = vshrl.u32 %v1611, 7
    %v1613 = vsub.s32 5, %v1612
    %v1614 = vrot.slane %v1587, %v1613
    %v1615 = vlaneseq
    %v1616 = vshrl.u32 %v1615, 7
    %v1617 = vsub.s32 6, %v1616
    %v1618 = vrot.slane %v1587, %v1617
    %v1619 = vlaneseq
    %v1620 = vshrl.u32 %v1619, 7
    %v1621 = vsub.s32 7, %v1620
    %v1622 = vrot.slane %v1587, %v1621
    %v1623 = vlaneseq
    %v1624 = vshrl.u32 %v1623, 7
    %v1625 = vsub.s32 0, %v1624
    %v1626 = vrot.slane %v1588, %v1625
    %v1627 = vlaneseq
    %v1628 = vshrl.u32 %v1627, 7
    %v1629 = vsub.s32 1, %v1628
    %v1630 = vrot.slane %v1588, %v1629
    %v1631 = vlaneseq
    %v1632 = vshrl.u32 %v1631, 7
    %v1633 = vsub.s32 2, %v1632
    %v1634 = vrot.slane %v1588, %v1633
    %v1635 = vlaneseq
    %v1636 = vshrl.u32 %v1635, 7
    %v1637 = vsub.s32 3, %v1636
    %v1638 = vrot.slane %v1588, %v1637
    %v1639 = vlaneseq
    %v1640 = vshrl.u32 %v1639, 7
    %v1641 = vsub.s32 4, %v1640
    %v1642 = vrot.slane %v1588, %v1641
    %v1656 = vmul.f32 %v1574, %v1594
    %v1657 = vmul.f32 %v1575, %v1598
    %v1658 = vmul.f32 %v1576, %v1602
    %v1659 = vmul.f32 %v1577, %v1606
    %v1660 = vmul.f32 %v1578, %v1610
    %v1661 = vmul.f32 %v1579, %v1614
    %v1662 = vmul.f32 %v1580, %v1618
    %v1663 = vmul.f32 %v1581, %v1622
    %v1664 = vmul.f32 %v1582, %v1626
    %v1665 = vmul.f32 %v1583, %v1630
    %v1666 = vmul.f32 %v1584, %v1634
    %v1667 = vmul.f32 %v1585, %v1638
    %v1668 = vmul.f32 %v1586, %v1642
    %v1669 = vld [vmem:[#allocation8] sm:$0xff]
    %v1670 = vld [vmem:[#allocation8 + $0x8] sm:$0x1f]
    %vm1671 = vcmp.eq.f32.partialorder %v1669, 0.0
    %vm1672 = vcmp.eq.f32.partialorder %v1670, 0.0
    %v1673 = vand.u32 2147483647, %v1656
    %vm1674 = vcmp.le.f32.partialorder %v1673, 0.7853982
    %vm1675 = vcmp.lt.s32.totalorder %v1656, 0
    %v1676 = vand.u32 %v1656, 2139095040
    %v1677 = vshrl.u32 %v1676, 23
    %v1678 = vsub.s32 %v1677, 127
    %v1679 = vand.u32 2147483647, %v1656
    %v1680 = vand.u32 %v1679, 8388607
    %v1681 = vor.u32 %v1680, 8388608
    %v1682 = vsub.s32 0, %v1681
    %v1683 = vadd.s32 %v1678, 1
    %vm1684 = vcmp.gt.s32.totalorder %v1683, 0
    %v1685 = vsel %vm1684, %v1683, 0
    %v1686 = vshrl.u32 %v1685, 5
    %v1687 = vand.u32 %v1685, 31
    %v1688 = vsub.s32 32, %v1687
    %v1689 = vshrl.u32 683565275, %v1688
    %v1690 = vshll.u32 683565275, %v1687
    %v1691 = vshrl.u32 2475754826, %v1688
    %v1692 = vor.u32 %v1690, %v1691
    %v1693 = vshll.u32 2475754826, %v1687
    %v1694 = vshrl.u32 2131351028, %v1688
    %v1695 = vor.u32 %v1693, %v1694
    %v1696 = vshll.u32 2131351028, %v1687
    %v1697 = vshrl.u32 2102212464, %v1688
    %v1698 = vor.u32 %v1696, %v1697
    %v1699 = vshll.u32 2102212464, %v1687
    %v1700 = vshrl.u32 920167782, %v1688
    %v1701 = vor.u32 %v1699, %v1700
    %v1702 = vshll.u32 920167782, %v1687
    %v1703 = vshrl.u32 1326507024, %v1688
    %v1704 = vor.u32 %v1702, %v1703
    %vm1705 = vcmp.lt.s32.totalorder %v1686, 1
    %vm1706 = vcmp.lt.s32.totalorder %v1686, 2
    %vm1707 = vcmp.lt.s32.totalorder %v1686, 3
    %vm1708 = vcmp.lt.s32.totalorder %v1686, 4
    %v1709 = vsel %vm1705, %v1689, %v1692
    %v1710 = vsel %vm1708, %v1698, 2102212464
    %v1711 = vsel %vm1707, %v1695, %v1710
    %v1712 = vsel %vm1706, %v1709, %v1711
    %v1713 = vsel %vm1705, %v1692, %v1695
    %v1714 = vsel %vm1708, %v1701, 920167782
    %v1715 = vsel %vm1707, %v1698, %v1714
    %v1716 = vsel %vm1706, %v1713, %v1715
    %v1717 = vsel %vm1705, %v1695, %v1698
    %v1718 = vsel %vm1708, %v1704, 1326507024
    %v1719 = vsel %vm1707, %v1701, %v1718
    %v1720 = vsel %vm1706, %v1717, %v1719
    %v1721 = vshll.u32 %v1681, 8
    %v1722 = vmul.u32.u64.compose %v1721, %v1720
    %v1723 = vextract.low.u32 %v1722
    %v1724 = vextract.high.u32 %v1722
    %v1725 = vmul.u32.u64.compose %v1721, %v1716
    %v1726 = vextract.low.u32 %v1725
    %v1727 = vextract.high.u32 %v1725
    %v1728 = vmul.u32 %v1721, %v1712
    %v1729 = vadd.s32 %v1724, %v1726
    %vm1730 = vc.u32 %v1724, %v1726
    %v1731 = vadd.s32 %v1727, 1
    %v1732 = vsel %vm1730, %v1731, %v1727
    %v1733 = vadd.s32 %v1728, %v1732
    %v1734 = vadd.s32 %v1733, 536870912
    %v1735 = vshrl.u32 %v1734, 30
    %v1736 = vshll.u32 %v1735, 30
    %v1737 = vsub.s32 %v1733, %v1736
    %vm1738 = vcmp.lt.s32.totalorder %v1737, 0
    %v1739 = vsub.s32 0, %v1737
    %v1740 = vsel %vm1738, %v1739, %v1737
    %v1741 = vclz %v1740
    %v1742 = vsub.s32 %v1741, 2
    %vm1743 = vcmp.gt.s32.totalorder 0, %v1742
    %v1744 = vsel %vm1743, 0, %v1742
    %v1745 = vsub.s32 32, %v1744
    %v1746 = vshll.u32 %v1737, %v1744
    %v1747 = vshrl.u32 %v1729, %v1745
    %v1748 = vor.u32 %v1746, %v1747
    %v1749 = vsub.s32 4294967266, %v1744
    %v1750 = vadd.s32 %v1749, 127
    %v1751 = vshll.u32 %v1750, 23
    %v1752 = vor.u32 4788187, %v1751
    %v1753 = vand.u32 2147483647, %v1752
    %v1755 = vcvt.s32.f32 %v1748
    %v1756 = vmul.f32 %v1755, %v1753
    %v1757 = vxor.u32 %v1756, 2147483648
    %v1758 = vsel %vm1675, %v1757, %v1756
    %v1759 = vsub.s32 4, %v1735
    %v1760 = vsel %vm1675, %v1759, %v1735
    %v1761 = vsel %vm1674, %v1656, %v1758
    %v1762 = vsel %vm1674, 0, %v1760
    %v1763 = vcosq.f32.pop %v1761
    %v1764 = vsinq.f32.pop %v1761
    %vm1765 = vweird.f32 %v1656
    %v1766 = vadd.s32 %v1762, 3
    %v1767 = vand.u32 %v1766, 3
    %vm1768 = vcmp.lt.s32.totalorder %v1767, 2
    %vm1769 = vcmp.eq.s32.totalorder %v1767, 0
    %v1770 = vxor.u32 %v1764, 2147483648
    %v1771 = vsel %vm1769, %v1763, %v1770
    %vm1772 = vcmp.eq.s32.totalorder %v1767, 2
    %v1773 = vxor.u32 %v1763, 2147483648
    %v1774 = vsel %vm1772, %v1773, %v1764
    %v1775 = vsel %vm1768, %v1771, %v1774
    %v1776 = vsel %vm1765, nan, %v1775
    %v1777 = vand.u32 2147483647, %v1657
    %vm1778 = vcmp.le.f32.partialorder %v1777, 0.7853982
    %vm1779 = vcmp.lt.s32.totalorder %v1657, 0
    %v1780 = vand.u32 %v1657, 2139095040
    %v1781 = vshrl.u32 %v1780, 23
    %v1782 = vsub.s32 %v1781, 127
    %v1783 = vand.u32 2147483647, %v1657
    %v1784 = vand.u32 %v1783, 8388607
    %v1785 = vor.u32 %v1784, 8388608
    %v1786 = vsub.s32 0, %v1785
    %v1787 = vadd.s32 %v1782, 1
    %vm1788 = vcmp.gt.s32.totalorder %v1787, 0
    %v1789 = vsel %vm1788, %v1787, 0
    %v1790 = vshrl.u32 %v1789, 5
    %v1791 = vand.u32 %v1789, 31
    %v1792 = vsub.s32 32, %v1791
    %v1793 = vshrl.u32 683565275, %v1792
    %v1794 = vshll.u32 683565275, %v1791
    %v1795 = vshrl.u32 2475754826, %v1792
    %v1796 = vor.u32 %v1794, %v1795
    %v1797 = vshll.u32 2475754826, %v1791
    %v1798 = vshrl.u32 2131351028, %v1792
    %v1799 = vor.u32 %v1797, %v1798
    %v1800 = vshll.u32 2131351028, %v1791
    %v1801 = vshrl.u32 2102212464, %v1792
    %v1802 = vor.u32 %v1800, %v1801
    %v1803 = vshll.u32 2102212464, %v1791
    %v1804 = vshrl.u32 920167782, %v1792
    %v1805 = vor.u32 %v1803, %v1804
    %v1806 = vshll.u32 920167782, %v1791
    %v1807 = vshrl.u32 1326507024, %v1792
    %v1808 = vor.u32 %v1806, %v1807
    %vm1809 = vcmp.lt.s32.totalorder %v1790, 1
    %vm1810 = vcmp.lt.s32.totalorder %v1790, 2
    %vm1811 = vcmp.lt.s32.totalorder %v1790, 3
    %vm1812 = vcmp.lt.s32.totalorder %v1790, 4
    %v1813 = vsel %vm1809, %v1793, %v1796
    %v1814 = vsel %vm1812, %v1802, 2102212464
    %v1815 = vsel %vm1811, %v1799, %v1814
    %v1816 = vsel %vm1810, %v1813, %v1815
    %v1817 = vsel %vm1809, %v1796, %v1799
    %v1818 = vsel %vm1812, %v1805, 920167782
    %v1819 = vsel %vm1811, %v1802, %v1818
    %v1820 = vsel %vm1810, %v1817, %v1819
    %v1821 = vsel %vm1809, %v1799, %v1802
    %v1822 = vsel %vm1812, %v1808, 1326507024
    %v1823 = vsel %vm1811, %v1805, %v1822
    %v1824 = vsel %vm1810, %v1821, %v1823
    %v1825 = vshll.u32 %v1785, 8
    %v1826 = vmul.u32.u64.compose %v1825, %v1824
    %v1827 = vextract.low.u32 %v1826
    %v1828 = vextract.high.u32 %v1826
    %v1829 = vmul.u32.u64.compose %v1825, %v1820
    %v1830 = vextract.low.u32 %v1829
    %v1831 = vextract.high.u32 %v1829
    %v1832 = vmul.u32 %v1825, %v1816
    %v1833 = vadd.s32 %v1828, %v1830
    %vm1834 = vc.u32 %v1828, %v1830
    %v1835 = vadd.s32 %v1831, 1
    %v1836 = vsel %vm1834, %v1835, %v1831
    %v1837 = vadd.s32 %v1832, %v1836
    %v1838 = vadd.s32 %v1837, 536870912
    %v1839 = vshrl.u32 %v1838, 30
    %v1840 = vshll.u32 %v1839, 30
    %v1841 = vsub.s32 %v1837, %v1840
    %vm1842 = vcmp.lt.s32.totalorder %v1841, 0
    %v1843 = vsub.s32 0, %v1841
    %v1844 = vsel %vm1842, %v1843, %v1841
    %v1845 = vclz %v1844
    %v1846 = vsub.s32 %v1845, 2
    %vm1847 = vcmp.gt.s32.totalorder 0, %v1846
    %v1848 = vsel %vm1847, 0, %v1846
    %v1849 = vsub.s32 32, %v1848
    %v1850 = vshll.u32 %v1841, %v1848
    %v1851 = vshrl.u32 %v1833, %v1849
    %v1852 = vor.u32 %v1850, %v1851
    %v1853 = vsub.s32 4294967266, %v1848
    %v1854 = vadd.s32 %v1853, 127
    %v1855 = vshll.u32 %v1854, 23
    %v1856 = vor.u32 4788187, %v1855
    %v1857 = vand.u32 2147483647, %v1856
    %v1859 = vcvt.s32.f32 %v1852
    %v1860 = vmul.f32 %v1859, %v1857
    %v1861 = vxor.u32 %v1860, 2147483648
    %v1862 = vsel %vm1779, %v1861, %v1860
    %v1863 = vsub.s32 4, %v1839
    %v1864 = vsel %vm1779, %v1863, %v1839
    %v1865 = vsel %vm1778, %v1657, %v1862
    %v1866 = vsel %vm1778, 0, %v1864
    %v1867 = vcosq.f32.pop %v1865
    %v1868 = vsinq.f32.pop %v1865
    %vm1869 = vweird.f32 %v1657
    %v1870 = vadd.s32 %v1866, 3
    %v1871 = vand.u32 %v1870, 3
    %vm1872 = vcmp.lt.s32.totalorder %v1871, 2
    %vm1873 = vcmp.eq.s32.totalorder %v1871, 0
    %v1874 = vxor.u32 %v1868, 2147483648
    %v1875 = vsel %vm1873, %v1867, %v1874
    %vm1876 = vcmp.eq.s32.totalorder %v1871, 2
    %v1877 = vxor.u32 %v1867, 2147483648
    %v1878 = vsel %vm1876, %v1877, %v1868
    %v1879 = vsel %vm1872, %v1875, %v1878
    %v1880 = vsel %vm1869, nan, %v1879
    %v1881 = vand.u32 2147483647, %v1658
    %vm1882 = vcmp.le.f32.partialorder %v1881, 0.7853982
    %vm1883 = vcmp.lt.s32.totalorder %v1658, 0
    %v1884 = vand.u32 %v1658, 2139095040
    %v1885 = vshrl.u32 %v1884, 23
    %v1886 = vsub.s32 %v1885, 127
    %v1887 = vand.u32 2147483647, %v1658
    %v1888 = vand.u32 %v1887, 8388607
    %v1889 = vor.u32 %v1888, 8388608
    %v1890 = vsub.s32 0, %v1889
    %v1891 = vadd.s32 %v1886, 1
    %vm1892 = vcmp.gt.s32.totalorder %v1891, 0
    %v1893 = vsel %vm1892, %v1891, 0
    %v1894 = vshrl.u32 %v1893, 5
    %v1895 = vand.u32 %v1893, 31
    %v1896 = vsub.s32 32, %v1895
    %v1897 = vshrl.u32 683565275, %v1896
    %v1898 = vshll.u32 683565275, %v1895
    %v1899 = vshrl.u32 2475754826, %v1896
    %v1900 = vor.u32 %v1898, %v1899
    %v1901 = vshll.u32 2475754826, %v1895
    %v1902 = vshrl.u32 2131351028, %v1896
    %v1903 = vor.u32 %v1901, %v1902
    %v1904 = vshll.u32 2131351028, %v1895
    %v1905 = vshrl.u32 2102212464, %v1896
    %v1906 = vor.u32 %v1904, %v1905
    %v1907 = vshll.u32 2102212464, %v1895
    %v1908 = vshrl.u32 920167782, %v1896
    %v1909 = vor.u32 %v1907, %v1908
    %v1910 = vshll.u32 920167782, %v1895
    %v1911 = vshrl.u32 1326507024, %v1896
    %v1912 = vor.u32 %v1910, %v1911
    %vm1913 = vcmp.lt.s32.totalorder %v1894, 1
    %vm1914 = vcmp.lt.s32.totalorder %v1894, 2
    %vm1915 = vcmp.lt.s32.totalorder %v1894, 3
    %vm1916 = vcmp.lt.s32.totalorder %v1894, 4
    %v1917 = vsel %vm1913, %v1897, %v1900
    %v1918 = vsel %vm1916, %v1906, 2102212464
    %v1919 = vsel %vm1915, %v1903, %v1918
    %v1920 = vsel %vm1914, %v1917, %v1919
    %v1921 = vsel %vm1913, %v1900, %v1903
    %v1922 = vsel %vm1916, %v1909, 920167782
    %v1923 = vsel %vm1915, %v1906, %v1922
    %v1924 = vsel %vm1914, %v1921, %v1923
    %v1925 = vsel %vm1913, %v1903, %v1906
    %v1926 = vsel %vm1916, %v1912, 1326507024
    %v1927 = vsel %vm1915, %v1909, %v1926
    %v1928 = vsel %vm1914, %v1925, %v1927
    %v1929 = vshll.u32 %v1889, 8
    %v1930 = vmul.u32.u64.compose %v1929, %v1928
    %v1931 = vextract.low.u32 %v1930
    %v1932 = vextract.high.u32 %v1930
    %v1933 = vmul.u32.u64.compose %v1929, %v1924
    %v1934 = vextract.low.u32 %v1933
    %v1935 = vextract.high.u32 %v1933
    %v1936 = vmul.u32 %v1929, %v1920
    %v1937 = vadd.s32 %v1932, %v1934
    %vm1938 = vc.u32 %v1932, %v1934
    %v1939 = vadd.s32 %v1935, 1
    %v1940 = vsel %vm1938, %v1939, %v1935
    %v1941 = vadd.s32 %v1936, %v1940
    %v1942 = vadd.s32 %v1941, 536870912
    %v1943 = vshrl.u32 %v1942, 30
    %v1944 = vshll.u32 %v1943, 30
    %v1945 = vsub.s32 %v1941, %v1944
    %vm1946 = vcmp.lt.s32.totalorder %v1945, 0
    %v1947 = vsub.s32 0, %v1945
    %v1948 = vsel %vm1946, %v1947, %v1945
    %v1949 = vclz %v1948
    %v1950 = vsub.s32 %v1949, 2
    %vm1951 = vcmp.gt.s32.totalorder 0, %v1950
    %v1952 = vsel %vm1951, 0, %v1950
    %v1953 = vsub.s32 32, %v1952
    %v1954 = vshll.u32 %v1945, %v1952
    %v1955 = vshrl.u32 %v1937, %v1953
    %v1956 = vor.u32 %v1954, %v1955
    %v1957 = vsub.s32 4294967266, %v1952
    %v1958 = vadd.s32 %v1957, 127
    %v1959 = vshll.u32 %v1958, 23
    %v1960 = vor.u32 4788187, %v1959
    %v1961 = vand.u32 2147483647, %v1960
    %v1963 = vcvt.s32.f32 %v1956
    %v1964 = vmul.f32 %v1963, %v1961
    %v1965 = vxor.u32 %v1964, 2147483648
    %v1966 = vsel %vm1883, %v1965, %v1964
    %v1967 = vsub.s32 4, %v1943
    %v1968 = vsel %vm1883, %v1967, %v1943
    %v1969 = vsel %vm1882, %v1658, %v1966
    %v1970 = vsel %vm1882, 0, %v1968
    %v1971 = vcosq.f32.pop %v1969
    %v1972 = vsinq.f32.pop %v1969
    %vm1973 = vweird.f32 %v1658
    %v1974 = vadd.s32 %v1970, 3
    %v1975 = vand.u32 %v1974, 3
    %vm1976 = vcmp.lt.s32.totalorder %v1975, 2
    %vm1977 = vcmp.eq.s32.totalorder %v1975, 0
    %v1978 = vxor.u32 %v1972, 2147483648
    %v1979 = vsel %vm1977, %v1971, %v1978
    %vm1980 = vcmp.eq.s32.totalorder %v1975, 2
    %v1981 = vxor.u32 %v1971, 2147483648
    %v1982 = vsel %vm1980, %v1981, %v1972
    %v1983 = vsel %vm1976, %v1979, %v1982
    %v1984 = vsel %vm1973, nan, %v1983
    %v1985 = vand.u32 2147483647, %v1659
    %vm1986 = vcmp.le.f32.partialorder %v1985, 0.7853982
    %vm1987 = vcmp.lt.s32.totalorder %v1659, 0
    %v1988 = vand.u32 %v1659, 2139095040
    %v1989 = vshrl.u32 %v1988, 23
    %v1990 = vsub.s32 %v1989, 127
    %v1991 = vand.u32 2147483647, %v1659
    %v1992 = vand.u32 %v1991, 8388607
    %v1993 = vor.u32 %v1992, 8388608
    %v1994 = vsub.s32 0, %v1993
    %v1995 = vadd.s32 %v1990, 1
    %vm1996 = vcmp.gt.s32.totalorder %v1995, 0
    %v1997 = vsel %vm1996, %v1995, 0
    %v1998 = vshrl.u32 %v1997, 5
    %v1999 = vand.u32 %v1997, 31
    %v2000 = vsub.s32 32, %v1999
    %v2001 = vshrl.u32 683565275, %v2000
    %v2002 = vshll.u32 683565275, %v1999
    %v2003 = vshrl.u32 2475754826, %v2000
    %v2004 = vor.u32 %v2002, %v2003
    %v2005 = vshll.u32 2475754826, %v1999
    %v2006 = vshrl.u32 2131351028, %v2000
    %v2007 = vor.u32 %v2005, %v2006
    %v2008 = vshll.u32 2131351028, %v1999
    %v2009 = vshrl.u32 2102212464, %v2000
    %v2010 = vor.u32 %v2008, %v2009
    %v2011 = vshll.u32 2102212464, %v1999
    %v2012 = vshrl.u32 920167782, %v2000
    %v2013 = vor.u32 %v2011, %v2012
    %v2014 = vshll.u32 920167782, %v1999
    %v2015 = vshrl.u32 1326507024, %v2000
    %v2016 = vor.u32 %v2014, %v2015
    %vm2017 = vcmp.lt.s32.totalorder %v1998, 1
    %vm2018 = vcmp.lt.s32.totalorder %v1998, 2
    %vm2019 = vcmp.lt.s32.totalorder %v1998, 3
    %vm2020 = vcmp.lt.s32.totalorder %v1998, 4
    %v2021 = vsel %vm2017, %v2001, %v2004
    %v2022 = vsel %vm2020, %v2010, 2102212464
    %v2023 = vsel %vm2019, %v2007, %v2022
    %v2024 = vsel %vm2018, %v2021, %v2023
    %v2025 = vsel %vm2017, %v2004, %v2007
    %v2026 = vsel %vm2020, %v2013, 920167782
    %v2027 = vsel %vm2019, %v2010, %v2026
    %v2028 = vsel %vm2018, %v2025, %v2027
    %v2029 = vsel %vm2017, %v2007, %v2010
    %v2030 = vsel %vm2020, %v2016, 1326507024
    %v2031 = vsel %vm2019, %v2013, %v2030
    %v2032 = vsel %vm2018, %v2029, %v2031
    %v2033 = vshll.u32 %v1993, 8
    %v2034 = vmul.u32.u64.compose %v2033, %v2032
    %v2035 = vextract.low.u32 %v2034
    %v2036 = vextract.high.u32 %v2034
    %v2037 = vmul.u32.u64.compose %v2033, %v2028
    %v2038 = vextract.low.u32 %v2037
    %v2039 = vextract.high.u32 %v2037
    %v2040 = vmul.u32 %v2033, %v2024
    %v2041 = vadd.s32 %v2036, %v2038
    %vm2042 = vc.u32 %v2036, %v2038
    %v2043 = vadd.s32 %v2039, 1
    %v2044 = vsel %vm2042, %v2043, %v2039
    %v2045 = vadd.s32 %v2040, %v2044
    %v2046 = vadd.s32 %v2045, 536870912
    %v2047 = vshrl.u32 %v2046, 30
    %v2048 = vshll.u32 %v2047, 30
    %v2049 = vsub.s32 %v2045, %v2048
    %vm2050 = vcmp.lt.s32.totalorder %v2049, 0
    %v2051 = vsub.s32 0, %v2049
    %v2052 = vsel %vm2050, %v2051, %v2049
    %v2053 = vclz %v2052
    %v2054 = vsub.s32 %v2053, 2
    %vm2055 = vcmp.gt.s32.totalorder 0, %v2054
    %v2056 = vsel %vm2055, 0, %v2054
    %v2057 = vsub.s32 32, %v2056
    %v2058 = vshll.u32 %v2049, %v2056
    %v2059 = vshrl.u32 %v2041, %v2057
    %v2060 = vor.u32 %v2058, %v2059
    %v2061 = vsub.s32 4294967266, %v2056
    %v2062 = vadd.s32 %v2061, 127
    %v2063 = vshll.u32 %v2062, 23
    %v2064 = vor.u32 4788187, %v2063
    %v2065 = vand.u32 2147483647, %v2064
    %v2067 = vcvt.s32.f32 %v2060
    %v2068 = vmul.f32 %v2067, %v2065
    %v2069 = vxor.u32 %v2068, 2147483648
    %v2070 = vsel %vm1987, %v2069, %v2068
    %v2071 = vsub.s32 4, %v2047
    %v2072 = vsel %vm1987, %v2071, %v2047
    %v2073 = vsel %vm1986, %v1659, %v2070
    %v2074 = vsel %vm1986, 0, %v2072
    %v2075 = vcosq.f32.pop %v2073
    %v2076 = vsinq.f32.pop %v2073
    %vm2077 = vweird.f32 %v1659
    %v2078 = vadd.s32 %v2074, 3
    %v2079 = vand.u32 %v2078, 3
    %vm2080 = vcmp.lt.s32.totalorder %v2079, 2
    %vm2081 = vcmp.eq.s32.totalorder %v2079, 0
    %v2082 = vxor.u32 %v2076, 2147483648
    %v2083 = vsel %vm2081, %v2075, %v2082
    %vm2084 = vcmp.eq.s32.totalorder %v2079, 2
    %v2085 = vxor.u32 %v2075, 2147483648
    %v2086 = vsel %vm2084, %v2085, %v2076
    %v2087 = vsel %vm2080, %v2083, %v2086
    %v2088 = vsel %vm2077, nan, %v2087
    %v2089 = vand.u32 2147483647, %v1660
    %vm2090 = vcmp.le.f32.partialorder %v2089, 0.7853982
    %vm2091 = vcmp.lt.s32.totalorder %v1660, 0
    %v2092 = vand.u32 %v1660, 2139095040
    %v2093 = vshrl.u32 %v2092, 23
    %v2094 = vsub.s32 %v2093, 127
    %v2095 = vand.u32 2147483647, %v1660
    %v2096 = vand.u32 %v2095, 8388607
    %v2097 = vor.u32 %v2096, 8388608
    %v2098 = vsub.s32 0, %v2097
    %v2099 = vadd.s32 %v2094, 1
    %vm2100 = vcmp.gt.s32.totalorder %v2099, 0
    %v2101 = vsel %vm2100, %v2099, 0
    %v2102 = vshrl.u32 %v2101, 5
    %v2103 = vand.u32 %v2101, 31
    %v2104 = vsub.s32 32, %v2103
    %v2105 = vshrl.u32 683565275, %v2104
    %v2106 = vshll.u32 683565275, %v2103
    %v2107 = vshrl.u32 2475754826, %v2104
    %v2108 = vor.u32 %v2106, %v2107
    %v2109 = vshll.u32 2475754826, %v2103
    %v2110 = vshrl.u32 2131351028, %v2104
    %v2111 = vor.u32 %v2109, %v2110
    %v2112 = vshll.u32 2131351028, %v2103
    %v2113 = vshrl.u32 2102212464, %v2104
    %v2114 = vor.u32 %v2112, %v2113
    %v2115 = vshll.u32 2102212464, %v2103
    %v2116 = vshrl.u32 920167782, %v2104
    %v2117 = vor.u32 %v2115, %v2116
    %v2118 = vshll.u32 920167782, %v2103
    %v2119 = vshrl.u32 1326507024, %v2104
    %v2120 = vor.u32 %v2118, %v2119
    %vm2121 = vcmp.lt.s32.totalorder %v2102, 1
    %vm2122 = vcmp.lt.s32.totalorder %v2102, 2
    %vm2123 = vcmp.lt.s32.totalorder %v2102, 3
    %vm2124 = vcmp.lt.s32.totalorder %v2102, 4
    %v2125 = vsel %vm2121, %v2105, %v2108
    %v2126 = vsel %vm2124, %v2114, 2102212464
    %v2127 = vsel %vm2123, %v2111, %v2126
    %v2128 = vsel %vm2122, %v2125, %v2127
    %v2129 = vsel %vm2121, %v2108, %v2111
    %v2130 = vsel %vm2124, %v2117, 920167782
    %v2131 = vsel %vm2123, %v2114, %v2130
    %v2132 = vsel %vm2122, %v2129, %v2131
    %v2133 = vsel %vm2121, %v2111, %v2114
    %v2134 = vsel %vm2124, %v2120, 1326507024
    %v2135 = vsel %vm2123, %v2117, %v2134
    %v2136 = vsel %vm2122, %v2133, %v2135
    %v2137 = vshll.u32 %v2097, 8
    %v2138 = vmul.u32.u64.compose %v2137, %v2136
    %v2139 = vextract.low.u32 %v2138
    %v2140 = vextract.high.u32 %v2138
    %v2141 = vmul.u32.u64.compose %v2137, %v2132
    %v2142 = vextract.low.u32 %v2141
    %v2143 = vextract.high.u32 %v2141
    %v2144 = vmul.u32 %v2137, %v2128
    %v2145 = vadd.s32 %v2140, %v2142
    %vm2146 = vc.u32 %v2140, %v2142
    %v2147 = vadd.s32 %v2143, 1
    %v2148 = vsel %vm2146, %v2147, %v2143
    %v2149 = vadd.s32 %v2144, %v2148
    %v2150 = vadd.s32 %v2149, 536870912
    %v2151 = vshrl.u32 %v2150, 30
    %v2152 = vshll.u32 %v2151, 30
    %v2153 = vsub.s32 %v2149, %v2152
    %vm2154 = vcmp.lt.s32.totalorder %v2153, 0
    %v2155 = vsub.s32 0, %v2153
    %v2156 = vsel %vm2154, %v2155, %v2153
    %v2157 = vclz %v2156
    %v2158 = vsub.s32 %v2157, 2
    %vm2159 = vcmp.gt.s32.totalorder 0, %v2158
    %v2160 = vsel %vm2159, 0, %v2158
    %v2161 = vsub.s32 32, %v2160
    %v2162 = vshll.u32 %v2153, %v2160
    %v2163 = vshrl.u32 %v2145, %v2161
    %v2164 = vor.u32 %v2162, %v2163
    %v2165 = vsub.s32 4294967266, %v2160
    %v2166 = vadd.s32 %v2165, 127
    %v2167 = vshll.u32 %v2166, 23
    %v2168 = vor.u32 4788187, %v2167
    %v2169 = vand.u32 2147483647, %v2168
    %v2171 = vcvt.s32.f32 %v2164
    %v2172 = vmul.f32 %v2171, %v2169
    %v2173 = vxor.u32 %v2172, 2147483648
    %v2174 = vsel %vm2091, %v2173, %v2172
    %v2175 = vsub.s32 4, %v2151
    %v2176 = vsel %vm2091, %v2175, %v2151
    %v2177 = vsel %vm2090, %v1660, %v2174
    %v2178 = vsel %vm2090, 0, %v2176
    %v2179 = vcosq.f32.pop %v2177
    %v2180 = vsinq.f32.pop %v2177
    %vm2181 = vweird.f32 %v1660
    %v2182 = vadd.s32 %v2178, 3
    %v2183 = vand.u32 %v2182, 3
    %vm2184 = vcmp.lt.s32.totalorder %v2183, 2
    %vm2185 = vcmp.eq.s32.totalorder %v2183, 0
    %v2186 = vxor.u32 %v2180, 2147483648
    %v2187 = vsel %vm2185, %v2179, %v2186
    %vm2188 = vcmp.eq.s32.totalorder %v2183, 2
    %v2189 = vxor.u32 %v2179, 2147483648
    %v2190 = vsel %vm2188, %v2189, %v2180
    %v2191 = vsel %vm2184, %v2187, %v2190
    %v2192 = vsel %vm2181, nan, %v2191
    %v2193 = vand.u32 2147483647, %v1661
    %vm2194 = vcmp.le.f32.partialorder %v2193, 0.7853982
    %vm2195 = vcmp.lt.s32.totalorder %v1661, 0
    %v2196 = vand.u32 %v1661, 2139095040
    %v2197 = vshrl.u32 %v2196, 23
    %v2198 = vsub.s32 %v2197, 127
    %v2199 = vand.u32 2147483647, %v1661
    %v2200 = vand.u32 %v2199, 8388607
    %v2201 = vor.u32 %v2200, 8388608
    %v2202 = vsub.s32 0, %v2201
    %v2203 = vadd.s32 %v2198, 1
    %vm2204 = vcmp.gt.s32.totalorder %v2203, 0
    %v2205 = vsel %vm2204, %v2203, 0
    %v2206 = vshrl.u32 %v2205, 5
    %v2207 = vand.u32 %v2205, 31
    %v2208 = vsub.s32 32, %v2207
    %v2209 = vshrl.u32 683565275, %v2208
    %v2210 = vshll.u32 683565275, %v2207
    %v2211 = vshrl.u32 2475754826, %v2208
    %v2212 = vor.u32 %v2210, %v2211
    %v2213 = vshll.u32 2475754826, %v2207
    %v2214 = vshrl.u32 2131351028, %v2208
    %v2215 = vor.u32 %v2213, %v2214
    %v2216 = vshll.u32 2131351028, %v2207
    %v2217 = vshrl.u32 2102212464, %v2208
    %v2218 = vor.u32 %v2216, %v2217
    %v2219 = vshll.u32 2102212464, %v2207
    %v2220 = vshrl.u32 920167782, %v2208
    %v2221 = vor.u32 %v2219, %v2220
    %v2222 = vshll.u32 920167782, %v2207
    %v2223 = vshrl.u32 1326507024, %v2208
    %v2224 = vor.u32 %v2222, %v2223
    %vm2225 = vcmp.lt.s32.totalorder %v2206, 1
    %vm2226 = vcmp.lt.s32.totalorder %v2206, 2
    %vm2227 = vcmp.lt.s32.totalorder %v2206, 3
    %vm2228 = vcmp.lt.s32.totalorder %v2206, 4
    %v2229 = vsel %vm2225, %v2209, %v2212
    %v2230 = vsel %vm2228, %v2218, 2102212464
    %v2231 = vsel %vm2227, %v2215, %v2230
    %v2232 = vsel %vm2226, %v2229, %v2231
    %v2233 = vsel %vm2225, %v2212, %v2215
    %v2234 = vsel %vm2228, %v2221, 920167782
    %v2235 = vsel %vm2227, %v2218, %v2234
    %v2236 = vsel %vm2226, %v2233, %v2235
    %v2237 = vsel %vm2225, %v2215, %v2218
    %v2238 = vsel %vm2228, %v2224, 1326507024
    %v2239 = vsel %vm2227, %v2221, %v2238
    %v2240 = vsel %vm2226, %v2237, %v2239
    %v2241 = vshll.u32 %v2201, 8
    %v2242 = vmul.u32.u64.compose %v2241, %v2240
    %v2243 = vextract.low.u32 %v2242
    %v2244 = vextract.high.u32 %v2242
    %v2245 = vmul.u32.u64.compose %v2241, %v2236
    %v2246 = vextract.low.u32 %v2245
    %v2247 = vextract.high.u32 %v2245
    %v2248 = vmul.u32 %v2241, %v2232
    %v2249 = vadd.s32 %v2244, %v2246
    %vm2250 = vc.u32 %v2244, %v2246
    %v2251 = vadd.s32 %v2247, 1
    %v2252 = vsel %vm2250, %v2251, %v2247
    %v2253 = vadd.s32 %v2248, %v2252
    %v2254 = vadd.s32 %v2253, 536870912
    %v2255 = vshrl.u32 %v2254, 30
    %v2256 = vshll.u32 %v2255, 30
    %v2257 = vsub.s32 %v2253, %v2256
    %vm2258 = vcmp.lt.s32.totalorder %v2257, 0
    %v2259 = vsub.s32 0, %v2257
    %v2260 = vsel %vm2258, %v2259, %v2257
    %v2261 = vclz %v2260
    %v2262 = vsub.s32 %v2261, 2
    %vm2263 = vcmp.gt.s32.totalorder 0, %v2262
    %v2264 = vsel %vm2263, 0, %v2262
    %v2265 = vsub.s32 32, %v2264
    %v2266 = vshll.u32 %v2257, %v2264
    %v2267 = vshrl.u32 %v2249, %v2265
    %v2268 = vor.u32 %v2266, %v2267
    %v2269 = vsub.s32 4294967266, %v2264
    %v2270 = vadd.s32 %v2269, 127
    %v2271 = vshll.u32 %v2270, 23
    %v2272 = vor.u32 4788187, %v2271
    %v2273 = vand.u32 2147483647, %v2272
    %v2275 = vcvt.s32.f32 %v2268
    %v2276 = vmul.f32 %v2275, %v2273
    %v2277 = vxor.u32 %v2276, 2147483648
    %v2278 = vsel %vm2195, %v2277, %v2276
    %v2279 = vsub.s32 4, %v2255
    %v2280 = vsel %vm2195, %v2279, %v2255
    %v2281 = vsel %vm2194, %v1661, %v2278
    %v2282 = vsel %vm2194, 0, %v2280
    %v2283 = vcosq.f32.pop %v2281
    %v2284 = vsinq.f32.pop %v2281
    %vm2285 = vweird.f32 %v1661
    %v2286 = vadd.s32 %v2282, 3
    %v2287 = vand.u32 %v2286, 3
    %vm2288 = vcmp.lt.s32.totalorder %v2287, 2
    %vm2289 = vcmp.eq.s32.totalorder %v2287, 0
    %v2290 = vxor.u32 %v2284, 2147483648
    %v2291 = vsel %vm2289, %v2283, %v2290
    %vm2292 = vcmp.eq.s32.totalorder %v2287, 2
    %v2293 = vxor.u32 %v2283, 2147483648
    %v2294 = vsel %vm2292, %v2293, %v2284
    %v2295 = vsel %vm2288, %v2291, %v2294
    %v2296 = vsel %vm2285, nan, %v2295
    %v2297 = vand.u32 2147483647, %v1662
    %vm2298 = vcmp.le.f32.partialorder %v2297, 0.7853982
    %vm2299 = vcmp.lt.s32.totalorder %v1662, 0
    %v2300 = vand.u32 %v1662, 2139095040
    %v2301 = vshrl.u32 %v2300, 23
    %v2302 = vsub.s32 %v2301, 127
    %v2303 = vand.u32 2147483647, %v1662
    %v2304 = vand.u32 %v2303, 8388607
    %v2305 = vor.u32 %v2304, 8388608
    %v2306 = vsub.s32 0, %v2305
    %v2307 = vadd.s32 %v2302, 1
    %vm2308 = vcmp.gt.s32.totalorder %v2307, 0
    %v2309 = vsel %vm2308, %v2307, 0
    %v2310 = vshrl.u32 %v2309, 5
    %v2311 = vand.u32 %v2309, 31
    %v2312 = vsub.s32 32, %v2311
    %v2313 = vshrl.u32 683565275, %v2312
    %v2314 = vshll.u32 683565275, %v2311
    %v2315 = vshrl.u32 2475754826, %v2312
    %v2316 = vor.u32 %v2314, %v2315
    %v2317 = vshll.u32 2475754826, %v2311
    %v2318 = vshrl.u32 2131351028, %v2312
    %v2319 = vor.u32 %v2317, %v2318
    %v2320 = vshll.u32 2131351028, %v2311
    %v2321 = vshrl.u32 2102212464, %v2312
    %v2322 = vor.u32 %v2320, %v2321
    %v2323 = vshll.u32 2102212464, %v2311
    %v2324 = vshrl.u32 920167782, %v2312
    %v2325 = vor.u32 %v2323, %v2324
    %v2326 = vshll.u32 920167782, %v2311
    %v2327 = vshrl.u32 1326507024, %v2312
    %v2328 = vor.u32 %v2326, %v2327
    %vm2329 = vcmp.lt.s32.totalorder %v2310, 1
    %vm2330 = vcmp.lt.s32.totalorder %v2310, 2
    %vm2331 = vcmp.lt.s32.totalorder %v2310, 3
    %vm2332 = vcmp.lt.s32.totalorder %v2310, 4
    %v2333 = vsel %vm2329, %v2313, %v2316
    %v2334 = vsel %vm2332, %v2322, 2102212464
    %v2335 = vsel %vm2331, %v2319, %v2334
    %v2336 = vsel %vm2330, %v2333, %v2335
    %v2337 = vsel %vm2329, %v2316, %v2319
    %v2338 = vsel %vm2332, %v2325, 920167782
    %v2339 = vsel %vm2331, %v2322, %v2338
    %v2340 = vsel %vm2330, %v2337, %v2339
    %v2341 = vsel %vm2329, %v2319, %v2322
    %v2342 = vsel %vm2332, %v2328, 1326507024
    %v2343 = vsel %vm2331, %v2325, %v2342
    %v2344 = vsel %vm2330, %v2341, %v2343
    %v2345 = vshll.u32 %v2305, 8
    %v2346 = vmul.u32.u64.compose %v2345, %v2344
    %v2347 = vextract.low.u32 %v2346
    %v2348 = vextract.high.u32 %v2346
    %v2349 = vmul.u32.u64.compose %v2345, %v2340
    %v2350 = vextract.low.u32 %v2349
    %v2351 = vextract.high.u32 %v2349
    %v2352 = vmul.u32 %v2345, %v2336
    %v2353 = vadd.s32 %v2348, %v2350
    %vm2354 = vc.u32 %v2348, %v2350
    %v2355 = vadd.s32 %v2351, 1
    %v2356 = vsel %vm2354, %v2355, %v2351
    %v2357 = vadd.s32 %v2352, %v2356
    %v2358 = vadd.s32 %v2357, 536870912
    %v2359 = vshrl.u32 %v2358, 30
    %v2360 = vshll.u32 %v2359, 30
    %v2361 = vsub.s32 %v2357, %v2360
    %vm2362 = vcmp.lt.s32.totalorder %v2361, 0
    %v2363 = vsub.s32 0, %v2361
    %v2364 = vsel %vm2362, %v2363, %v2361
    %v2365 = vclz %v2364
    %v2366 = vsub.s32 %v2365, 2
    %vm2367 = vcmp.gt.s32.totalorder 0, %v2366
    %v2368 = vsel %vm2367, 0, %v2366
    %v2369 = vsub.s32 32, %v2368
    %v2370 = vshll.u32 %v2361, %v2368
    %v2371 = vshrl.u32 %v2353, %v2369
    %v2372 = vor.u32 %v2370, %v2371
    %v2373 = vsub.s32 4294967266, %v2368
    %v2374 = vadd.s32 %v2373, 127
    %v2375 = vshll.u32 %v2374, 23
    %v2376 = vor.u32 4788187, %v2375
    %v2377 = vand.u32 2147483647, %v2376
    %v2379 = vcvt.s32.f32 %v2372
    %v2380 = vmul.f32 %v2379, %v2377
    %v2381 = vxor.u32 %v2380, 2147483648
    %v2382 = vsel %vm2299, %v2381, %v2380
    %v2383 = vsub.s32 4, %v2359
    %v2384 = vsel %vm2299, %v2383, %v2359
    %v2385 = vsel %vm2298, %v1662, %v2382
    %v2386 = vsel %vm2298, 0, %v2384
    %v2387 = vcosq.f32.pop %v2385
    %v2388 = vsinq.f32.pop %v2385
    %vm2389 = vweird.f32 %v1662
    %v2390 = vadd.s32 %v2386, 3
    %v2391 = vand.u32 %v2390, 3
    %vm2392 = vcmp.lt.s32.totalorder %v2391, 2
    %vm2393 = vcmp.eq.s32.totalorder %v2391, 0
    %v2394 = vxor.u32 %v2388, 2147483648
    %v2395 = vsel %vm2393, %v2387, %v2394
    %vm2396 = vcmp.eq.s32.totalorder %v2391, 2
    %v2397 = vxor.u32 %v2387, 2147483648
    %v2398 = vsel %vm2396, %v2397, %v2388
    %v2399 = vsel %vm2392, %v2395, %v2398
    %v2400 = vsel %vm2389, nan, %v2399
    %v2401 = vand.u32 2147483647, %v1663
    %vm2402 = vcmp.le.f32.partialorder %v2401, 0.7853982
    %vm2403 = vcmp.lt.s32.totalorder %v1663, 0
    %v2404 = vand.u32 %v1663, 2139095040
    %v2405 = vshrl.u32 %v2404, 23
    %v2406 = vsub.s32 %v2405, 127
    %v2407 = vand.u32 2147483647, %v1663
    %v2408 = vand.u32 %v2407, 8388607
    %v2409 = vor.u32 %v2408, 8388608
    %v2410 = vsub.s32 0, %v2409
    %v2411 = vadd.s32 %v2406, 1
    %vm2412 = vcmp.gt.s32.totalorder %v2411, 0
    %v2413 = vsel %vm2412, %v2411, 0
    %v2414 = vshrl.u32 %v2413, 5
    %v2415 = vand.u32 %v2413, 31
    %v2416 = vsub.s32 32, %v2415
    %v2417 = vshrl.u32 683565275, %v2416
    %v2418 = vshll.u32 683565275, %v2415
    %v2419 = vshrl.u32 2475754826, %v2416
    %v2420 = vor.u32 %v2418, %v2419
    %v2421 = vshll.u32 2475754826, %v2415
    %v2422 = vshrl.u32 2131351028, %v2416
    %v2423 = vor.u32 %v2421, %v2422
    %v2424 = vshll.u32 2131351028, %v2415
    %v2425 = vshrl.u32 2102212464, %v2416
    %v2426 = vor.u32 %v2424, %v2425
    %v2427 = vshll.u32 2102212464, %v2415
    %v2428 = vshrl.u32 920167782, %v2416
    %v2429 = vor.u32 %v2427, %v2428
    %v2430 = vshll.u32 920167782, %v2415
    %v2431 = vshrl.u32 1326507024, %v2416
    %v2432 = vor.u32 %v2430, %v2431
    %vm2433 = vcmp.lt.s32.totalorder %v2414, 1
    %vm2434 = vcmp.lt.s32.totalorder %v2414, 2
    %vm2435 = vcmp.lt.s32.totalorder %v2414, 3
    %vm2436 = vcmp.lt.s32.totalorder %v2414, 4
    %v2437 = vsel %vm2433, %v2417, %v2420
    %v2438 = vsel %vm2436, %v2426, 2102212464
    %v2439 = vsel %vm2435, %v2423, %v2438
    %v2440 = vsel %vm2434, %v2437, %v2439
    %v2441 = vsel %vm2433, %v2420, %v2423
    %v2442 = vsel %vm2436, %v2429, 920167782
    %v2443 = vsel %vm2435, %v2426, %v2442
    %v2444 = vsel %vm2434, %v2441, %v2443
    %v2445 = vsel %vm2433, %v2423, %v2426
    %v2446 = vsel %vm2436, %v2432, 1326507024
    %v2447 = vsel %vm2435, %v2429, %v2446
    %v2448 = vsel %vm2434, %v2445, %v2447
    %v2449 = vshll.u32 %v2409, 8
    %v2450 = vmul.u32.u64.compose %v2449, %v2448
    %v2451 = vextract.low.u32 %v2450
    %v2452 = vextract.high.u32 %v2450
    %v2453 = vmul.u32.u64.compose %v2449, %v2444
    %v2454 = vextract.low.u32 %v2453
    %v2455 = vextract.high.u32 %v2453
    %v2456 = vmul.u32 %v2449, %v2440
    %v2457 = vadd.s32 %v2452, %v2454
    %vm2458 = vc.u32 %v2452, %v2454
    %v2459 = vadd.s32 %v2455, 1
    %v2460 = vsel %vm2458, %v2459, %v2455
    %v2461 = vadd.s32 %v2456, %v2460
    %v2462 = vadd.s32 %v2461, 536870912
    %v2463 = vshrl.u32 %v2462, 30
    %v2464 = vshll.u32 %v2463, 30
    %v2465 = vsub.s32 %v2461, %v2464
    %vm2466 = vcmp.lt.s32.totalorder %v2465, 0
    %v2467 = vsub.s32 0, %v2465
    %v2468 = vsel %vm2466, %v2467, %v2465
    %v2469 = vclz %v2468
    %v2470 = vsub.s32 %v2469, 2
    %vm2471 = vcmp.gt.s32.totalorder 0, %v2470
    %v2472 = vsel %vm2471, 0, %v2470
    %v2473 = vsub.s32 32, %v2472
    %v2474 = vshll.u32 %v2465, %v2472
    %v2475 = vshrl.u32 %v2457, %v2473
    %v2476 = vor.u32 %v2474, %v2475
    %v2477 = vsub.s32 4294967266, %v2472
    %v2478 = vadd.s32 %v2477, 127
    %v2479 = vshll.u32 %v2478, 23
    %v2480 = vor.u32 4788187, %v2479
    %v2481 = vand.u32 2147483647, %v2480
    %v2483 = vcvt.s32.f32 %v2476
    %v2484 = vmul.f32 %v2483, %v2481
    %v2485 = vxor.u32 %v2484, 2147483648
    %v2486 = vsel %vm2403, %v2485, %v2484
    %v2487 = vsub.s32 4, %v2463
    %v2488 = vsel %vm2403, %v2487, %v2463
    %v2489 = vsel %vm2402, %v1663, %v2486
    %v2490 = vsel %vm2402, 0, %v2488
    %v2491 = vcosq.f32.pop %v2489
    %v2492 = vsinq.f32.pop %v2489
    %vm2493 = vweird.f32 %v1663
    %v2494 = vadd.s32 %v2490, 3
    %v2495 = vand.u32 %v2494, 3
    %vm2496 = vcmp.lt.s32.totalorder %v2495, 2
    %vm2497 = vcmp.eq.s32.totalorder %v2495, 0
    %v2498 = vxor.u32 %v2492, 2147483648
    %v2499 = vsel %vm2497, %v2491, %v2498
    %vm2500 = vcmp.eq.s32.totalorder %v2495, 2
    %v2501 = vxor.u32 %v2491, 2147483648
    %v2502 = vsel %vm2500, %v2501, %v2492
    %v2503 = vsel %vm2496, %v2499, %v2502
    %v2504 = vsel %vm2493, nan, %v2503
    %v2505 = vand.u32 2147483647, %v1664
    %vm2506 = vcmp.le.f32.partialorder %v2505, 0.7853982
    %vm2507 = vcmp.lt.s32.totalorder %v1664, 0
    %v2508 = vand.u32 %v1664, 2139095040
    %v2509 = vshrl.u32 %v2508, 23
    %v2510 = vsub.s32 %v2509, 127
    %v2511 = vand.u32 2147483647, %v1664
    %v2512 = vand.u32 %v2511, 8388607
    %v2513 = vor.u32 %v2512, 8388608
    %v2514 = vsub.s32 0, %v2513
    %v2515 = vadd.s32 %v2510, 1
    %vm2516 = vcmp.gt.s32.totalorder %v2515, 0
    %v2517 = vsel %vm2516, %v2515, 0
    %v2518 = vshrl.u32 %v2517, 5
    %v2519 = vand.u32 %v2517, 31
    %v2520 = vsub.s32 32, %v2519
    %v2521 = vshrl.u32 683565275, %v2520
    %v2522 = vshll.u32 683565275, %v2519
    %v2523 = vshrl.u32 2475754826, %v2520
    %v2524 = vor.u32 %v2522, %v2523
    %v2525 = vshll.u32 2475754826, %v2519
    %v2526 = vshrl.u32 2131351028, %v2520
    %v2527 = vor.u32 %v2525, %v2526
    %v2528 = vshll.u32 2131351028, %v2519
    %v2529 = vshrl.u32 2102212464, %v2520
    %v2530 = vor.u32 %v2528, %v2529
    %v2531 = vshll.u32 2102212464, %v2519
    %v2532 = vshrl.u32 920167782, %v2520
    %v2533 = vor.u32 %v2531, %v2532
    %v2534 = vshll.u32 920167782, %v2519
    %v2535 = vshrl.u32 1326507024, %v2520
    %v2536 = vor.u32 %v2534, %v2535
    %vm2537 = vcmp.lt.s32.totalorder %v2518, 1
    %vm2538 = vcmp.lt.s32.totalorder %v2518, 2
    %vm2539 = vcmp.lt.s32.totalorder %v2518, 3
    %vm2540 = vcmp.lt.s32.totalorder %v2518, 4
    %v2541 = vsel %vm2537, %v2521, %v2524
    %v2542 = vsel %vm2540, %v2530, 2102212464
    %v2543 = vsel %vm2539, %v2527, %v2542
    %v2544 = vsel %vm2538, %v2541, %v2543
    %v2545 = vsel %vm2537, %v2524, %v2527
    %v2546 = vsel %vm2540, %v2533, 920167782
    %v2547 = vsel %vm2539, %v2530, %v2546
    %v2548 = vsel %vm2538, %v2545, %v2547
    %v2549 = vsel %vm2537, %v2527, %v2530
    %v2550 = vsel %vm2540, %v2536, 1326507024
    %v2551 = vsel %vm2539, %v2533, %v2550
    %v2552 = vsel %vm2538, %v2549, %v2551
    %v2553 = vshll.u32 %v2513, 8
    %v2554 = vmul.u32.u64.compose %v2553, %v2552
    %v2555 = vextract.low.u32 %v2554
    %v2556 = vextract.high.u32 %v2554
    %v2557 = vmul.u32.u64.compose %v2553, %v2548
    %v2558 = vextract.low.u32 %v2557
    %v2559 = vextract.high.u32 %v2557
    %v2560 = vmul.u32 %v2553, %v2544
    %v2561 = vadd.s32 %v2556, %v2558
    %vm2562 = vc.u32 %v2556, %v2558
    %v2563 = vadd.s32 %v2559, 1
    %v2564 = vsel %vm2562, %v2563, %v2559
    %v2565 = vadd.s32 %v2560, %v2564
    %v2566 = vadd.s32 %v2565, 536870912
    %v2567 = vshrl.u32 %v2566, 30
    %v2568 = vshll.u32 %v2567, 30
    %v2569 = vsub.s32 %v2565, %v2568
    %vm2570 = vcmp.lt.s32.totalorder %v2569, 0
    %v2571 = vsub.s32 0, %v2569
    %v2572 = vsel %vm2570, %v2571, %v2569
    %v2573 = vclz %v2572
    %v2574 = vsub.s32 %v2573, 2
    %vm2575 = vcmp.gt.s32.totalorder 0, %v2574
    %v2576 = vsel %vm2575, 0, %v2574
    %v2577 = vsub.s32 32, %v2576
    %v2578 = vshll.u32 %v2569, %v2576
    %v2579 = vshrl.u32 %v2561, %v2577
    %v2580 = vor.u32 %v2578, %v2579
    %v2581 = vsub.s32 4294967266, %v2576
    %v2582 = vadd.s32 %v2581, 127
    %v2583 = vshll.u32 %v2582, 23
    %v2584 = vor.u32 4788187, %v2583
    %v2585 = vand.u32 2147483647, %v2584
    %v2587 = vcvt.s32.f32 %v2580
    %v2588 = vmul.f32 %v2587, %v2585
    %v2589 = vxor.u32 %v2588, 2147483648
    %v2590 = vsel %vm2507, %v2589, %v2588
    %v2591 = vsub.s32 4, %v2567
    %v2592 = vsel %vm2507, %v2591, %v2567
    %v2593 = vsel %vm2506, %v1664, %v2590
    %v2594 = vsel %vm2506, 0, %v2592
    %v2595 = vcosq.f32.pop %v2593
    %v2596 = vsinq.f32.pop %v2593
    %vm2597 = vweird.f32 %v1664
    %v2598 = vadd.s32 %v2594, 3
    %v2599 = vand.u32 %v2598, 3
    %vm2600 = vcmp.lt.s32.totalorder %v2599, 2
    %vm2601 = vcmp.eq.s32.totalorder %v2599, 0
    %v2602 = vxor.u32 %v2596, 2147483648
    %v2603 = vsel %vm2601, %v2595, %v2602
    %vm2604 = vcmp.eq.s32.totalorder %v2599, 2
    %v2605 = vxor.u32 %v2595, 2147483648
    %v2606 = vsel %vm2604, %v2605, %v2596
    %v2607 = vsel %vm2600, %v2603, %v2606
    %v2608 = vsel %vm2597, nan, %v2607
    %v2609 = vand.u32 2147483647, %v1665
    %vm2610 = vcmp.le.f32.partialorder %v2609, 0.7853982
    %vm2611 = vcmp.lt.s32.totalorder %v1665, 0
    %v2612 = vand.u32 %v1665, 2139095040
    %v2613 = vshrl.u32 %v2612, 23
    %v2614 = vsub.s32 %v2613, 127
    %v2615 = vand.u32 2147483647, %v1665
    %v2616 = vand.u32 %v2615, 8388607
    %v2617 = vor.u32 %v2616, 8388608
    %v2618 = vsub.s32 0, %v2617
    %v2619 = vadd.s32 %v2614, 1
    %vm2620 = vcmp.gt.s32.totalorder %v2619, 0
    %v2621 = vsel %vm2620, %v2619, 0
    %v2622 = vshrl.u32 %v2621, 5
    %v2623 = vand.u32 %v2621, 31
    %v2624 = vsub.s32 32, %v2623
    %v2625 = vshrl.u32 683565275, %v2624
    %v2626 = vshll.u32 683565275, %v2623
    %v2627 = vshrl.u32 2475754826, %v2624
    %v2628 = vor.u32 %v2626, %v2627
    %v2629 = vshll.u32 2475754826, %v2623
    %v2630 = vshrl.u32 2131351028, %v2624
    %v2631 = vor.u32 %v2629, %v2630
    %v2632 = vshll.u32 2131351028, %v2623
    %v2633 = vshrl.u32 2102212464, %v2624
    %v2634 = vor.u32 %v2632, %v2633
    %v2635 = vshll.u32 2102212464, %v2623
    %v2636 = vshrl.u32 920167782, %v2624
    %v2637 = vor.u32 %v2635, %v2636
    %v2638 = vshll.u32 920167782, %v2623
    %v2639 = vshrl.u32 1326507024, %v2624
    %v2640 = vor.u32 %v2638, %v2639
    %vm2641 = vcmp.lt.s32.totalorder %v2622, 1
    %vm2642 = vcmp.lt.s32.totalorder %v2622, 2
    %vm2643 = vcmp.lt.s32.totalorder %v2622, 3
    %vm2644 = vcmp.lt.s32.totalorder %v2622, 4
    %v2645 = vsel %vm2641, %v2625, %v2628
    %v2646 = vsel %vm2644, %v2634, 2102212464
    %v2647 = vsel %vm2643, %v2631, %v2646
    %v2648 = vsel %vm2642, %v2645, %v2647
    %v2649 = vsel %vm2641, %v2628, %v2631
    %v2650 = vsel %vm2644, %v2637, 920167782
    %v2651 = vsel %vm2643, %v2634, %v2650
    %v2652 = vsel %vm2642, %v2649, %v2651
    %v2653 = vsel %vm2641, %v2631, %v2634
    %v2654 = vsel %vm2644, %v2640, 1326507024
    %v2655 = vsel %vm2643, %v2637, %v2654
    %v2656 = vsel %vm2642, %v2653, %v2655
    %v2657 = vshll.u32 %v2617, 8
    %v2658 = vmul.u32.u64.compose %v2657, %v2656
    %v2659 = vextract.low.u32 %v2658
    %v2660 = vextract.high.u32 %v2658
    %v2661 = vmul.u32.u64.compose %v2657, %v2652
    %v2662 = vextract.low.u32 %v2661
    %v2663 = vextract.high.u32 %v2661
    %v2664 = vmul.u32 %v2657, %v2648
    %v2665 = vadd.s32 %v2660, %v2662
    %vm2666 = vc.u32 %v2660, %v2662
    %v2667 = vadd.s32 %v2663, 1
    %v2668 = vsel %vm2666, %v2667, %v2663
    %v2669 = vadd.s32 %v2664, %v2668
    %v2670 = vadd.s32 %v2669, 536870912
    %v2671 = vshrl.u32 %v2670, 30
    %v2672 = vshll.u32 %v2671, 30
    %v2673 = vsub.s32 %v2669, %v2672
    %vm2674 = vcmp.lt.s32.totalorder %v2673, 0
    %v2675 = vsub.s32 0, %v2673
    %v2676 = vsel %vm2674, %v2675, %v2673
    %v2677 = vclz %v2676
    %v2678 = vsub.s32 %v2677, 2
    %vm2679 = vcmp.gt.s32.totalorder 0, %v2678
    %v2680 = vsel %vm2679, 0, %v2678
    %v2681 = vsub.s32 32, %v2680
    %v2682 = vshll.u32 %v2673, %v2680
    %v2683 = vshrl.u32 %v2665, %v2681
    %v2684 = vor.u32 %v2682, %v2683
    %v2685 = vsub.s32 4294967266, %v2680
    %v2686 = vadd.s32 %v2685, 127
    %v2687 = vshll.u32 %v2686, 23
    %v2688 = vor.u32 4788187, %v2687
    %v2689 = vand.u32 2147483647, %v2688
    %v2691 = vcvt.s32.f32 %v2684
    %v2692 = vmul.f32 %v2691, %v2689
    %v2693 = vxor.u32 %v2692, 2147483648
    %v2694 = vsel %vm2611, %v2693, %v2692
    %v2695 = vsub.s32 4, %v2671
    %v2696 = vsel %vm2611, %v2695, %v2671
    %v2697 = vsel %vm2610, %v1665, %v2694
    %v2698 = vsel %vm2610, 0, %v2696
    %v2699 = vcosq.f32.pop %v2697
    %v2700 = vsinq.f32.pop %v2697
    %vm2701 = vweird.f32 %v1665
    %v2702 = vadd.s32 %v2698, 3
    %v2703 = vand.u32 %v2702, 3
    %vm2704 = vcmp.lt.s32.totalorder %v2703, 2
    %vm2705 = vcmp.eq.s32.totalorder %v2703, 0
    %v2706 = vxor.u32 %v2700, 2147483648
    %v2707 = vsel %vm2705, %v2699, %v2706
    %vm2708 = vcmp.eq.s32.totalorder %v2703, 2
    %v2709 = vxor.u32 %v2699, 2147483648
    %v2710 = vsel %vm2708, %v2709, %v2700
    %v2711 = vsel %vm2704, %v2707, %v2710
    %v2712 = vsel %vm2701, nan, %v2711
    %v2713 = vand.u32 2147483647, %v1666
    %vm2714 = vcmp.le.f32.partialorder %v2713, 0.7853982
    %vm2715 = vcmp.lt.s32.totalorder %v1666, 0
    %v2716 = vand.u32 %v1666, 2139095040
    %v2717 = vshrl.u32 %v2716, 23
    %v2718 = vsub.s32 %v2717, 127
    %v2719 = vand.u32 2147483647, %v1666
    %v2720 = vand.u32 %v2719, 8388607
    %v2721 = vor.u32 %v2720, 8388608
    %v2722 = vsub.s32 0, %v2721
    %v2723 = vadd.s32 %v2718, 1
    %vm2724 = vcmp.gt.s32.totalorder %v2723, 0
    %v2725 = vsel %vm2724, %v2723, 0
    %v2726 = vshrl.u32 %v2725, 5
    %v2727 = vand.u32 %v2725, 31
    %v2728 = vsub.s32 32, %v2727
    %v2729 = vshrl.u32 683565275, %v2728
    %v2730 = vshll.u32 683565275, %v2727
    %v2731 = vshrl.u32 2475754826, %v2728
    %v2732 = vor.u32 %v2730, %v2731
    %v2733 = vshll.u32 2475754826, %v2727
    %v2734 = vshrl.u32 2131351028, %v2728
    %v2735 = vor.u32 %v2733, %v2734
    %v2736 = vshll.u32 2131351028, %v2727
    %v2737 = vshrl.u32 2102212464, %v2728
    %v2738 = vor.u32 %v2736, %v2737
    %v2739 = vshll.u32 2102212464, %v2727
    %v2740 = vshrl.u32 920167782, %v2728
    %v2741 = vor.u32 %v2739, %v2740
    %v2742 = vshll.u32 920167782, %v2727
    %v2743 = vshrl.u32 1326507024, %v2728
    %v2744 = vor.u32 %v2742, %v2743
    %vm2745 = vcmp.lt.s32.totalorder %v2726, 1
    %vm2746 = vcmp.lt.s32.totalorder %v2726, 2
    %vm2747 = vcmp.lt.s32.totalorder %v2726, 3
    %vm2748 = vcmp.lt.s32.totalorder %v2726, 4
    %v2749 = vsel %vm2745, %v2729, %v2732
    %v2750 = vsel %vm2748, %v2738, 2102212464
    %v2751 = vsel %vm2747, %v2735, %v2750
    %v2752 = vsel %vm2746, %v2749, %v2751
    %v2753 = vsel %vm2745, %v2732, %v2735
    %v2754 = vsel %vm2748, %v2741, 920167782
    %v2755 = vsel %vm2747, %v2738, %v2754
    %v2756 = vsel %vm2746, %v2753, %v2755
    %v2757 = vsel %vm2745, %v2735, %v2738
    %v2758 = vsel %vm2748, %v2744, 1326507024
    %v2759 = vsel %vm2747, %v2741, %v2758
    %v2760 = vsel %vm2746, %v2757, %v2759
    %v2761 = vshll.u32 %v2721, 8
    %v2762 = vmul.u32.u64.compose %v2761, %v2760
    %v2763 = vextract.low.u32 %v2762
    %v2764 = vextract.high.u32 %v2762
    %v2765 = vmul.u32.u64.compose %v2761, %v2756
    %v2766 = vextract.low.u32 %v2765
    %v2767 = vextract.high.u32 %v2765
    %v2768 = vmul.u32 %v2761, %v2752
    %v2769 = vadd.s32 %v2764, %v2766
    %vm2770 = vc.u32 %v2764, %v2766
    %v2771 = vadd.s32 %v2767, 1
    %v2772 = vsel %vm2770, %v2771, %v2767
    %v2773 = vadd.s32 %v2768, %v2772
    %v2774 = vadd.s32 %v2773, 536870912
    %v2775 = vshrl.u32 %v2774, 30
    %v2776 = vshll.u32 %v2775, 30
    %v2777 = vsub.s32 %v2773, %v2776
    %vm2778 = vcmp.lt.s32.totalorder %v2777, 0
    %v2779 = vsub.s32 0, %v2777
    %v2780 = vsel %vm2778, %v2779, %v2777
    %v2781 = vclz %v2780
    %v2782 = vsub.s32 %v2781, 2
    %vm2783 = vcmp.gt.s32.totalorder 0, %v2782
    %v2784 = vsel %vm2783, 0, %v2782
    %v2785 = vsub.s32 32, %v2784
    %v2786 = vshll.u32 %v2777, %v2784
    %v2787 = vshrl.u32 %v2769, %v2785
    %v2788 = vor.u32 %v2786, %v2787
    %v2789 = vsub.s32 4294967266, %v2784
    %v2790 = vadd.s32 %v2789, 127
    %v2791 = vshll.u32 %v2790, 23
    %v2792 = vor.u32 4788187, %v2791
    %v2793 = vand.u32 2147483647, %v2792
    %v2795 = vcvt.s32.f32 %v2788
    %v2796 = vmul.f32 %v2795, %v2793
    %v2797 = vxor.u32 %v2796, 2147483648
    %v2798 = vsel %vm2715, %v2797, %v2796
    %v2799 = vsub.s32 4, %v2775
    %v2800 = vsel %vm2715, %v2799, %v2775
    %v2801 = vsel %vm2714, %v1666, %v2798
    %v2802 = vsel %vm2714, 0, %v2800
    %v2803 = vcosq.f32.pop %v2801
    %v2804 = vsinq.f32.pop %v2801
    %vm2805 = vweird.f32 %v1666
    %v2806 = vadd.s32 %v2802, 3
    %v2807 = vand.u32 %v2806, 3
    %vm2808 = vcmp.lt.s32.totalorder %v2807, 2
    %vm2809 = vcmp.eq.s32.totalorder %v2807, 0
    %v2810 = vxor.u32 %v2804, 2147483648
    %v2811 = vsel %vm2809, %v2803, %v2810
    %vm2812 = vcmp.eq.s32.totalorder %v2807, 2
    %v2813 = vxor.u32 %v2803, 2147483648
    %v2814 = vsel %vm2812, %v2813, %v2804
    %v2815 = vsel %vm2808, %v2811, %v2814
    %v2816 = vsel %vm2805, nan, %v2815
    %v2817 = vand.u32 2147483647, %v1667
    %vm2818 = vcmp.le.f32.partialorder %v2817, 0.7853982
    %vm2819 = vcmp.lt.s32.totalorder %v1667, 0
    %v2820 = vand.u32 %v1667, 2139095040
    %v2821 = vshrl.u32 %v2820, 23
    %v2822 = vsub.s32 %v2821, 127
    %v2823 = vand.u32 2147483647, %v1667
    %v2824 = vand.u32 %v2823, 8388607
    %v2825 = vor.u32 %v2824, 8388608
    %v2826 = vsub.s32 0, %v2825
    %v2827 = vadd.s32 %v2822, 1
    %vm2828 = vcmp.gt.s32.totalorder %v2827, 0
    %v2829 = vsel %vm2828, %v2827, 0
    %v2830 = vshrl.u32 %v2829, 5
    %v2831 = vand.u32 %v2829, 31
    %v2832 = vsub.s32 32, %v2831
    %v2833 = vshrl.u32 683565275, %v2832
    %v2834 = vshll.u32 683565275, %v2831
    %v2835 = vshrl.u32 2475754826, %v2832
    %v2836 = vor.u32 %v2834, %v2835
    %v2837 = vshll.u32 2475754826, %v2831
    %v2838 = vshrl.u32 2131351028, %v2832
    %v2839 = vor.u32 %v2837, %v2838
    %v2840 = vshll.u32 2131351028, %v2831
    %v2841 = vshrl.u32 2102212464, %v2832
    %v2842 = vor.u32 %v2840, %v2841
    %v2843 = vshll.u32 2102212464, %v2831
    %v2844 = vshrl.u32 920167782, %v2832
    %v2845 = vor.u32 %v2843, %v2844
    %v2846 = vshll.u32 920167782, %v2831
    %v2847 = vshrl.u32 1326507024, %v2832
    %v2848 = vor.u32 %v2846, %v2847
    %vm2849 = vcmp.lt.s32.totalorder %v2830, 1
    %vm2850 = vcmp.lt.s32.totalorder %v2830, 2
    %vm2851 = vcmp.lt.s32.totalorder %v2830, 3
    %vm2852 = vcmp.lt.s32.totalorder %v2830, 4
    %v2853 = vsel %vm2849, %v2833, %v2836
    %v2854 = vsel %vm2852, %v2842, 2102212464
    %v2855 = vsel %vm2851, %v2839, %v2854
    %v2856 = vsel %vm2850, %v2853, %v2855
    %v2857 = vsel %vm2849, %v2836, %v2839
    %v2858 = vsel %vm2852, %v2845, 920167782
    %v2859 = vsel %vm2851, %v2842, %v2858
    %v2860 = vsel %vm2850, %v2857, %v2859
    %v2861 = vsel %vm2849, %v2839, %v2842
    %v2862 = vsel %vm2852, %v2848, 1326507024
    %v2863 = vsel %vm2851, %v2845, %v2862
    %v2864 = vsel %vm2850, %v2861, %v2863
    %v2865 = vshll.u32 %v2825, 8
    %v2866 = vmul.u32.u64.compose %v2865, %v2864
    %v2867 = vextract.low.u32 %v2866
    %v2868 = vextract.high.u32 %v2866
    %v2869 = vmul.u32.u64.compose %v2865, %v2860
    %v2870 = vextract.low.u32 %v2869
    %v2871 = vextract.high.u32 %v2869
    %v2872 = vmul.u32 %v2865, %v2856
    %v2873 = vadd.s32 %v2868, %v2870
    %vm2874 = vc.u32 %v2868, %v2870
    %v2875 = vadd.s32 %v2871, 1
    %v2876 = vsel %vm2874, %v2875, %v2871
    %v2877 = vadd.s32 %v2872, %v2876
    %v2878 = vadd.s32 %v2877, 536870912
    %v2879 = vshrl.u32 %v2878, 30
    %v2880 = vshll.u32 %v2879, 30
    %v2881 = vsub.s32 %v2877, %v2880
    %vm2882 = vcmp.lt.s32.totalorder %v2881, 0
    %v2883 = vsub.s32 0, %v2881
    %v2884 = vsel %vm2882, %v2883, %v2881
    %v2885 = vclz %v2884
    %v2886 = vsub.s32 %v2885, 2
    %vm2887 = vcmp.gt.s32.totalorder 0, %v2886
    %v2888 = vsel %vm2887, 0, %v2886
    %v2889 = vsub.s32 32, %v2888
    %v2890 = vshll.u32 %v2881, %v2888
    %v2891 = vshrl.u32 %v2873, %v2889
    %v2892 = vor.u32 %v2890, %v2891
    %v2893 = vsub.s32 4294967266, %v2888
    %v2894 = vadd.s32 %v2893, 127
    %v2895 = vshll.u32 %v2894, 23
    %v2896 = vor.u32 4788187, %v2895
    %v2897 = vand.u32 2147483647, %v2896
    %v2899 = vcvt.s32.f32 %v2892
    %v2900 = vmul.f32 %v2899, %v2897
    %v2901 = vxor.u32 %v2900, 2147483648
    %v2902 = vsel %vm2819, %v2901, %v2900
    %v2903 = vsub.s32 4, %v2879
    %v2904 = vsel %vm2819, %v2903, %v2879
    %v2905 = vsel %vm2818, %v1667, %v2902
    %v2906 = vsel %vm2818, 0, %v2904
    %v2907 = vcosq.f32.pop %v2905
    %v2908 = vsinq.f32.pop %v2905
    %vm2909 = vweird.f32 %v1667
    %v2910 = vadd.s32 %v2906, 3
    %v2911 = vand.u32 %v2910, 3
    %vm2912 = vcmp.lt.s32.totalorder %v2911, 2
    %vm2913 = vcmp.eq.s32.totalorder %v2911, 0
    %v2914 = vxor.u32 %v2908, 2147483648
    %v2915 = vsel %vm2913, %v2907, %v2914
    %vm2916 = vcmp.eq.s32.totalorder %v2911, 2
    %v2917 = vxor.u32 %v2907, 2147483648
    %v2918 = vsel %vm2916, %v2917, %v2908
    %v2919 = vsel %vm2912, %v2915, %v2918
    %v2920 = vsel %vm2909, nan, %v2919
    %v2921 = vand.u32 2147483647, %v1668
    %vm2922 = vcmp.le.f32.partialorder %v2921, 0.7853982
    %vm2923 = vcmp.lt.s32.totalorder %v1668, 0
    %v2924 = vand.u32 %v1668, 2139095040
    %v2925 = vshrl.u32 %v2924, 23
    %v2926 = vsub.s32 %v2925, 127
    %v2927 = vand.u32 2147483647, %v1668
    %v2928 = vand.u32 %v2927, 8388607
    %v2929 = vor.u32 %v2928, 8388608
    %v2930 = vsub.s32 0, %v2929
    %v2931 = vadd.s32 %v2926, 1
    %vm2932 = vcmp.gt.s32.totalorder %v2931, 0
    %v2933 = vsel %vm2932, %v2931, 0
    %v2934 = vshrl.u32 %v2933, 5
    %v2935 = vand.u32 %v2933, 31
    %v2936 = vsub.s32 32, %v2935
    %v2937 = vshrl.u32 683565275, %v2936
    %v2938 = vshll.u32 683565275, %v2935
    %v2939 = vshrl.u32 2475754826, %v2936
    %v2940 = vor.u32 %v2938, %v2939
    %v2941 = vshll.u32 2475754826, %v2935
    %v2942 = vshrl.u32 2131351028, %v2936
    %v2943 = vor.u32 %v2941, %v2942
    %v2944 = vshll.u32 2131351028, %v2935
    %v2945 = vshrl.u32 2102212464, %v2936
    %v2946 = vor.u32 %v2944, %v2945
    %v2947 = vshll.u32 2102212464, %v2935
    %v2948 = vshrl.u32 920167782, %v2936
    %v2949 = vor.u32 %v2947, %v2948
    %v2950 = vshll.u32 920167782, %v2935
    %v2951 = vshrl.u32 1326507024, %v2936
    %v2952 = vor.u32 %v2950, %v2951
    %vm2953 = vcmp.lt.s32.totalorder %v2934, 1
    %vm2954 = vcmp.lt.s32.totalorder %v2934, 2
    %vm2955 = vcmp.lt.s32.totalorder %v2934, 3
    %vm2956 = vcmp.lt.s32.totalorder %v2934, 4
    %v2957 = vsel %vm2953, %v2937, %v2940
    %v2958 = vsel %vm2956, %v2946, 2102212464
    %v2959 = vsel %vm2955, %v2943, %v2958
    %v2960 = vsel %vm2954, %v2957, %v2959
    %v2961 = vsel %vm2953, %v2940, %v2943
    %v2962 = vsel %vm2956, %v2949, 920167782
    %v2963 = vsel %vm2955, %v2946, %v2962
    %v2964 = vsel %vm2954, %v2961, %v2963
    %v2965 = vsel %vm2953, %v2943, %v2946
    %v2966 = vsel %vm2956, %v2952, 1326507024
    %v2967 = vsel %vm2955, %v2949, %v2966
    %v2968 = vsel %vm2954, %v2965, %v2967
    %v2969 = vshll.u32 %v2929, 8
    %v2970 = vmul.u32.u64.compose %v2969, %v2968
    %v2971 = vextract.low.u32 %v2970
    %v2972 = vextract.high.u32 %v2970
    %v2973 = vmul.u32.u64.compose %v2969, %v2964
    %v2974 = vextract.low.u32 %v2973
    %v2975 = vextract.high.u32 %v2973
    %v2976 = vmul.u32 %v2969, %v2960
    %v2977 = vadd.s32 %v2972, %v2974
    %vm2978 = vc.u32 %v2972, %v2974
    %v2979 = vadd.s32 %v2975, 1
    %v2980 = vsel %vm2978, %v2979, %v2975
    %v2981 = vadd.s32 %v2976, %v2980
    %v2982 = vadd.s32 %v2981, 536870912
    %v2983 = vshrl.u32 %v2982, 30
    %v2984 = vshll.u32 %v2983, 30
    %v2985 = vsub.s32 %v2981, %v2984
    %vm2986 = vcmp.lt.s32.totalorder %v2985, 0
    %v2987 = vsub.s32 0, %v2985
    %v2988 = vsel %vm2986, %v2987, %v2985
    %v2989 = vclz %v2988
    %v2990 = vsub.s32 %v2989, 2
    %vm2991 = vcmp.gt.s32.totalorder 0, %v2990
    %v2992 = vsel %vm2991, 0, %v2990
    %v2993 = vsub.s32 32, %v2992
    %v2994 = vshll.u32 %v2985, %v2992
    %v2995 = vshrl.u32 %v2977, %v2993
    %v2996 = vor.u32 %v2994, %v2995
    %v2997 = vsub.s32 4294967266, %v2992
    %v2998 = vadd.s32 %v2997, 127
    %v2999 = vshll.u32 %v2998, 23
    %v3000 = vor.u32 4788187, %v2999
    %v3001 = vand.u32 2147483647, %v3000
    %v3003 = vcvt.s32.f32 %v2996
    %v3004 = vmul.f32 %v3003, %v3001
    %v3005 = vxor.u32 %v3004, 2147483648
    %v3006 = vsel %vm2923, %v3005, %v3004
    %v3007 = vsub.s32 4, %v2983
    %v3008 = vsel %vm2923, %v3007, %v2983
    %v3009 = vsel %vm2922, %v1668, %v3006
    %v3010 = vsel %vm2922, 0, %v3008
    %v3011 = vcosq.f32.pop %v3009
    %v3012 = vsinq.f32.pop %v3009
    %vm3013 = vweird.f32 %v1668
    %v3014 = vadd.s32 %v3010, 3
    %v3015 = vand.u32 %v3014, 3
    %vm3016 = vcmp.lt.s32.totalorder %v3015, 2
    %vm3017 = vcmp.eq.s32.totalorder %v3015, 0
    %v3018 = vxor.u32 %v3012, 2147483648
    %v3019 = vsel %vm3017, %v3011, %v3018
    %vm3020 = vcmp.eq.s32.totalorder %v3015, 2
    %v3021 = vxor.u32 %v3011, 2147483648
    %v3022 = vsel %vm3020, %v3021, %v3012
    %v3023 = vsel %vm3016, %v3019, %v3022
    %v3024 = vsel %vm3013, nan, %v3023
    %vm3025 = vcmp.eq.f32.partialorder %v1669, 1.0
    %vm3026 = vcmp.eq.f32.partialorder %v1670, 1.0
    %v3027 = vand.u32 2147483647, %v1656
    %vm3028 = vcmp.le.f32.partialorder %v3027, 0.7853982
    %vm3029 = vcmp.lt.s32.totalorder %v1656, 0
    %v3030 = vand.u32 %v1656, 2139095040
    %v3031 = vshrl.u32 %v3030, 23
    %v3032 = vsub.s32 %v3031, 127
    %v3033 = vand.u32 2147483647, %v1656
    %v3034 = vand.u32 %v3033, 8388607
    %v3035 = vor.u32 %v3034, 8388608
    %v3036 = vsub.s32 0, %v3035
    %v3037 = vadd.s32 %v3032, 1
    %vm3038 = vcmp.gt.s32.totalorder %v3037, 0
    %v3039 = vsel %vm3038, %v3037, 0
    %v3040 = vshrl.u32 %v3039, 5
    %v3041 = vand.u32 %v3039, 31
    %v3042 = vsub.s32 32, %v3041
    %v3043 = vshrl.u32 683565275, %v3042
    %v3044 = vshll.u32 683565275, %v3041
    %v3045 = vshrl.u32 2475754826, %v3042
    %v3046 = vor.u32 %v3044, %v3045
    %v3047 = vshll.u32 2475754826, %v3041
    %v3048 = vshrl.u32 2131351028, %v3042
    %v3049 = vor.u32 %v3047, %v3048
    %v3050 = vshll.u32 2131351028, %v3041
    %v3051 = vshrl.u32 2102212464, %v3042
    %v3052 = vor.u32 %v3050, %v3051
    %v3053 = vshll.u32 2102212464, %v3041
    %v3054 = vshrl.u32 920167782, %v3042
    %v3055 = vor.u32 %v3053, %v3054
    %v3056 = vshll.u32 920167782, %v3041
    %v3057 = vshrl.u32 1326507024, %v3042
    %v3058 = vor.u32 %v3056, %v3057
    %vm3059 = vcmp.lt.s32.totalorder %v3040, 1
    %vm3060 = vcmp.lt.s32.totalorder %v3040, 2
    %vm3061 = vcmp.lt.s32.totalorder %v3040, 3
    %vm3062 = vcmp.lt.s32.totalorder %v3040, 4
    %v3063 = vsel %vm3059, %v3043, %v3046
    %v3064 = vsel %vm3062, %v3052, 2102212464
    %v3065 = vsel %vm3061, %v3049, %v3064
    %v3066 = vsel %vm3060, %v3063, %v3065
    %v3067 = vsel %vm3059, %v3046, %v3049
    %v3068 = vsel %vm3062, %v3055, 920167782
    %v3069 = vsel %vm3061, %v3052, %v3068
    %v3070 = vsel %vm3060, %v3067, %v3069
    %v3071 = vsel %vm3059, %v3049, %v3052
    %v3072 = vsel %vm3062, %v3058, 1326507024
    %v3073 = vsel %vm3061, %v3055, %v3072
    %v3074 = vsel %vm3060, %v3071, %v3073
    %v3075 = vshll.u32 %v3035, 8
    %v3076 = vmul.u32.u64.compose %v3075, %v3074
    %v3077 = vextract.low.u32 %v3076
    %v3078 = vextract.high.u32 %v3076
    %v3079 = vmul.u32.u64.compose %v3075, %v3070
    %v3080 = vextract.low.u32 %v3079
    %v3081 = vextract.high.u32 %v3079
    %v3082 = vmul.u32 %v3075, %v3066
    %v3083 = vadd.s32 %v3078, %v3080
    %vm3084 = vc.u32 %v3078, %v3080
    %v3085 = vadd.s32 %v3081, 1
    %v3086 = vsel %vm3084, %v3085, %v3081
    %v3087 = vadd.s32 %v3082, %v3086
    %v3088 = vadd.s32 %v3087, 536870912
    %v3089 = vshrl.u32 %v3088, 30
    %v3090 = vshll.u32 %v3089, 30
    %v3091 = vsub.s32 %v3087, %v3090
    %vm3092 = vcmp.lt.s32.totalorder %v3091, 0
    %v3093 = vsub.s32 0, %v3091
    %v3094 = vsel %vm3092, %v3093, %v3091
    %v3095 = vclz %v3094
    %v3096 = vsub.s32 %v3095, 2
    %vm3097 = vcmp.gt.s32.totalorder 0, %v3096
    %v3098 = vsel %vm3097, 0, %v3096
    %v3099 = vsub.s32 32, %v3098
    %v3100 = vshll.u32 %v3091, %v3098
    %v3101 = vshrl.u32 %v3083, %v3099
    %v3102 = vor.u32 %v3100, %v3101
    %v3103 = vsub.s32 4294967266, %v3098
    %v3104 = vadd.s32 %v3103, 127
    %v3105 = vshll.u32 %v3104, 23
    %v3106 = vor.u32 4788187, %v3105
    %v3107 = vand.u32 2147483647, %v3106
    %v3109 = vcvt.s32.f32 %v3102
    %v3110 = vmul.f32 %v3109, %v3107
    %v3111 = vxor.u32 %v3110, 2147483648
    %v3112 = vsel %vm3029, %v3111, %v3110
    %v3113 = vsub.s32 4, %v3089
    %v3114 = vsel %vm3029, %v3113, %v3089
    %v3115 = vsel %vm3028, %v1656, %v3112
    %v3116 = vsel %vm3028, 0, %v3114
    %v3117 = vcosq.f32.pop %v3115
    %v3118 = vsinq.f32.pop %v3115
    %vm3119 = vweird.f32 %v1656
    %v3120 = vand.u32 %v3116, 3
    %vm3121 = vcmp.lt.s32.totalorder %v3120, 2
    %vm3122 = vcmp.eq.s32.totalorder %v3120, 0
    %v3123 = vxor.u32 %v3118, 2147483648
    %v3124 = vsel %vm3122, %v3117, %v3123
    %vm3125 = vcmp.eq.s32.totalorder %v3120, 2
    %v3126 = vxor.u32 %v3117, 2147483648
    %v3127 = vsel %vm3125, %v3126, %v3118
    %v3128 = vsel %vm3121, %v3124, %v3127
    %v3129 = vsel %vm3119, nan, %v3128
    %v3130 = vand.u32 2147483647, %v1657
    %vm3131 = vcmp.le.f32.partialorder %v3130, 0.7853982
    %vm3132 = vcmp.lt.s32.totalorder %v1657, 0
    %v3133 = vand.u32 %v1657, 2139095040
    %v3134 = vshrl.u32 %v3133, 23
    %v3135 = vsub.s32 %v3134, 127
    %v3136 = vand.u32 2147483647, %v1657
    %v3137 = vand.u32 %v3136, 8388607
    %v3138 = vor.u32 %v3137, 8388608
    %v3139 = vsub.s32 0, %v3138
    %v3140 = vadd.s32 %v3135, 1
    %vm3141 = vcmp.gt.s32.totalorder %v3140, 0
    %v3142 = vsel %vm3141, %v3140, 0
    %v3143 = vshrl.u32 %v3142, 5
    %v3144 = vand.u32 %v3142, 31
    %v3145 = vsub.s32 32, %v3144
    %v3146 = vshrl.u32 683565275, %v3145
    %v3147 = vshll.u32 683565275, %v3144
    %v3148 = vshrl.u32 2475754826, %v3145
    %v3149 = vor.u32 %v3147, %v3148
    %v3150 = vshll.u32 2475754826, %v3144
    %v3151 = vshrl.u32 2131351028, %v3145
    %v3152 = vor.u32 %v3150, %v3151
    %v3153 = vshll.u32 2131351028, %v3144
    %v3154 = vshrl.u32 2102212464, %v3145
    %v3155 = vor.u32 %v3153, %v3154
    %v3156 = vshll.u32 2102212464, %v3144
    %v3157 = vshrl.u32 920167782, %v3145
    %v3158 = vor.u32 %v3156, %v3157
    %v3159 = vshll.u32 920167782, %v3144
    %v3160 = vshrl.u32 1326507024, %v3145
    %v3161 = vor.u32 %v3159, %v3160
    %vm3162 = vcmp.lt.s32.totalorder %v3143, 1
    %vm3163 = vcmp.lt.s32.totalorder %v3143, 2
    %vm3164 = vcmp.lt.s32.totalorder %v3143, 3
    %vm3165 = vcmp.lt.s32.totalorder %v3143, 4
    %v3166 = vsel %vm3162, %v3146, %v3149
    %v3167 = vsel %vm3165, %v3155, 2102212464
    %v3168 = vsel %vm3164, %v3152, %v3167
    %v3169 = vsel %vm3163, %v3166, %v3168
    %v3170 = vsel %vm3162, %v3149, %v3152
    %v3171 = vsel %vm3165, %v3158, 920167782
    %v3172 = vsel %vm3164, %v3155, %v3171
    %v3173 = vsel %vm3163, %v3170, %v3172
    %v3174 = vsel %vm3162, %v3152, %v3155
    %v3175 = vsel %vm3165, %v3161, 1326507024
    %v3176 = vsel %vm3164, %v3158, %v3175
    %v3177 = vsel %vm3163, %v3174, %v3176
    %v3178 = vshll.u32 %v3138, 8
    %v3179 = vmul.u32.u64.compose %v3178, %v3177
    %v3180 = vextract.low.u32 %v3179
    %v3181 = vextract.high.u32 %v3179
    %v3182 = vmul.u32.u64.compose %v3178, %v3173
    %v3183 = vextract.low.u32 %v3182
    %v3184 = vextract.high.u32 %v3182
    %v3185 = vmul.u32 %v3178, %v3169
    %v3186 = vadd.s32 %v3181, %v3183
    %vm3187 = vc.u32 %v3181, %v3183
    %v3188 = vadd.s32 %v3184, 1
    %v3189 = vsel %vm3187, %v3188, %v3184
    %v3190 = vadd.s32 %v3185, %v3189
    %v3191 = vadd.s32 %v3190, 536870912
    %v3192 = vshrl.u32 %v3191, 30
    %v3193 = vshll.u32 %v3192, 30
    %v3194 = vsub.s32 %v3190, %v3193
    %vm3195 = vcmp.lt.s32.totalorder %v3194, 0
    %v3196 = vsub.s32 0, %v3194
    %v3197 = vsel %vm3195, %v3196, %v3194
    %v3198 = vclz %v3197
    %v3199 = vsub.s32 %v3198, 2
    %vm3200 = vcmp.gt.s32.totalorder 0, %v3199
    %v3201 = vsel %vm3200, 0, %v3199
    %v3202 = vsub.s32 32, %v3201
    %v3203 = vshll.u32 %v3194, %v3201
    %v3204 = vshrl.u32 %v3186, %v3202
    %v3205 = vor.u32 %v3203, %v3204
    %v3206 = vsub.s32 4294967266, %v3201
    %v3207 = vadd.s32 %v3206, 127
    %v3208 = vshll.u32 %v3207, 23
    %v3209 = vor.u32 4788187, %v3208
    %v3210 = vand.u32 2147483647, %v3209
    %v3212 = vcvt.s32.f32 %v3205
    %v3213 = vmul.f32 %v3212, %v3210
    %v3214 = vxor.u32 %v3213, 2147483648
    %v3215 = vsel %vm3132, %v3214, %v3213
    %v3216 = vsub.s32 4, %v3192
    %v3217 = vsel %vm3132, %v3216, %v3192
    %v3218 = vsel %vm3131, %v1657, %v3215
    %v3219 = vsel %vm3131, 0, %v3217
    %v3220 = vcosq.f32.pop %v3218
    %v3221 = vsinq.f32.pop %v3218
    %vm3222 = vweird.f32 %v1657
    %v3223 = vand.u32 %v3219, 3
    %vm3224 = vcmp.lt.s32.totalorder %v3223, 2
    %vm3225 = vcmp.eq.s32.totalorder %v3223, 0
    %v3226 = vxor.u32 %v3221, 2147483648
    %v3227 = vsel %vm3225, %v3220, %v3226
    %vm3228 = vcmp.eq.s32.totalorder %v3223, 2
    %v3229 = vxor.u32 %v3220, 2147483648
    %v3230 = vsel %vm3228, %v3229, %v3221
    %v3231 = vsel %vm3224, %v3227, %v3230
    %v3232 = vsel %vm3222, nan, %v3231
    %v3233 = vand.u32 2147483647, %v1658
    %vm3234 = vcmp.le.f32.partialorder %v3233, 0.7853982
    %vm3235 = vcmp.lt.s32.totalorder %v1658, 0
    %v3236 = vand.u32 %v1658, 2139095040
    %v3237 = vshrl.u32 %v3236, 23
    %v3238 = vsub.s32 %v3237, 127
    %v3239 = vand.u32 2147483647, %v1658
    %v3240 = vand.u32 %v3239, 8388607
    %v3241 = vor.u32 %v3240, 8388608
    %v3242 = vsub.s32 0, %v3241
    %v3243 = vadd.s32 %v3238, 1
    %vm3244 = vcmp.gt.s32.totalorder %v3243, 0
    %v3245 = vsel %vm3244, %v3243, 0
    %v3246 = vshrl.u32 %v3245, 5
    %v3247 = vand.u32 %v3245, 31
    %v3248 = vsub.s32 32, %v3247
    %v3249 = vshrl.u32 683565275, %v3248
    %v3250 = vshll.u32 683565275, %v3247
    %v3251 = vshrl.u32 2475754826, %v3248
    %v3252 = vor.u32 %v3250, %v3251
    %v3253 = vshll.u32 2475754826, %v3247
    %v3254 = vshrl.u32 2131351028, %v3248
    %v3255 = vor.u32 %v3253, %v3254
    %v3256 = vshll.u32 2131351028, %v3247
    %v3257 = vshrl.u32 2102212464, %v3248
    %v3258 = vor.u32 %v3256, %v3257
    %v3259 = vshll.u32 2102212464, %v3247
    %v3260 = vshrl.u32 920167782, %v3248
    %v3261 = vor.u32 %v3259, %v3260
    %v3262 = vshll.u32 920167782, %v3247
    %v3263 = vshrl.u32 1326507024, %v3248
    %v3264 = vor.u32 %v3262, %v3263
    %vm3265 = vcmp.lt.s32.totalorder %v3246, 1
    %vm3266 = vcmp.lt.s32.totalorder %v3246, 2
    %vm3267 = vcmp.lt.s32.totalorder %v3246, 3
    %vm3268 = vcmp.lt.s32.totalorder %v3246, 4
    %v3269 = vsel %vm3265, %v3249, %v3252
    %v3270 = vsel %vm3268, %v3258, 2102212464
    %v3271 = vsel %vm3267, %v3255, %v3270
    %v3272 = vsel %vm3266, %v3269, %v3271
    %v3273 = vsel %vm3265, %v3252, %v3255
    %v3274 = vsel %vm3268, %v3261, 920167782
    %v3275 = vsel %vm3267, %v3258, %v3274
    %v3276 = vsel %vm3266, %v3273, %v3275
    %v3277 = vsel %vm3265, %v3255, %v3258
    %v3278 = vsel %vm3268, %v3264, 1326507024
    %v3279 = vsel %vm3267, %v3261, %v3278
    %v3280 = vsel %vm3266, %v3277, %v3279
    %v3281 = vshll.u32 %v3241, 8
    %v3282 = vmul.u32.u64.compose %v3281, %v3280
    %v3283 = vextract.low.u32 %v3282
    %v3284 = vextract.high.u32 %v3282
    %v3285 = vmul.u32.u64.compose %v3281, %v3276
    %v3286 = vextract.low.u32 %v3285
    %v3287 = vextract.high.u32 %v3285
    %v3288 = vmul.u32 %v3281, %v3272
    %v3289 = vadd.s32 %v3284, %v3286
    %vm3290 = vc.u32 %v3284, %v3286
    %v3291 = vadd.s32 %v3287, 1
    %v3292 = vsel %vm3290, %v3291, %v3287
    %v3293 = vadd.s32 %v3288, %v3292
    %v3294 = vadd.s32 %v3293, 536870912
    %v3295 = vshrl.u32 %v3294, 30
    %v3296 = vshll.u32 %v3295, 30
    %v3297 = vsub.s32 %v3293, %v3296
    %vm3298 = vcmp.lt.s32.totalorder %v3297, 0
    %v3299 = vsub.s32 0, %v3297
    %v3300 = vsel %vm3298, %v3299, %v3297
    %v3301 = vclz %v3300
    %v3302 = vsub.s32 %v3301, 2
    %vm3303 = vcmp.gt.s32.totalorder 0, %v3302
    %v3304 = vsel %vm3303, 0, %v3302
    %v3305 = vsub.s32 32, %v3304
    %v3306 = vshll.u32 %v3297, %v3304
    %v3307 = vshrl.u32 %v3289, %v3305
    %v3308 = vor.u32 %v3306, %v3307
    %v3309 = vsub.s32 4294967266, %v3304
    %v3310 = vadd.s32 %v3309, 127
    %v3311 = vshll.u32 %v3310, 23
    %v3312 = vor.u32 4788187, %v3311
    %v3313 = vand.u32 2147483647, %v3312
    %v3315 = vcvt.s32.f32 %v3308
    %v3316 = vmul.f32 %v3315, %v3313
    %v3317 = vxor.u32 %v3316, 2147483648
    %v3318 = vsel %vm3235, %v3317, %v3316
    %v3319 = vsub.s32 4, %v3295
    %v3320 = vsel %vm3235, %v3319, %v3295
    %v3321 = vsel %vm3234, %v1658, %v3318
    %v3322 = vsel %vm3234, 0, %v3320
    %v3323 = vcosq.f32.pop %v3321
    %v3324 = vsinq.f32.pop %v3321
    %vm3325 = vweird.f32 %v1658
    %v3326 = vand.u32 %v3322, 3
    %vm3327 = vcmp.lt.s32.totalorder %v3326, 2
    %vm3328 = vcmp.eq.s32.totalorder %v3326, 0
    %v3329 = vxor.u32 %v3324, 2147483648
    %v3330 = vsel %vm3328, %v3323, %v3329
    %vm3331 = vcmp.eq.s32.totalorder %v3326, 2
    %v3332 = vxor.u32 %v3323, 2147483648
    %v3333 = vsel %vm3331, %v3332, %v3324
    %v3334 = vsel %vm3327, %v3330, %v3333
    %v3335 = vsel %vm3325, nan, %v3334
    %v3336 = vand.u32 2147483647, %v1659
    %vm3337 = vcmp.le.f32.partialorder %v3336, 0.7853982
    %vm3338 = vcmp.lt.s32.totalorder %v1659, 0
    %v3339 = vand.u32 %v1659, 2139095040
    %v3340 = vshrl.u32 %v3339, 23
    %v3341 = vsub.s32 %v3340, 127
    %v3342 = vand.u32 2147483647, %v1659
    %v3343 = vand.u32 %v3342, 8388607
    %v3344 = vor.u32 %v3343, 8388608
    %v3345 = vsub.s32 0, %v3344
    %v3346 = vadd.s32 %v3341, 1
    %vm3347 = vcmp.gt.s32.totalorder %v3346, 0
    %v3348 = vsel %vm3347, %v3346, 0
    %v3349 = vshrl.u32 %v3348, 5
    %v3350 = vand.u32 %v3348, 31
    %v3351 = vsub.s32 32, %v3350
    %v3352 = vshrl.u32 683565275, %v3351
    %v3353 = vshll.u32 683565275, %v3350
    %v3354 = vshrl.u32 2475754826, %v3351
    %v3355 = vor.u32 %v3353, %v3354
    %v3356 = vshll.u32 2475754826, %v3350
    %v3357 = vshrl.u32 2131351028, %v3351
    %v3358 = vor.u32 %v3356, %v3357
    %v3359 = vshll.u32 2131351028, %v3350
    %v3360 = vshrl.u32 2102212464, %v3351
    %v3361 = vor.u32 %v3359, %v3360
    %v3362 = vshll.u32 2102212464, %v3350
    %v3363 = vshrl.u32 920167782, %v3351
    %v3364 = vor.u32 %v3362, %v3363
    %v3365 = vshll.u32 920167782, %v3350
    %v3366 = vshrl.u32 1326507024, %v3351
    %v3367 = vor.u32 %v3365, %v3366
    %vm3368 = vcmp.lt.s32.totalorder %v3349, 1
    %vm3369 = vcmp.lt.s32.totalorder %v3349, 2
    %vm3370 = vcmp.lt.s32.totalorder %v3349, 3
    %vm3371 = vcmp.lt.s32.totalorder %v3349, 4
    %v3372 = vsel %vm3368, %v3352, %v3355
    %v3373 = vsel %vm3371, %v3361, 2102212464
    %v3374 = vsel %vm3370, %v3358, %v3373
    %v3375 = vsel %vm3369, %v3372, %v3374
    %v3376 = vsel %vm3368, %v3355, %v3358
    %v3377 = vsel %vm3371, %v3364, 920167782
    %v3378 = vsel %vm3370, %v3361, %v3377
    %v3379 = vsel %vm3369, %v3376, %v3378
    %v3380 = vsel %vm3368, %v3358, %v3361
    %v3381 = vsel %vm3371, %v3367, 1326507024
    %v3382 = vsel %vm3370, %v3364, %v3381
    %v3383 = vsel %vm3369, %v3380, %v3382
    %v3384 = vshll.u32 %v3344, 8
    %v3385 = vmul.u32.u64.compose %v3384, %v3383
    %v3386 = vextract.low.u32 %v3385
    %v3387 = vextract.high.u32 %v3385
    %v3388 = vmul.u32.u64.compose %v3384, %v3379
    %v3389 = vextract.low.u32 %v3388
    %v3390 = vextract.high.u32 %v3388
    %v3391 = vmul.u32 %v3384, %v3375
    %v3392 = vadd.s32 %v3387, %v3389
    %vm3393 = vc.u32 %v3387, %v3389
    %v3394 = vadd.s32 %v3390, 1
    %v3395 = vsel %vm3393, %v3394, %v3390
    %v3396 = vadd.s32 %v3391, %v3395
    %v3397 = vadd.s32 %v3396, 536870912
    %v3398 = vshrl.u32 %v3397, 30
    %v3399 = vshll.u32 %v3398, 30
    %v3400 = vsub.s32 %v3396, %v3399
    %vm3401 = vcmp.lt.s32.totalorder %v3400, 0
    %v3402 = vsub.s32 0, %v3400
    %v3403 = vsel %vm3401, %v3402, %v3400
    %v3404 = vclz %v3403
    %v3405 = vsub.s32 %v3404, 2
    %vm3406 = vcmp.gt.s32.totalorder 0, %v3405
    %v3407 = vsel %vm3406, 0, %v3405
    %v3408 = vsub.s32 32, %v3407
    %v3409 = vshll.u32 %v3400, %v3407
    %v3410 = vshrl.u32 %v3392, %v3408
    %v3411 = vor.u32 %v3409, %v3410
    %v3412 = vsub.s32 4294967266, %v3407
    %v3413 = vadd.s32 %v3412, 127
    %v3414 = vshll.u32 %v3413, 23
    %v3415 = vor.u32 4788187, %v3414
    %v3416 = vand.u32 2147483647, %v3415
    %v3418 = vcvt.s32.f32 %v3411
    %v3419 = vmul.f32 %v3418, %v3416
    %v3420 = vxor.u32 %v3419, 2147483648
    %v3421 = vsel %vm3338, %v3420, %v3419
    %v3422 = vsub.s32 4, %v3398
    %v3423 = vsel %vm3338, %v3422, %v3398
    %v3424 = vsel %vm3337, %v1659, %v3421
    %v3425 = vsel %vm3337, 0, %v3423
    %v3426 = vcosq.f32.pop %v3424
    %v3427 = vsinq.f32.pop %v3424
    %vm3428 = vweird.f32 %v1659
    %v3429 = vand.u32 %v3425, 3
    %vm3430 = vcmp.lt.s32.totalorder %v3429, 2
    %vm3431 = vcmp.eq.s32.totalorder %v3429, 0
    %v3432 = vxor.u32 %v3427, 2147483648
    %v3433 = vsel %vm3431, %v3426, %v3432
    %vm3434 = vcmp.eq.s32.totalorder %v3429, 2
    %v3435 = vxor.u32 %v3426, 2147483648
    %v3436 = vsel %vm3434, %v3435, %v3427
    %v3437 = vsel %vm3430, %v3433, %v3436
    %v3438 = vsel %vm3428, nan, %v3437
    %v3439 = vand.u32 2147483647, %v1660
    %vm3440 = vcmp.le.f32.partialorder %v3439, 0.7853982
    %vm3441 = vcmp.lt.s32.totalorder %v1660, 0
    %v3442 = vand.u32 %v1660, 2139095040
    %v3443 = vshrl.u32 %v3442, 23
    %v3444 = vsub.s32 %v3443, 127
    %v3445 = vand.u32 2147483647, %v1660
    %v3446 = vand.u32 %v3445, 8388607
    %v3447 = vor.u32 %v3446, 8388608
    %v3448 = vsub.s32 0, %v3447
    %v3449 = vadd.s32 %v3444, 1
    %vm3450 = vcmp.gt.s32.totalorder %v3449, 0
    %v3451 = vsel %vm3450, %v3449, 0
    %v3452 = vshrl.u32 %v3451, 5
    %v3453 = vand.u32 %v3451, 31
    %v3454 = vsub.s32 32, %v3453
    %v3455 = vshrl.u32 683565275, %v3454
    %v3456 = vshll.u32 683565275, %v3453
    %v3457 = vshrl.u32 2475754826, %v3454
    %v3458 = vor.u32 %v3456, %v3457
    %v3459 = vshll.u32 2475754826, %v3453
    %v3460 = vshrl.u32 2131351028, %v3454
    %v3461 = vor.u32 %v3459, %v3460
    %v3462 = vshll.u32 2131351028, %v3453
    %v3463 = vshrl.u32 2102212464, %v3454
    %v3464 = vor.u32 %v3462, %v3463
    %v3465 = vshll.u32 2102212464, %v3453
    %v3466 = vshrl.u32 920167782, %v3454
    %v3467 = vor.u32 %v3465, %v3466
    %v3468 = vshll.u32 920167782, %v3453
    %v3469 = vshrl.u32 1326507024, %v3454
    %v3470 = vor.u32 %v3468, %v3469
    %vm3471 = vcmp.lt.s32.totalorder %v3452, 1
    %vm3472 = vcmp.lt.s32.totalorder %v3452, 2
    %vm3473 = vcmp.lt.s32.totalorder %v3452, 3
    %vm3474 = vcmp.lt.s32.totalorder %v3452, 4
    %v3475 = vsel %vm3471, %v3455, %v3458
    %v3476 = vsel %vm3474, %v3464, 2102212464
    %v3477 = vsel %vm3473, %v3461, %v3476
    %v3478 = vsel %vm3472, %v3475, %v3477
    %v3479 = vsel %vm3471, %v3458, %v3461
    %v3480 = vsel %vm3474, %v3467, 920167782
    %v3481 = vsel %vm3473, %v3464, %v3480
    %v3482 = vsel %vm3472, %v3479, %v3481
    %v3483 = vsel %vm3471, %v3461, %v3464
    %v3484 = vsel %vm3474, %v3470, 1326507024
    %v3485 = vsel %vm3473, %v3467, %v3484
    %v3486 = vsel %vm3472, %v3483, %v3485
    %v3487 = vshll.u32 %v3447, 8
    %v3488 = vmul.u32.u64.compose %v3487, %v3486
    %v3489 = vextract.low.u32 %v3488
    %v3490 = vextract.high.u32 %v3488
    %v3491 = vmul.u32.u64.compose %v3487, %v3482
    %v3492 = vextract.low.u32 %v3491
    %v3493 = vextract.high.u32 %v3491
    %v3494 = vmul.u32 %v3487, %v3478
    %v3495 = vadd.s32 %v3490, %v3492
    %vm3496 = vc.u32 %v3490, %v3492
    %v3497 = vadd.s32 %v3493, 1
    %v3498 = vsel %vm3496, %v3497, %v3493
    %v3499 = vadd.s32 %v3494, %v3498
    %v3500 = vadd.s32 %v3499, 536870912
    %v3501 = vshrl.u32 %v3500, 30
    %v3502 = vshll.u32 %v3501, 30
    %v3503 = vsub.s32 %v3499, %v3502
    %vm3504 = vcmp.lt.s32.totalorder %v3503, 0
    %v3505 = vsub.s32 0, %v3503
    %v3506 = vsel %vm3504, %v3505, %v3503
    %v3507 = vclz %v3506
    %v3508 = vsub.s32 %v3507, 2
    %vm3509 = vcmp.gt.s32.totalorder 0, %v3508
    %v3510 = vsel %vm3509, 0, %v3508
    %v3511 = vsub.s32 32, %v3510
    %v3512 = vshll.u32 %v3503, %v3510
    %v3513 = vshrl.u32 %v3495, %v3511
    %v3514 = vor.u32 %v3512, %v3513
    %v3515 = vsub.s32 4294967266, %v3510
    %v3516 = vadd.s32 %v3515, 127
    %v3517 = vshll.u32 %v3516, 23
    %v3518 = vor.u32 4788187, %v3517
    %v3519 = vand.u32 2147483647, %v3518
    %v3521 = vcvt.s32.f32 %v3514
    %v3522 = vmul.f32 %v3521, %v3519
    %v3523 = vxor.u32 %v3522, 2147483648
    %v3524 = vsel %vm3441, %v3523, %v3522
    %v3525 = vsub.s32 4, %v3501
    %v3526 = vsel %vm3441, %v3525, %v3501
    %v3527 = vsel %vm3440, %v1660, %v3524
    %v3528 = vsel %vm3440, 0, %v3526
    %v3529 = vcosq.f32.pop %v3527
    %v3530 = vsinq.f32.pop %v3527
    %vm3531 = vweird.f32 %v1660
    %v3532 = vand.u32 %v3528, 3
    %vm3533 = vcmp.lt.s32.totalorder %v3532, 2
    %vm3534 = vcmp.eq.s32.totalorder %v3532, 0
    %v3535 = vxor.u32 %v3530, 2147483648
    %v3536 = vsel %vm3534, %v3529, %v3535
    %vm3537 = vcmp.eq.s32.totalorder %v3532, 2
    %v3538 = vxor.u32 %v3529, 2147483648
    %v3539 = vsel %vm3537, %v3538, %v3530
    %v3540 = vsel %vm3533, %v3536, %v3539
    %v3541 = vsel %vm3531, nan, %v3540
    %v3542 = vand.u32 2147483647, %v1661
    %vm3543 = vcmp.le.f32.partialorder %v3542, 0.7853982
    %vm3544 = vcmp.lt.s32.totalorder %v1661, 0
    %v3545 = vand.u32 %v1661, 2139095040
    %v3546 = vshrl.u32 %v3545, 23
    %v3547 = vsub.s32 %v3546, 127
    %v3548 = vand.u32 2147483647, %v1661
    %v3549 = vand.u32 %v3548, 8388607
    %v3550 = vor.u32 %v3549, 8388608
    %v3551 = vsub.s32 0, %v3550
    %v3552 = vadd.s32 %v3547, 1
    %vm3553 = vcmp.gt.s32.totalorder %v3552, 0
    %v3554 = vsel %vm3553, %v3552, 0
    %v3555 = vshrl.u32 %v3554, 5
    %v3556 = vand.u32 %v3554, 31
    %v3557 = vsub.s32 32, %v3556
    %v3558 = vshrl.u32 683565275, %v3557
    %v3559 = vshll.u32 683565275, %v3556
    %v3560 = vshrl.u32 2475754826, %v3557
    %v3561 = vor.u32 %v3559, %v3560
    %v3562 = vshll.u32 2475754826, %v3556
    %v3563 = vshrl.u32 2131351028, %v3557
    %v3564 = vor.u32 %v3562, %v3563
    %v3565 = vshll.u32 2131351028, %v3556
    %v3566 = vshrl.u32 2102212464, %v3557
    %v3567 = vor.u32 %v3565, %v3566
    %v3568 = vshll.u32 2102212464, %v3556
    %v3569 = vshrl.u32 920167782, %v3557
    %v3570 = vor.u32 %v3568, %v3569
    %v3571 = vshll.u32 920167782, %v3556
    %v3572 = vshrl.u32 1326507024, %v3557
    %v3573 = vor.u32 %v3571, %v3572
    %vm3574 = vcmp.lt.s32.totalorder %v3555, 1
    %vm3575 = vcmp.lt.s32.totalorder %v3555, 2
    %vm3576 = vcmp.lt.s32.totalorder %v3555, 3
    %vm3577 = vcmp.lt.s32.totalorder %v3555, 4
    %v3578 = vsel %vm3574, %v3558, %v3561
    %v3579 = vsel %vm3577, %v3567, 2102212464
    %v3580 = vsel %vm3576, %v3564, %v3579
    %v3581 = vsel %vm3575, %v3578, %v3580
    %v3582 = vsel %vm3574, %v3561, %v3564
    %v3583 = vsel %vm3577, %v3570, 920167782
    %v3584 = vsel %vm3576, %v3567, %v3583
    %v3585 = vsel %vm3575, %v3582, %v3584
    %v3586 = vsel %vm3574, %v3564, %v3567
    %v3587 = vsel %vm3577, %v3573, 1326507024
    %v3588 = vsel %vm3576, %v3570, %v3587
    %v3589 = vsel %vm3575, %v3586, %v3588
    %v3590 = vshll.u32 %v3550, 8
    %v3591 = vmul.u32.u64.compose %v3590, %v3589
    %v3592 = vextract.low.u32 %v3591
    %v3593 = vextract.high.u32 %v3591
    %v3594 = vmul.u32.u64.compose %v3590, %v3585
    %v3595 = vextract.low.u32 %v3594
    %v3596 = vextract.high.u32 %v3594
    %v3597 = vmul.u32 %v3590, %v3581
    %v3598 = vadd.s32 %v3593, %v3595
    %vm3599 = vc.u32 %v3593, %v3595
    %v3600 = vadd.s32 %v3596, 1
    %v3601 = vsel %vm3599, %v3600, %v3596
    %v3602 = vadd.s32 %v3597, %v3601
    %v3603 = vadd.s32 %v3602, 536870912
    %v3604 = vshrl.u32 %v3603, 30
    %v3605 = vshll.u32 %v3604, 30
    %v3606 = vsub.s32 %v3602, %v3605
    %vm3607 = vcmp.lt.s32.totalorder %v3606, 0
    %v3608 = vsub.s32 0, %v3606
    %v3609 = vsel %vm3607, %v3608, %v3606
    %v3610 = vclz %v3609
    %v3611 = vsub.s32 %v3610, 2
    %vm3612 = vcmp.gt.s32.totalorder 0, %v3611
    %v3613 = vsel %vm3612, 0, %v3611
    %v3614 = vsub.s32 32, %v3613
    %v3615 = vshll.u32 %v3606, %v3613
    %v3616 = vshrl.u32 %v3598, %v3614
    %v3617 = vor.u32 %v3615, %v3616
    %v3618 = vsub.s32 4294967266, %v3613
    %v3619 = vadd.s32 %v3618, 127
    %v3620 = vshll.u32 %v3619, 23
    %v3621 = vor.u32 4788187, %v3620
    %v3622 = vand.u32 2147483647, %v3621
    %v3624 = vcvt.s32.f32 %v3617
    %v3625 = vmul.f32 %v3624, %v3622
    %v3626 = vxor.u32 %v3625, 2147483648
    %v3627 = vsel %vm3544, %v3626, %v3625
    %v3628 = vsub.s32 4, %v3604
    %v3629 = vsel %vm3544, %v3628, %v3604
    %v3630 = vsel %vm3543, %v1661, %v3627
    %v3631 = vsel %vm3543, 0, %v3629
    %v3632 = vcosq.f32.pop %v3630
    %v3633 = vsinq.f32.pop %v3630
    %vm3634 = vweird.f32 %v1661
    %v3635 = vand.u32 %v3631, 3
    %vm3636 = vcmp.lt.s32.totalorder %v3635, 2
    %vm3637 = vcmp.eq.s32.totalorder %v3635, 0
    %v3638 = vxor.u32 %v3633, 2147483648
    %v3639 = vsel %vm3637, %v3632, %v3638
    %vm3640 = vcmp.eq.s32.totalorder %v3635, 2
    %v3641 = vxor.u32 %v3632, 2147483648
    %v3642 = vsel %vm3640, %v3641, %v3633
    %v3643 = vsel %vm3636, %v3639, %v3642
    %v3644 = vsel %vm3634, nan, %v3643
    %v3645 = vand.u32 2147483647, %v1662
    %vm3646 = vcmp.le.f32.partialorder %v3645, 0.7853982
    %vm3647 = vcmp.lt.s32.totalorder %v1662, 0
    %v3648 = vand.u32 %v1662, 2139095040
    %v3649 = vshrl.u32 %v3648, 23
    %v3650 = vsub.s32 %v3649, 127
    %v3651 = vand.u32 2147483647, %v1662
    %v3652 = vand.u32 %v3651, 8388607
    %v3653 = vor.u32 %v3652, 8388608
    %v3654 = vsub.s32 0, %v3653
    %v3655 = vadd.s32 %v3650, 1
    %vm3656 = vcmp.gt.s32.totalorder %v3655, 0
    %v3657 = vsel %vm3656, %v3655, 0
    %v3658 = vshrl.u32 %v3657, 5
    %v3659 = vand.u32 %v3657, 31
    %v3660 = vsub.s32 32, %v3659
    %v3661 = vshrl.u32 683565275, %v3660
    %v3662 = vshll.u32 683565275, %v3659
    %v3663 = vshrl.u32 2475754826, %v3660
    %v3664 = vor.u32 %v3662, %v3663
    %v3665 = vshll.u32 2475754826, %v3659
    %v3666 = vshrl.u32 2131351028, %v3660
    %v3667 = vor.u32 %v3665, %v3666
    %v3668 = vshll.u32 2131351028, %v3659
    %v3669 = vshrl.u32 2102212464, %v3660
    %v3670 = vor.u32 %v3668, %v3669
    %v3671 = vshll.u32 2102212464, %v3659
    %v3672 = vshrl.u32 920167782, %v3660
    %v3673 = vor.u32 %v3671, %v3672
    %v3674 = vshll.u32 920167782, %v3659
    %v3675 = vshrl.u32 1326507024, %v3660
    %v3676 = vor.u32 %v3674, %v3675
    %vm3677 = vcmp.lt.s32.totalorder %v3658, 1
    %vm3678 = vcmp.lt.s32.totalorder %v3658, 2
    %vm3679 = vcmp.lt.s32.totalorder %v3658, 3
    %vm3680 = vcmp.lt.s32.totalorder %v3658, 4
    %v3681 = vsel %vm3677, %v3661, %v3664
    %v3682 = vsel %vm3680, %v3670, 2102212464
    %v3683 = vsel %vm3679, %v3667, %v3682
    %v3684 = vsel %vm3678, %v3681, %v3683
    %v3685 = vsel %vm3677, %v3664, %v3667
    %v3686 = vsel %vm3680, %v3673, 920167782
    %v3687 = vsel %vm3679, %v3670, %v3686
    %v3688 = vsel %vm3678, %v3685, %v3687
    %v3689 = vsel %vm3677, %v3667, %v3670
    %v3690 = vsel %vm3680, %v3676, 1326507024
    %v3691 = vsel %vm3679, %v3673, %v3690
    %v3692 = vsel %vm3678, %v3689, %v3691
    %v3693 = vshll.u32 %v3653, 8
    %v3694 = vmul.u32.u64.compose %v3693, %v3692
    %v3695 = vextract.low.u32 %v3694
    %v3696 = vextract.high.u32 %v3694
    %v3697 = vmul.u32.u64.compose %v3693, %v3688
    %v3698 = vextract.low.u32 %v3697
    %v3699 = vextract.high.u32 %v3697
    %v3700 = vmul.u32 %v3693, %v3684
    %v3701 = vadd.s32 %v3696, %v3698
    %vm3702 = vc.u32 %v3696, %v3698
    %v3703 = vadd.s32 %v3699, 1
    %v3704 = vsel %vm3702, %v3703, %v3699
    %v3705 = vadd.s32 %v3700, %v3704
    %v3706 = vadd.s32 %v3705, 536870912
    %v3707 = vshrl.u32 %v3706, 30
    %v3708 = vshll.u32 %v3707, 30
    %v3709 = vsub.s32 %v3705, %v3708
    %vm3710 = vcmp.lt.s32.totalorder %v3709, 0
    %v3711 = vsub.s32 0, %v3709
    %v3712 = vsel %vm3710, %v3711, %v3709
    %v3713 = vclz %v3712
    %v3714 = vsub.s32 %v3713, 2
    %vm3715 = vcmp.gt.s32.totalorder 0, %v3714
    %v3716 = vsel %vm3715, 0, %v3714
    %v3717 = vsub.s32 32, %v3716
    %v3718 = vshll.u32 %v3709, %v3716
    %v3719 = vshrl.u32 %v3701, %v3717
    %v3720 = vor.u32 %v3718, %v3719
    %v3721 = vsub.s32 4294967266, %v3716
    %v3722 = vadd.s32 %v3721, 127
    %v3723 = vshll.u32 %v3722, 23
    %v3724 = vor.u32 4788187, %v3723
    %v3725 = vand.u32 2147483647, %v3724
    %v3727 = vcvt.s32.f32 %v3720
    %v3728 = vmul.f32 %v3727, %v3725
    %v3729 = vxor.u32 %v3728, 2147483648
    %v3730 = vsel %vm3647, %v3729, %v3728
    %v3731 = vsub.s32 4, %v3707
    %v3732 = vsel %vm3647, %v3731, %v3707
    %v3733 = vsel %vm3646, %v1662, %v3730
    %v3734 = vsel %vm3646, 0, %v3732
    %v3735 = vcosq.f32.pop %v3733
    %v3736 = vsinq.f32.pop %v3733
    %vm3737 = vweird.f32 %v1662
    %v3738 = vand.u32 %v3734, 3
    %vm3739 = vcmp.lt.s32.totalorder %v3738, 2
    %vm3740 = vcmp.eq.s32.totalorder %v3738, 0
    %v3741 = vxor.u32 %v3736, 2147483648
    %v3742 = vsel %vm3740, %v3735, %v3741
    %vm3743 = vcmp.eq.s32.totalorder %v3738, 2
    %v3744 = vxor.u32 %v3735, 2147483648
    %v3745 = vsel %vm3743, %v3744, %v3736
    %v3746 = vsel %vm3739, %v3742, %v3745
    %v3747 = vsel %vm3737, nan, %v3746
    %v3748 = vand.u32 2147483647, %v1663
    %vm3749 = vcmp.le.f32.partialorder %v3748, 0.7853982
    %vm3750 = vcmp.lt.s32.totalorder %v1663, 0
    %v3751 = vand.u32 %v1663, 2139095040
    %v3752 = vshrl.u32 %v3751, 23
    %v3753 = vsub.s32 %v3752, 127
    %v3754 = vand.u32 2147483647, %v1663
    %v3755 = vand.u32 %v3754, 8388607
    %v3756 = vor.u32 %v3755, 8388608
    %v3757 = vsub.s32 0, %v3756
    %v3758 = vadd.s32 %v3753, 1
    %vm3759 = vcmp.gt.s32.totalorder %v3758, 0
    %v3760 = vsel %vm3759, %v3758, 0
    %v3761 = vshrl.u32 %v3760, 5
    %v3762 = vand.u32 %v3760, 31
    %v3763 = vsub.s32 32, %v3762
    %v3764 = vshrl.u32 683565275, %v3763
    %v3765 = vshll.u32 683565275, %v3762
    %v3766 = vshrl.u32 2475754826, %v3763
    %v3767 = vor.u32 %v3765, %v3766
    %v3768 = vshll.u32 2475754826, %v3762
    %v3769 = vshrl.u32 2131351028, %v3763
    %v3770 = vor.u32 %v3768, %v3769
    %v3771 = vshll.u32 2131351028, %v3762
    %v3772 = vshrl.u32 2102212464, %v3763
    %v3773 = vor.u32 %v3771, %v3772
    %v3774 = vshll.u32 2102212464, %v3762
    %v3775 = vshrl.u32 920167782, %v3763
    %v3776 = vor.u32 %v3774, %v3775
    %v3777 = vshll.u32 920167782, %v3762
    %v3778 = vshrl.u32 1326507024, %v3763
    %v3779 = vor.u32 %v3777, %v3778
    %vm3780 = vcmp.lt.s32.totalorder %v3761, 1
    %vm3781 = vcmp.lt.s32.totalorder %v3761, 2
    %vm3782 = vcmp.lt.s32.totalorder %v3761, 3
    %vm3783 = vcmp.lt.s32.totalorder %v3761, 4
    %v3784 = vsel %vm3780, %v3764, %v3767
    %v3785 = vsel %vm3783, %v3773, 2102212464
    %v3786 = vsel %vm3782, %v3770, %v3785
    %v3787 = vsel %vm3781, %v3784, %v3786
    %v3788 = vsel %vm3780, %v3767, %v3770
    %v3789 = vsel %vm3783, %v3776, 920167782
    %v3790 = vsel %vm3782, %v3773, %v3789
    %v3791 = vsel %vm3781, %v3788, %v3790
    %v3792 = vsel %vm3780, %v3770, %v3773
    %v3793 = vsel %vm3783, %v3779, 1326507024
    %v3794 = vsel %vm3782, %v3776, %v3793
    %v3795 = vsel %vm3781, %v3792, %v3794
    %v3796 = vshll.u32 %v3756, 8
    %v3797 = vmul.u32.u64.compose %v3796, %v3795
    %v3798 = vextract.low.u32 %v3797
    %v3799 = vextract.high.u32 %v3797
    %v3800 = vmul.u32.u64.compose %v3796, %v3791
    %v3801 = vextract.low.u32 %v3800
    %v3802 = vextract.high.u32 %v3800
    %v3803 = vmul.u32 %v3796, %v3787
    %v3804 = vadd.s32 %v3799, %v3801
    %vm3805 = vc.u32 %v3799, %v3801
    %v3806 = vadd.s32 %v3802, 1
    %v3807 = vsel %vm3805, %v3806, %v3802
    %v3808 = vadd.s32 %v3803, %v3807
    %v3809 = vadd.s32 %v3808, 536870912
    %v3810 = vshrl.u32 %v3809, 30
    %v3811 = vshll.u32 %v3810, 30
    %v3812 = vsub.s32 %v3808, %v3811
    %vm3813 = vcmp.lt.s32.totalorder %v3812, 0
    %v3814 = vsub.s32 0, %v3812
    %v3815 = vsel %vm3813, %v3814, %v3812
    %v3816 = vclz %v3815
    %v3817 = vsub.s32 %v3816, 2
    %vm3818 = vcmp.gt.s32.totalorder 0, %v3817
    %v3819 = vsel %vm3818, 0, %v3817
    %v3820 = vsub.s32 32, %v3819
    %v3821 = vshll.u32 %v3812, %v3819
    %v3822 = vshrl.u32 %v3804, %v3820
    %v3823 = vor.u32 %v3821, %v3822
    %v3824 = vsub.s32 4294967266, %v3819
    %v3825 = vadd.s32 %v3824, 127
    %v3826 = vshll.u32 %v3825, 23
    %v3827 = vor.u32 4788187, %v3826
    %v3828 = vand.u32 2147483647, %v3827
    %v3830 = vcvt.s32.f32 %v3823
    %v3831 = vmul.f32 %v3830, %v3828
    %v3832 = vxor.u32 %v3831, 2147483648
    %v3833 = vsel %vm3750, %v3832, %v3831
    %v3834 = vsub.s32 4, %v3810
    %v3835 = vsel %vm3750, %v3834, %v3810
    %v3836 = vsel %vm3749, %v1663, %v3833
    %v3837 = vsel %vm3749, 0, %v3835
    %v3838 = vcosq.f32.pop %v3836
    %v3839 = vsinq.f32.pop %v3836
    %vm3840 = vweird.f32 %v1663
    %v3841 = vand.u32 %v3837, 3
    %vm3842 = vcmp.lt.s32.totalorder %v3841, 2
    %vm3843 = vcmp.eq.s32.totalorder %v3841, 0
    %v3844 = vxor.u32 %v3839, 2147483648
    %v3845 = vsel %vm3843, %v3838, %v3844
    %vm3846 = vcmp.eq.s32.totalorder %v3841, 2
    %v3847 = vxor.u32 %v3838, 2147483648
    %v3848 = vsel %vm3846, %v3847, %v3839
    %v3849 = vsel %vm3842, %v3845, %v3848
    %v3850 = vsel %vm3840, nan, %v3849
    %v3851 = vand.u32 2147483647, %v1664
    %vm3852 = vcmp.le.f32.partialorder %v3851, 0.7853982
    %vm3853 = vcmp.lt.s32.totalorder %v1664, 0
    %v3854 = vand.u32 %v1664, 2139095040
    %v3855 = vshrl.u32 %v3854, 23
    %v3856 = vsub.s32 %v3855, 127
    %v3857 = vand.u32 2147483647, %v1664
    %v3858 = vand.u32 %v3857, 8388607
    %v3859 = vor.u32 %v3858, 8388608
    %v3860 = vsub.s32 0, %v3859
    %v3861 = vadd.s32 %v3856, 1
    %vm3862 = vcmp.gt.s32.totalorder %v3861, 0
    %v3863 = vsel %vm3862, %v3861, 0
    %v3864 = vshrl.u32 %v3863, 5
    %v3865 = vand.u32 %v3863, 31
    %v3866 = vsub.s32 32, %v3865
    %v3867 = vshrl.u32 683565275, %v3866
    %v3868 = vshll.u32 683565275, %v3865
    %v3869 = vshrl.u32 2475754826, %v3866
    %v3870 = vor.u32 %v3868, %v3869
    %v3871 = vshll.u32 2475754826, %v3865
    %v3872 = vshrl.u32 2131351028, %v3866
    %v3873 = vor.u32 %v3871, %v3872
    %v3874 = vshll.u32 2131351028, %v3865
    %v3875 = vshrl.u32 2102212464, %v3866
    %v3876 = vor.u32 %v3874, %v3875
    %v3877 = vshll.u32 2102212464, %v3865
    %v3878 = vshrl.u32 920167782, %v3866
    %v3879 = vor.u32 %v3877, %v3878
    %v3880 = vshll.u32 920167782, %v3865
    %v3881 = vshrl.u32 1326507024, %v3866
    %v3882 = vor.u32 %v3880, %v3881
    %vm3883 = vcmp.lt.s32.totalorder %v3864, 1
    %vm3884 = vcmp.lt.s32.totalorder %v3864, 2
    %vm3885 = vcmp.lt.s32.totalorder %v3864, 3
    %vm3886 = vcmp.lt.s32.totalorder %v3864, 4
    %v3887 = vsel %vm3883, %v3867, %v3870
    %v3888 = vsel %vm3886, %v3876, 2102212464
    %v3889 = vsel %vm3885, %v3873, %v3888
    %v3890 = vsel %vm3884, %v3887, %v3889
    %v3891 = vsel %vm3883, %v3870, %v3873
    %v3892 = vsel %vm3886, %v3879, 920167782
    %v3893 = vsel %vm3885, %v3876, %v3892
    %v3894 = vsel %vm3884, %v3891, %v3893
    %v3895 = vsel %vm3883, %v3873, %v3876
    %v3896 = vsel %vm3886, %v3882, 1326507024
    %v3897 = vsel %vm3885, %v3879, %v3896
    %v3898 = vsel %vm3884, %v3895, %v3897
    %v3899 = vshll.u32 %v3859, 8
    %v3900 = vmul.u32.u64.compose %v3899, %v3898
    %v3901 = vextract.low.u32 %v3900
    %v3902 = vextract.high.u32 %v3900
    %v3903 = vmul.u32.u64.compose %v3899, %v3894
    %v3904 = vextract.low.u32 %v3903
    %v3905 = vextract.high.u32 %v3903
    %v3906 = vmul.u32 %v3899, %v3890
    %v3907 = vadd.s32 %v3902, %v3904
    %vm3908 = vc.u32 %v3902, %v3904
    %v3909 = vadd.s32 %v3905, 1
    %v3910 = vsel %vm3908, %v3909, %v3905
    %v3911 = vadd.s32 %v3906, %v3910
    %v3912 = vadd.s32 %v3911, 536870912
    %v3913 = vshrl.u32 %v3912, 30
    %v3914 = vshll.u32 %v3913, 30
    %v3915 = vsub.s32 %v3911, %v3914
    %vm3916 = vcmp.lt.s32.totalorder %v3915, 0
    %v3917 = vsub.s32 0, %v3915
    %v3918 = vsel %vm3916, %v3917, %v3915
    %v3919 = vclz %v3918
    %v3920 = vsub.s32 %v3919, 2
    %vm3921 = vcmp.gt.s32.totalorder 0, %v3920
    %v3922 = vsel %vm3921, 0, %v3920
    %v3923 = vsub.s32 32, %v3922
    %v3924 = vshll.u32 %v3915, %v3922
    %v3925 = vshrl.u32 %v3907, %v3923
    %v3926 = vor.u32 %v3924, %v3925
    %v3927 = vsub.s32 4294967266, %v3922
    %v3928 = vadd.s32 %v3927, 127
    %v3929 = vshll.u32 %v3928, 23
    %v3930 = vor.u32 4788187, %v3929
    %v3931 = vand.u32 2147483647, %v3930
    %v3933 = vcvt.s32.f32 %v3926
    %v3934 = vmul.f32 %v3933, %v3931
    %v3935 = vxor.u32 %v3934, 2147483648
    %v3936 = vsel %vm3853, %v3935, %v3934
    %v3937 = vsub.s32 4, %v3913
    %v3938 = vsel %vm3853, %v3937, %v3913
    %v3939 = vsel %vm3852, %v1664, %v3936
    %v3940 = vsel %vm3852, 0, %v3938
    %v3941 = vcosq.f32.pop %v3939
    %v3942 = vsinq.f32.pop %v3939
    %vm3943 = vweird.f32 %v1664
    %v3944 = vand.u32 %v3940, 3
    %vm3945 = vcmp.lt.s32.totalorder %v3944, 2
    %vm3946 = vcmp.eq.s32.totalorder %v3944, 0
    %v3947 = vxor.u32 %v3942, 2147483648
    %v3948 = vsel %vm3946, %v3941, %v3947
    %vm3949 = vcmp.eq.s32.totalorder %v3944, 2
    %v3950 = vxor.u32 %v3941, 2147483648
    %v3951 = vsel %vm3949, %v3950, %v3942
    %v3952 = vsel %vm3945, %v3948, %v3951
    %v3953 = vsel %vm3943, nan, %v3952
    %v3954 = vand.u32 2147483647, %v1665
    %vm3955 = vcmp.le.f32.partialorder %v3954, 0.7853982
    %vm3956 = vcmp.lt.s32.totalorder %v1665, 0
    %v3957 = vand.u32 %v1665, 2139095040
    %v3958 = vshrl.u32 %v3957, 23
    %v3959 = vsub.s32 %v3958, 127
    %v3960 = vand.u32 2147483647, %v1665
    %v3961 = vand.u32 %v3960, 8388607
    %v3962 = vor.u32 %v3961, 8388608
    %v3963 = vsub.s32 0, %v3962
    %v3964 = vadd.s32 %v3959, 1
    %vm3965 = vcmp.gt.s32.totalorder %v3964, 0
    %v3966 = vsel %vm3965, %v3964, 0
    %v3967 = vshrl.u32 %v3966, 5
    %v3968 = vand.u32 %v3966, 31
    %v3969 = vsub.s32 32, %v3968
    %v3970 = vshrl.u32 683565275, %v3969
    %v3971 = vshll.u32 683565275, %v3968
    %v3972 = vshrl.u32 2475754826, %v3969
    %v3973 = vor.u32 %v3971, %v3972
    %v3974 = vshll.u32 2475754826, %v3968
    %v3975 = vshrl.u32 2131351028, %v3969
    %v3976 = vor.u32 %v3974, %v3975
    %v3977 = vshll.u32 2131351028, %v3968
    %v3978 = vshrl.u32 2102212464, %v3969
    %v3979 = vor.u32 %v3977, %v3978
    %v3980 = vshll.u32 2102212464, %v3968
    %v3981 = vshrl.u32 920167782, %v3969
    %v3982 = vor.u32 %v3980, %v3981
    %v3983 = vshll.u32 920167782, %v3968
    %v3984 = vshrl.u32 1326507024, %v3969
    %v3985 = vor.u32 %v3983, %v3984
    %vm3986 = vcmp.lt.s32.totalorder %v3967, 1
    %vm3987 = vcmp.lt.s32.totalorder %v3967, 2
    %vm3988 = vcmp.lt.s32.totalorder %v3967, 3
    %vm3989 = vcmp.lt.s32.totalorder %v3967, 4
    %v3990 = vsel %vm3986, %v3970, %v3973
    %v3991 = vsel %vm3989, %v3979, 2102212464
    %v3992 = vsel %vm3988, %v3976, %v3991
    %v3993 = vsel %vm3987, %v3990, %v3992
    %v3994 = vsel %vm3986, %v3973, %v3976
    %v3995 = vsel %vm3989, %v3982, 920167782
    %v3996 = vsel %vm3988, %v3979, %v3995
    %v3997 = vsel %vm3987, %v3994, %v3996
    %v3998 = vsel %vm3986, %v3976, %v3979
    %v3999 = vsel %vm3989, %v3985, 1326507024
    %v4000 = vsel %vm3988, %v3982, %v3999
    %v4001 = vsel %vm3987, %v3998, %v4000
    %v4002 = vshll.u32 %v3962, 8
    %v4003 = vmul.u32.u64.compose %v4002, %v4001
    %v4004 = vextract.low.u32 %v4003
    %v4005 = vextract.high.u32 %v4003
    %v4006 = vmul.u32.u64.compose %v4002, %v3997
    %v4007 = vextract.low.u32 %v4006
    %v4008 = vextract.high.u32 %v4006
    %v4009 = vmul.u32 %v4002, %v3993
    %v4010 = vadd.s32 %v4005, %v4007
    %vm4011 = vc.u32 %v4005, %v4007
    %v4012 = vadd.s32 %v4008, 1
    %v4013 = vsel %vm4011, %v4012, %v4008
    %v4014 = vadd.s32 %v4009, %v4013
    %v4015 = vadd.s32 %v4014, 536870912
    %v4016 = vshrl.u32 %v4015, 30
    %v4017 = vshll.u32 %v4016, 30
    %v4018 = vsub.s32 %v4014, %v4017
    %vm4019 = vcmp.lt.s32.totalorder %v4018, 0
    %v4020 = vsub.s32 0, %v4018
    %v4021 = vsel %vm4019, %v4020, %v4018
    %v4022 = vclz %v4021
    %v4023 = vsub.s32 %v4022, 2
    %vm4024 = vcmp.gt.s32.totalorder 0, %v4023
    %v4025 = vsel %vm4024, 0, %v4023
    %v4026 = vsub.s32 32, %v4025
    %v4027 = vshll.u32 %v4018, %v4025
    %v4028 = vshrl.u32 %v4010, %v4026
    %v4029 = vor.u32 %v4027, %v4028
    %v4030 = vsub.s32 4294967266, %v4025
    %v4031 = vadd.s32 %v4030, 127
    %v4032 = vshll.u32 %v4031, 23
    %v4033 = vor.u32 4788187, %v4032
    %v4034 = vand.u32 2147483647, %v4033
    %v4036 = vcvt.s32.f32 %v4029
    %v4037 = vmul.f32 %v4036, %v4034
    %v4038 = vxor.u32 %v4037, 2147483648
    %v4039 = vsel %vm3956, %v4038, %v4037
    %v4040 = vsub.s32 4, %v4016
    %v4041 = vsel %vm3956, %v4040, %v4016
    %v4042 = vsel %vm3955, %v1665, %v4039
    %v4043 = vsel %vm3955, 0, %v4041
    %v4044 = vcosq.f32.pop %v4042
    %v4045 = vsinq.f32.pop %v4042
    %vm4046 = vweird.f32 %v1665
    %v4047 = vand.u32 %v4043, 3
    %vm4048 = vcmp.lt.s32.totalorder %v4047, 2
    %vm4049 = vcmp.eq.s32.totalorder %v4047, 0
    %v4050 = vxor.u32 %v4045, 2147483648
    %v4051 = vsel %vm4049, %v4044, %v4050
    %vm4052 = vcmp.eq.s32.totalorder %v4047, 2
    %v4053 = vxor.u32 %v4044, 2147483648
    %v4054 = vsel %vm4052, %v4053, %v4045
    %v4055 = vsel %vm4048, %v4051, %v4054
    %v4056 = vsel %vm4046, nan, %v4055
    %v4057 = vand.u32 2147483647, %v1666
    %vm4058 = vcmp.le.f32.partialorder %v4057, 0.7853982
    %vm4059 = vcmp.lt.s32.totalorder %v1666, 0
    %v4060 = vand.u32 %v1666, 2139095040
    %v4061 = vshrl.u32 %v4060, 23
    %v4062 = vsub.s32 %v4061, 127
    %v4063 = vand.u32 2147483647, %v1666
    %v4064 = vand.u32 %v4063, 8388607
    %v4065 = vor.u32 %v4064, 8388608
    %v4066 = vsub.s32 0, %v4065
    %v4067 = vadd.s32 %v4062, 1
    %vm4068 = vcmp.gt.s32.totalorder %v4067, 0
    %v4069 = vsel %vm4068, %v4067, 0
    %v4070 = vshrl.u32 %v4069, 5
    %v4071 = vand.u32 %v4069, 31
    %v4072 = vsub.s32 32, %v4071
    %v4073 = vshrl.u32 683565275, %v4072
    %v4074 = vshll.u32 683565275, %v4071
    %v4075 = vshrl.u32 2475754826, %v4072
    %v4076 = vor.u32 %v4074, %v4075
    %v4077 = vshll.u32 2475754826, %v4071
    %v4078 = vshrl.u32 2131351028, %v4072
    %v4079 = vor.u32 %v4077, %v4078
    %v4080 = vshll.u32 2131351028, %v4071
    %v4081 = vshrl.u32 2102212464, %v4072
    %v4082 = vor.u32 %v4080, %v4081
    %v4083 = vshll.u32 2102212464, %v4071
    %v4084 = vshrl.u32 920167782, %v4072
    %v4085 = vor.u32 %v4083, %v4084
    %v4086 = vshll.u32 920167782, %v4071
    %v4087 = vshrl.u32 1326507024, %v4072
    %v4088 = vor.u32 %v4086, %v4087
    %vm4089 = vcmp.lt.s32.totalorder %v4070, 1
    %vm4090 = vcmp.lt.s32.totalorder %v4070, 2
    %vm4091 = vcmp.lt.s32.totalorder %v4070, 3
    %vm4092 = vcmp.lt.s32.totalorder %v4070, 4
    %v4093 = vsel %vm4089, %v4073, %v4076
    %v4094 = vsel %vm4092, %v4082, 2102212464
    %v4095 = vsel %vm4091, %v4079, %v4094
    %v4096 = vsel %vm4090, %v4093, %v4095
    %v4097 = vsel %vm4089, %v4076, %v4079
    %v4098 = vsel %vm4092, %v4085, 920167782
    %v4099 = vsel %vm4091, %v4082, %v4098
    %v4100 = vsel %vm4090, %v4097, %v4099
    %v4101 = vsel %vm4089, %v4079, %v4082
    %v4102 = vsel %vm4092, %v4088, 1326507024
    %v4103 = vsel %vm4091, %v4085, %v4102
    %v4104 = vsel %vm4090, %v4101, %v4103
    %v4105 = vshll.u32 %v4065, 8
    %v4106 = vmul.u32.u64.compose %v4105, %v4104
    %v4107 = vextract.low.u32 %v4106
    %v4108 = vextract.high.u32 %v4106
    %v4109 = vmul.u32.u64.compose %v4105, %v4100
    %v4110 = vextract.low.u32 %v4109
    %v4111 = vextract.high.u32 %v4109
    %v4112 = vmul.u32 %v4105, %v4096
    %v4113 = vadd.s32 %v4108, %v4110
    %vm4114 = vc.u32 %v4108, %v4110
    %v4115 = vadd.s32 %v4111, 1
    %v4116 = vsel %vm4114, %v4115, %v4111
    %v4117 = vadd.s32 %v4112, %v4116
    %v4118 = vadd.s32 %v4117, 536870912
    %v4119 = vshrl.u32 %v4118, 30
    %v4120 = vshll.u32 %v4119, 30
    %v4121 = vsub.s32 %v4117, %v4120
    %vm4122 = vcmp.lt.s32.totalorder %v4121, 0
    %v4123 = vsub.s32 0, %v4121
    %v4124 = vsel %vm4122, %v4123, %v4121
    %v4125 = vclz %v4124
    %v4126 = vsub.s32 %v4125, 2
    %vm4127 = vcmp.gt.s32.totalorder 0, %v4126
    %v4128 = vsel %vm4127, 0, %v4126
    %v4129 = vsub.s32 32, %v4128
    %v4130 = vshll.u32 %v4121, %v4128
    %v4131 = vshrl.u32 %v4113, %v4129
    %v4132 = vor.u32 %v4130, %v4131
    %v4133 = vsub.s32 4294967266, %v4128
    %v4134 = vadd.s32 %v4133, 127
    %v4135 = vshll.u32 %v4134, 23
    %v4136 = vor.u32 4788187, %v4135
    %v4137 = vand.u32 2147483647, %v4136
    %v4139 = vcvt.s32.f32 %v4132
    %v4140 = vmul.f32 %v4139, %v4137
    %v4141 = vxor.u32 %v4140, 2147483648
    %v4142 = vsel %vm4059, %v4141, %v4140
    %v4143 = vsub.s32 4, %v4119
    %v4144 = vsel %vm4059, %v4143, %v4119
    %v4145 = vsel %vm4058, %v1666, %v4142
    %v4146 = vsel %vm4058, 0, %v4144
    %v4147 = vcosq.f32.pop %v4145
    %v4148 = vsinq.f32.pop %v4145
    %vm4149 = vweird.f32 %v1666
    %v4150 = vand.u32 %v4146, 3
    %vm4151 = vcmp.lt.s32.totalorder %v4150, 2
    %vm4152 = vcmp.eq.s32.totalorder %v4150, 0
    %v4153 = vxor.u32 %v4148, 2147483648
    %v4154 = vsel %vm4152, %v4147, %v4153
    %vm4155 = vcmp.eq.s32.totalorder %v4150, 2
    %v4156 = vxor.u32 %v4147, 2147483648
    %v4157 = vsel %vm4155, %v4156, %v4148
    %v4158 = vsel %vm4151, %v4154, %v4157
    %v4159 = vsel %vm4149, nan, %v4158
    %v4160 = vand.u32 2147483647, %v1667
    %vm4161 = vcmp.le.f32.partialorder %v4160, 0.7853982
    %vm4162 = vcmp.lt.s32.totalorder %v1667, 0
    %v4163 = vand.u32 %v1667, 2139095040
    %v4164 = vshrl.u32 %v4163, 23
    %v4165 = vsub.s32 %v4164, 127
    %v4166 = vand.u32 2147483647, %v1667
    %v4167 = vand.u32 %v4166, 8388607
    %v4168 = vor.u32 %v4167, 8388608
    %v4169 = vsub.s32 0, %v4168
    %v4170 = vadd.s32 %v4165, 1
    %vm4171 = vcmp.gt.s32.totalorder %v4170, 0
    %v4172 = vsel %vm4171, %v4170, 0
    %v4173 = vshrl.u32 %v4172, 5
    %v4174 = vand.u32 %v4172, 31
    %v4175 = vsub.s32 32, %v4174
    %v4176 = vshrl.u32 683565275, %v4175
    %v4177 = vshll.u32 683565275, %v4174
    %v4178 = vshrl.u32 2475754826, %v4175
    %v4179 = vor.u32 %v4177, %v4178
    %v4180 = vshll.u32 2475754826, %v4174
    %v4181 = vshrl.u32 2131351028, %v4175
    %v4182 = vor.u32 %v4180, %v4181
    %v4183 = vshll.u32 2131351028, %v4174
    %v4184 = vshrl.u32 2102212464, %v4175
    %v4185 = vor.u32 %v4183, %v4184
    %v4186 = vshll.u32 2102212464, %v4174
    %v4187 = vshrl.u32 920167782, %v4175
    %v4188 = vor.u32 %v4186, %v4187
    %v4189 = vshll.u32 920167782, %v4174
    %v4190 = vshrl.u32 1326507024, %v4175
    %v4191 = vor.u32 %v4189, %v4190
    %vm4192 = vcmp.lt.s32.totalorder %v4173, 1
    %vm4193 = vcmp.lt.s32.totalorder %v4173, 2
    %vm4194 = vcmp.lt.s32.totalorder %v4173, 3
    %vm4195 = vcmp.lt.s32.totalorder %v4173, 4
    %v4196 = vsel %vm4192, %v4176, %v4179
    %v4197 = vsel %vm4195, %v4185, 2102212464
    %v4198 = vsel %vm4194, %v4182, %v4197
    %v4199 = vsel %vm4193, %v4196, %v4198
    %v4200 = vsel %vm4192, %v4179, %v4182
    %v4201 = vsel %vm4195, %v4188, 920167782
    %v4202 = vsel %vm4194, %v4185, %v4201
    %v4203 = vsel %vm4193, %v4200, %v4202
    %v4204 = vsel %vm4192, %v4182, %v4185
    %v4205 = vsel %vm4195, %v4191, 1326507024
    %v4206 = vsel %vm4194, %v4188, %v4205
    %v4207 = vsel %vm4193, %v4204, %v4206
    %v4208 = vshll.u32 %v4168, 8
    %v4209 = vmul.u32.u64.compose %v4208, %v4207
    %v4210 = vextract.low.u32 %v4209
    %v4211 = vextract.high.u32 %v4209
    %v4212 = vmul.u32.u64.compose %v4208, %v4203
    %v4213 = vextract.low.u32 %v4212
    %v4214 = vextract.high.u32 %v4212
    %v4215 = vmul.u32 %v4208, %v4199
    %v4216 = vadd.s32 %v4211, %v4213
    %vm4217 = vc.u32 %v4211, %v4213
    %v4218 = vadd.s32 %v4214, 1
    %v4219 = vsel %vm4217, %v4218, %v4214
    %v4220 = vadd.s32 %v4215, %v4219
    %v4221 = vadd.s32 %v4220, 536870912
    %v4222 = vshrl.u32 %v4221, 30
    %v4223 = vshll.u32 %v4222, 30
    %v4224 = vsub.s32 %v4220, %v4223
    %vm4225 = vcmp.lt.s32.totalorder %v4224, 0
    %v4226 = vsub.s32 0, %v4224
    %v4227 = vsel %vm4225, %v4226, %v4224
    %v4228 = vclz %v4227
    %v4229 = vsub.s32 %v4228, 2
    %vm4230 = vcmp.gt.s32.totalorder 0, %v4229
    %v4231 = vsel %vm4230, 0, %v4229
    %v4232 = vsub.s32 32, %v4231
    %v4233 = vshll.u32 %v4224, %v4231
    %v4234 = vshrl.u32 %v4216, %v4232
    %v4235 = vor.u32 %v4233, %v4234
    %v4236 = vsub.s32 4294967266, %v4231
    %v4237 = vadd.s32 %v4236, 127
    %v4238 = vshll.u32 %v4237, 23
    %v4239 = vor.u32 4788187, %v4238
    %v4240 = vand.u32 2147483647, %v4239
    %v4242 = vcvt.s32.f32 %v4235
    %v4243 = vmul.f32 %v4242, %v4240
    %v4244 = vxor.u32 %v4243, 2147483648
    %v4245 = vsel %vm4162, %v4244, %v4243
    %v4246 = vsub.s32 4, %v4222
    %v4247 = vsel %vm4162, %v4246, %v4222
    %v4248 = vsel %vm4161, %v1667, %v4245
    %v4249 = vsel %vm4161, 0, %v4247
    %v4250 = vcosq.f32.pop %v4248
    %v4251 = vsinq.f32.pop %v4248
    %vm4252 = vweird.f32 %v1667
    %v4253 = vand.u32 %v4249, 3
    %vm4254 = vcmp.lt.s32.totalorder %v4253, 2
    %vm4255 = vcmp.eq.s32.totalorder %v4253, 0
    %v4256 = vxor.u32 %v4251, 2147483648
    %v4257 = vsel %vm4255, %v4250, %v4256
    %vm4258 = vcmp.eq.s32.totalorder %v4253, 2
    %v4259 = vxor.u32 %v4250, 2147483648
    %v4260 = vsel %vm4258, %v4259, %v4251
    %v4261 = vsel %vm4254, %v4257, %v4260
    %v4262 = vsel %vm4252, nan, %v4261
    %v4263 = vand.u32 2147483647, %v1668
    %vm4264 = vcmp.le.f32.partialorder %v4263, 0.7853982
    %vm4265 = vcmp.lt.s32.totalorder %v1668, 0
    %v4266 = vand.u32 %v1668, 2139095040
    %v4267 = vshrl.u32 %v4266, 23
    %v4268 = vsub.s32 %v4267, 127
    %v4269 = vand.u32 2147483647, %v1668
    %v4270 = vand.u32 %v4269, 8388607
    %v4271 = vor.u32 %v4270, 8388608
    %v4272 = vsub.s32 0, %v4271
    %v4273 = vadd.s32 %v4268, 1
    %vm4274 = vcmp.gt.s32.totalorder %v4273, 0
    %v4275 = vsel %vm4274, %v4273, 0
    %v4276 = vshrl.u32 %v4275, 5
    %v4277 = vand.u32 %v4275, 31
    %v4278 = vsub.s32 32, %v4277
    %v4279 = vshrl.u32 683565275, %v4278
    %v4280 = vshll.u32 683565275, %v4277
    %v4281 = vshrl.u32 2475754826, %v4278
    %v4282 = vor.u32 %v4280, %v4281
    %v4283 = vshll.u32 2475754826, %v4277
    %v4284 = vshrl.u32 2131351028, %v4278
    %v4285 = vor.u32 %v4283, %v4284
    %v4286 = vshll.u32 2131351028, %v4277
    %v4287 = vshrl.u32 2102212464, %v4278
    %v4288 = vor.u32 %v4286, %v4287
    %v4289 = vshll.u32 2102212464, %v4277
    %v4290 = vshrl.u32 920167782, %v4278
    %v4291 = vor.u32 %v4289, %v4290
    %v4292 = vshll.u32 920167782, %v4277
    %v4293 = vshrl.u32 1326507024, %v4278
    %v4294 = vor.u32 %v4292, %v4293
    %vm4295 = vcmp.lt.s32.totalorder %v4276, 1
    %vm4296 = vcmp.lt.s32.totalorder %v4276, 2
    %vm4297 = vcmp.lt.s32.totalorder %v4276, 3
    %vm4298 = vcmp.lt.s32.totalorder %v4276, 4
    %v4299 = vsel %vm4295, %v4279, %v4282
    %v4300 = vsel %vm4298, %v4288, 2102212464
    %v4301 = vsel %vm4297, %v4285, %v4300
    %v4302 = vsel %vm4296, %v4299, %v4301
    %v4303 = vsel %vm4295, %v4282, %v4285
    %v4304 = vsel %vm4298, %v4291, 920167782
    %v4305 = vsel %vm4297, %v4288, %v4304
    %v4306 = vsel %vm4296, %v4303, %v4305
    %v4307 = vsel %vm4295, %v4285, %v4288
    %v4308 = vsel %vm4298, %v4294, 1326507024
    %v4309 = vsel %vm4297, %v4291, %v4308
    %v4310 = vsel %vm4296, %v4307, %v4309
    %v4311 = vshll.u32 %v4271, 8
    %v4312 = vmul.u32.u64.compose %v4311, %v4310
    %v4313 = vextract.low.u32 %v4312
    %v4314 = vextract.high.u32 %v4312
    %v4315 = vmul.u32.u64.compose %v4311, %v4306
    %v4316 = vextract.low.u32 %v4315
    %v4317 = vextract.high.u32 %v4315
    %v4318 = vmul.u32 %v4311, %v4302
    %v4319 = vadd.s32 %v4314, %v4316
    %vm4320 = vc.u32 %v4314, %v4316
    %v4321 = vadd.s32 %v4317, 1
    %v4322 = vsel %vm4320, %v4321, %v4317
    %v4323 = vadd.s32 %v4318, %v4322
    %v4324 = vadd.s32 %v4323, 536870912
    %v4325 = vshrl.u32 %v4324, 30
    %v4326 = vshll.u32 %v4325, 30
    %v4327 = vsub.s32 %v4323, %v4326
    %vm4328 = vcmp.lt.s32.totalorder %v4327, 0
    %v4329 = vsub.s32 0, %v4327
    %v4330 = vsel %vm4328, %v4329, %v4327
    %v4331 = vclz %v4330
    %v4332 = vsub.s32 %v4331, 2
    %vm4333 = vcmp.gt.s32.totalorder 0, %v4332
    %v4334 = vsel %vm4333, 0, %v4332
    %v4335 = vsub.s32 32, %v4334
    %v4336 = vshll.u32 %v4327, %v4334
    %v4337 = vshrl.u32 %v4319, %v4335
    %v4338 = vor.u32 %v4336, %v4337
    %v4339 = vsub.s32 4294967266, %v4334
    %v4340 = vadd.s32 %v4339, 127
    %v4341 = vshll.u32 %v4340, 23
    %v4342 = vor.u32 4788187, %v4341
    %v4343 = vand.u32 2147483647, %v4342
    %v4345 = vcvt.s32.f32 %v4338
    %v4346 = vmul.f32 %v4345, %v4343
    %v4347 = vxor.u32 %v4346, 2147483648
    %v4348 = vsel %vm4265, %v4347, %v4346
    %v4349 = vsub.s32 4, %v4325
    %v4350 = vsel %vm4265, %v4349, %v4325
    %v4351 = vsel %vm4264, %v1668, %v4348
    %v4352 = vsel %vm4264, 0, %v4350
    %v4353 = vcosq.f32.pop %v4351
    %v4354 = vsinq.f32.pop %v4351
    %vm4355 = vweird.f32 %v1668
    %v4356 = vand.u32 %v4352, 3
    %vm4357 = vcmp.lt.s32.totalorder %v4356, 2
    %vm4358 = vcmp.eq.s32.totalorder %v4356, 0
    %v4359 = vxor.u32 %v4354, 2147483648
    %v4360 = vsel %vm4358, %v4353, %v4359
    %vm4361 = vcmp.eq.s32.totalorder %v4356, 2
    %v4362 = vxor.u32 %v4353, 2147483648
    %v4363 = vsel %vm4361, %v4362, %v4354
    %v4364 = vsel %vm4357, %v4360, %v4363
    %v4365 = vsel %vm4355, nan, %v4364
    %v4366 = vsel %vm3025, 1, 0
    %v4367 = vsel %vm3026, 1, 0
    %v4368 = vlaneseq
    %v4369 = vshrl.u32 %v4368, 7
    %v4370 = vsub.s32 0, %v4369
    %v4371 = vrot.slane %v4366, %v4370
    %v4372 = vlaneseq
    %v4373 = vshrl.u32 %v4372, 7
    %v4374 = vsub.s32 1, %v4373
    %v4375 = vrot.slane %v4366, %v4374
    %v4376 = vlaneseq
    %v4377 = vshrl.u32 %v4376, 7
    %v4378 = vsub.s32 2, %v4377
    %v4379 = vrot.slane %v4366, %v4378
    %v4380 = vlaneseq
    %v4381 = vshrl.u32 %v4380, 7
    %v4382 = vsub.s32 3, %v4381
    %v4383 = vrot.slane %v4366, %v4382
    %v4384 = vlaneseq
    %v4385 = vshrl.u32 %v4384, 7
    %v4386 = vsub.s32 4, %v4385
    %v4387 = vrot.slane %v4366, %v4386
    %v4388 = vlaneseq
    %v4389 = vshrl.u32 %v4388, 7
    %v4390 = vsub.s32 5, %v4389
    %v4391 = vrot.slane %v4366, %v4390
    %v4392 = vlaneseq
    %v4393 = vshrl.u32 %v4392, 7
    %v4394 = vsub.s32 6, %v4393
    %v4395 = vrot.slane %v4366, %v4394
    %v4396 = vlaneseq
    %v4397 = vshrl.u32 %v4396, 7
    %v4398 = vsub.s32 7, %v4397
    %v4399 = vrot.slane %v4366, %v4398
    %v4400 = vlaneseq
    %v4401 = vshrl.u32 %v4400, 7
    %v4402 = vsub.s32 0, %v4401
    %v4403 = vrot.slane %v4367, %v4402
    %v4404 = vlaneseq
    %v4405 = vshrl.u32 %v4404, 7
    %v4406 = vsub.s32 1, %v4405
    %v4407 = vrot.slane %v4367, %v4406
    %v4408 = vlaneseq
    %v4409 = vshrl.u32 %v4408, 7
    %v4410 = vsub.s32 2, %v4409
    %v4411 = vrot.slane %v4367, %v4410
    %v4412 = vlaneseq
    %v4413 = vshrl.u32 %v4412, 7
    %v4414 = vsub.s32 3, %v4413
    %v4415 = vrot.slane %v4367, %v4414
    %v4416 = vlaneseq
    %v4417 = vshrl.u32 %v4416, 7
    %v4418 = vsub.s32 4, %v4417
    %v4419 = vrot.slane %v4367, %v4418
    %vm4420 = vcmp.eq.s32.totalorder %v4371, 1
    %vm4421 = vcmp.eq.s32.totalorder %v4375, 1
    %vm4422 = vcmp.eq.s32.totalorder %v4379, 1
    %vm4423 = vcmp.eq.s32.totalorder %v4383, 1
    %vm4424 = vcmp.eq.s32.totalorder %v4387, 1
    %vm4425 = vcmp.eq.s32.totalorder %v4391, 1
    %vm4426 = vcmp.eq.s32.totalorder %v4395, 1
    %vm4427 = vcmp.eq.s32.totalorder %v4399, 1
    %vm4428 = vcmp.eq.s32.totalorder %v4403, 1
    %vm4429 = vcmp.eq.s32.totalorder %v4407, 1
    %vm4430 = vcmp.eq.s32.totalorder %v4411, 1
    %vm4431 = vcmp.eq.s32.totalorder %v4415, 1
    %vm4432 = vcmp.eq.s32.totalorder %v4419, 1
    %v4433 = vsel %vm4420, %v3129, %v1656
    %v4434 = vsel %vm4421, %v3232, %v1657
    %v4435 = vsel %vm4422, %v3335, %v1658
    %v4436 = vsel %vm4423, %v3438, %v1659
    %v4437 = vsel %vm4424, %v3541, %v1660
    %v4438 = vsel %vm4425, %v3644, %v1661
    %v4439 = vsel %vm4426, %v3747, %v1662
    %v4440 = vsel %vm4427, %v3850, %v1663
    %v4441 = vsel %vm4428, %v3953, %v1664
    %v4442 = vsel %vm4429, %v4056, %v1665
    %v4443 = vsel %vm4430, %v4159, %v1666
    %v4444 = vsel %vm4431, %v4262, %v1667
    %v4445 = vsel %vm4432, %v4365, %v1668
    %v4446 = vsel %vm1671, 1, 0
    %v4447 = vsel %vm1672, 1, 0
    %v4448 = vlaneseq
    %v4449 = vshrl.u32 %v4448, 7
    %v4450 = vsub.s32 0, %v4449
    %v4451 = vrot.slane %v4446, %v4450
    %v4452 = vlaneseq
    %v4453 = vshrl.u32 %v4452, 7
    %v4454 = vsub.s32 1, %v4453
    %v4455 = vrot.slane %v4446, %v4454
    %v4456 = vlaneseq
    %v4457 = vshrl.u32 %v4456, 7
    %v4458 = vsub.s32 2, %v4457
    %v4459 = vrot.slane %v4446, %v4458
    %v4460 = vlaneseq
    %v4461 = vshrl.u32 %v4460, 7
    %v4462 = vsub.s32 3, %v4461
    %v4463 = vrot.slane %v4446, %v4462
    %v4464 = vlaneseq
    %v4465 = vshrl.u32 %v4464, 7
    %v4466 = vsub.s32 4, %v4465
    %v4467 = vrot.slane %v4446, %v4466
    %v4468 = vlaneseq
    %v4469 = vshrl.u32 %v4468, 7
    %v4470 = vsub.s32 5, %v4469
    %v4471 = vrot.slane %v4446, %v4470
    %v4472 = vlaneseq
    %v4473 = vshrl.u32 %v4472, 7
    %v4474 = vsub.s32 6, %v4473
    %v4475 = vrot.slane %v4446, %v4474
    %v4476 = vlaneseq
    %v4477 = vshrl.u32 %v4476, 7
    %v4478 = vsub.s32 7, %v4477
    %v4479 = vrot.slane %v4446, %v4478
    %v4480 = vlaneseq
    %v4481 = vshrl.u32 %v4480, 7
    %v4482 = vsub.s32 0, %v4481
    %v4483 = vrot.slane %v4447, %v4482
    %v4484 = vlaneseq
    %v4485 = vshrl.u32 %v4484, 7
    %v4486 = vsub.s32 1, %v4485
    %v4487 = vrot.slane %v4447, %v4486
    %v4488 = vlaneseq
    %v4489 = vshrl.u32 %v4488, 7
    %v4490 = vsub.s32 2, %v4489
    %v4491 = vrot.slane %v4447, %v4490
    %v4492 = vlaneseq
    %v4493 = vshrl.u32 %v4492, 7
    %v4494 = vsub.s32 3, %v4493
    %v4495 = vrot.slane %v4447, %v4494
    %v4496 = vlaneseq
    %v4497 = vshrl.u32 %v4496, 7
    %v4498 = vsub.s32 4, %v4497
    %v4499 = vrot.slane %v4447, %v4498
    %vm4500 = vcmp.eq.s32.totalorder %v4451, 1
    %vm4501 = vcmp.eq.s32.totalorder %v4455, 1
    %vm4502 = vcmp.eq.s32.totalorder %v4459, 1
    %vm4503 = vcmp.eq.s32.totalorder %v4463, 1
    %vm4504 = vcmp.eq.s32.totalorder %v4467, 1
    %vm4505 = vcmp.eq.s32.totalorder %v4471, 1
    %vm4506 = vcmp.eq.s32.totalorder %v4475, 1
    %vm4507 = vcmp.eq.s32.totalorder %v4479, 1
    %vm4508 = vcmp.eq.s32.totalorder %v4483, 1
    %vm4509 = vcmp.eq.s32.totalorder %v4487, 1
    %vm4510 = vcmp.eq.s32.totalorder %v4491, 1
    %vm4511 = vcmp.eq.s32.totalorder %v4495, 1
    %vm4512 = vcmp.eq.s32.totalorder %v4499, 1
    %v4513 = vsel %vm4500, %v1776, %v4433
    %v4514 = vsel %vm4501, %v1880, %v4434
    %v4515 = vsel %vm4502, %v1984, %v4435
    %v4516 = vsel %vm4503, %v2088, %v4436
    %v4517 = vsel %vm4504, %v2192, %v4437
    %v4518 = vsel %vm4505, %v2296, %v4438
    %v4519 = vsel %vm4506, %v2400, %v4439
    %v4520 = vsel %vm4507, %v2504, %v4440
    %v4521 = vsel %vm4508, %v2608, %v4441
    %v4522 = vsel %vm4509, %v2712, %v4442
    %v4523 = vsel %vm4510, %v2816, %v4443
    %v4524 = vsel %vm4511, %v2920, %v4444
    %v4525 = vsel %vm4512, %v3024, %v4445
    %4526 = vst [vmem:[#allocation10] sm:$0xff] %v4513
    %4527 = vst [vmem:[#allocation10 + $0x8] sm:$0xff] %v4514
    %4528 = vst [vmem:[#allocation10 + $0x10] sm:$0xff] %v4515
    %4529 = vst [vmem:[#allocation10 + $0x18] sm:$0xff] %v4516
    %4530 = vst [vmem:[#allocation10 + $0x20] sm:$0xff] %v4517
    %4531 = vst [vmem:[#allocation10 + $0x28] sm:$0xff] %v4518
    %4532 = vst [vmem:[#allocation10 + $0x30] sm:$0xff] %v4519
    %4533 = vst [vmem:[#allocation10 + $0x38] sm:$0xff] %v4520
    %4534 = vst [vmem:[#allocation10 + $0x40] sm:$0xff] %v4521
    %4535 = vst [vmem:[#allocation10 + $0x48] sm:$0xff] %v4522
    %4536 = vst [vmem:[#allocation10 + $0x50] sm:$0xff] %v4523
    %4537 = vst [vmem:[#allocation10 + $0x58] sm:$0xff] %v4524
    %4538 = vst [vmem:[#allocation10 + $0x60] sm:$0xff] %v4525
    // Predicated region
    $region34: #{tpu_custom_call.1} parent=1 // pred_check
      _
    $region35: #{tpu_custom_call.1} parent=1 // pred_check_branch
      %4540 = sbr.rel (0) target = $region37
    $region36: #{tpu_custom_call.1} parent=1 // pred_region
      %s4542 = ssub.s32 1664, 1664
      %4543 = vsyncadd [#allocation4], %s4542
      %s4545 = sshll.u32 [#allocation10], 4
      %s4546 = int_to_ptr.vmem [resolvable:$true] %s4545
      %4548 = dma.vmem_to_hbm [thread:$0]  %s4546, 1664, %s4, [#allocation4]
    $region37: #{tpu_custom_call.1} parent=1 // pred_fallthru
      _
    // Predicated region
    $region38: #{tpu_custom_call.1} parent=1 // pred_check
      _
    $region39: #{tpu_custom_call.1} parent=1 // pred_check_branch
      %4550 = sbr.rel (0) target = $region41
    $region40: #{tpu_custom_call.1} parent=1 // pred_region
      %4551 = dma.done [#allocation4], 1664
    $region41: #{tpu_custom_call.1} parent=1 // pred_fallthru
      _
    %4552 = vsyncpa [#allocation3], 1
    %4553 = vsyncpa [#allocation6], 1
    %4554 = vsyncpa [#allocation9], 1
    %4555 = vsyncpa [#allocation4], 1

</llo_original>
